<compile_context>
chip_gen: v6e
topology: v6e:2x2x1
jax: 0.10.0
libtpu: 0.0.40
codegen_flags: <defaults>
</compile_context>

<pallas_src>
import functools
import math

import jax
import jax.numpy as jnp
from jax.experimental import pallas as pl
from jax.experimental.pallas import tpu as pltpu


# --------------------------------------------------------------------------
# Fused Graph_Module kernel (one grid step per batch element)
# --------------------------------------------------------------------------
def _graph_module_kernel(x_ref, adj1_ref, adj4_ref,
                         w1_ref, b1_ref, w2_ref, b2_ref,
                         ln_a_ref, ln_b_ref,
                         fw1_ref, fb1_ref, fw2_ref, fb2_ref,
                         o_ref, *, eps, features, half_hid, half_dk):
    x = x_ref[0].astype(jnp.float32)          # (K, indim)
    adj1 = adj1_ref[0, 0].astype(jnp.float32)  # (K, K)  heads 0,1
    adj4 = adj4_ref[0, 0].astype(jnp.float32)  # (K, K)  heads 2,3

    # --- GCN layer 1: head axis folded into lanes (W1_all = concat_h W1[h]) ---
    support = jnp.dot(x, w1_ref[...], preferred_element_type=jnp.float32)   # (K, H*hid)
    agg1 = jnp.dot(adj1, support[:, :half_hid], preferred_element_type=jnp.float32)
    agg4 = jnp.dot(adj4, support[:, half_hid:], preferred_element_type=jnp.float32)
    h = jnp.maximum(jnp.concatenate([agg1, agg4], axis=-1) + b1_ref[...], 0.0)
    # TODO(synk): dropout between gc1 and gc2 omitted (inference / training=False).

    # --- GCN layer 2: block-diagonal W2 folds the 4 per-head matmuls ---
    support2 = jnp.dot(h, w2_ref[...], preferred_element_type=jnp.float32)  # (K, H*d_k)
    out1 = jnp.dot(adj1, support2[:, :half_dk], preferred_element_type=jnp.float32)
    out4 = jnp.dot(adj4, support2[:, half_dk:], preferred_element_type=jnp.float32)
    g = jnp.concatenate([out1, out4], axis=-1) + b2_ref[...]                # (K, outdim)
    # `g` column order == torch.cat([head0, head1, head2, head3], dim=2)

    # --- LayerNorm (torch semantics: unbiased std, eps added to std), two-pass ---
    mean = jnp.mean(g, axis=-1, keepdims=True)
    centered = g - mean
    var = jnp.sum(centered * centered, axis=-1, keepdims=True) / jnp.float32(features - 1)
    std = jnp.sqrt(var)
    inv = pl.reciprocal(std + jnp.float32(eps), approx=True)   # EUP path
    g_feature = ln_a_ref[...] * (centered * inv) + ln_b_ref[...] + x        # residual 1

    # --- Positionwise FFN + residual 2 ---
    h1 = jnp.maximum(
        jnp.dot(g_feature, fw1_ref[...], preferred_element_type=jnp.float32)
        + fb1_ref[...], 0.0)
    # TODO(synk): FFN dropout omitted (inference / training=False).
    out = (jnp.dot(h1, fw2_ref[...], preferred_element_type=jnp.float32)
           + fb2_ref[...] + g_feature)

    o_ref[...] = out[None].astype(o_ref.dtype)


# --------------------------------------------------------------------------
# Graph_Module forward (provided-adjacency branch)
# --------------------------------------------------------------------------
def graph_module_forward(params, graph_nodes, graph, eps=1e-6):
    # TODO(synk): empty-graph get_adj()/b_normal path not implemented — the reference
    # PyTorch module never defines edge_layer_1/edge_layer_2, so that branch cannot run.
    if graph_nodes.shape[0] != graph.shape[0]:
        graph_nodes = jnp.swapaxes(graph_nodes, 0, 1)
    adj = graph.astype(jnp.float32)

    B, K, indim = graph_nodes.shape
    H, _, hid = params["gcn_w1"].shape            # (H, indim, hid)
    d_k = params["gcn_w2"].shape[-1]
    outdim = H * d_k
    n_adj = graph.shape[1]

    # One-time (tiny) weight folding: heads -> lanes.
    w1_all = jnp.transpose(params["gcn_w1"].astype(jnp.float32), (1, 0, 2)
                           ).reshape(indim, H * hid)            # (indim, H*hid)
    b1_all = params["gcn_b1"].astype(jnp.float32).reshape(1, H * hid)
    eye_h = jnp.eye(H, dtype=jnp.float32)
    w2_bd = jnp.einsum("hij,hg->higj", params["gcn_w2"].astype(jnp.float32), eye_h
                       ).reshape(H * hid, H * d_k)              # block-diagonal
    b2_all = params["gcn_b2"].astype(jnp.float32).reshape(1, H * d_k)
    ln_a = params["ln_a"].astype(jnp.float32).reshape(1, outdim)
    ln_b = params["ln_b"].astype(jnp.float32).reshape(1, outdim)
    fw1 = params["ffn_w1"].astype(jnp.float32)
    fb1 = params["ffn_b1"].astype(jnp.float32).reshape(1, -1)
    fw2 = params["ffn_w2"].astype(jnp.float32)
    fb2 = params["ffn_b2"].astype(jnp.float32).reshape(1, -1)
    d_ff = fw1.shape[-1]

    kernel = functools.partial(
        _graph_module_kernel, eps=float(eps), features=outdim,
        half_hid=2 * hid, half_dk=2 * d_k)

    out = pl.pallas_call(
        kernel,
        out_shape=jax.ShapeDtypeStruct((B, K, outdim), graph_nodes.dtype),
        grid_spec=pltpu.PrefetchScalarGridSpec(
            num_scalar_prefetch=0,
            grid=(B,),
            in_specs=[
                pl.BlockSpec((1, K, indim), lambda b: (b, 0, 0)),       # graph_nodes
                pl.BlockSpec((1, 1, K, K), lambda b: (b, 1, 0, 0)),     # adj[:,1]
                pl.BlockSpec((1, 1, K, K), lambda b: (b, 4, 0, 0)),     # adj[:,4]
                pl.BlockSpec((indim, H * hid), lambda b: (0, 0)),       # W1_all
                pl.BlockSpec((1, H * hid), lambda b: (0, 0)),           # b1_all
                pl.BlockSpec((H * hid, H * d_k), lambda b: (0, 0)),     # W2 blockdiag
                pl.BlockSpec((1, H * d_k), lambda b: (0, 0)),           # b2_all
                pl.BlockSpec((1, outdim), lambda b: (0, 0)),            # ln_a
                pl.BlockSpec((1, outdim), lambda b: (0, 0)),            # ln_b
                pl.BlockSpec((indim, d_ff), lambda b: (0, 0)),          # ffn_w1
                pl.BlockSpec((1, d_ff), lambda b: (0, 0)),              # ffn_b1
                pl.BlockSpec((d_ff, outdim), lambda b: (0, 0)),         # ffn_w2
                pl.BlockSpec((1, outdim), lambda b: (0, 0)),            # ffn_b2
            ],
            out_specs=pl.BlockSpec((1, K, outdim), lambda b: (b, 0, 0)),
        ),
        compiler_params=pltpu.CompilerParams(
            dimension_semantics=("parallel",),
        ),
    )(graph_nodes, graph, graph, w1_all, b1_all, w2_bd, b2_all,
      ln_a, ln_b, fw1, fb1, fw2, fb2)

    _ = n_adj  # adjacency index 4 requires graph.shape[1] >= 5 (as in the torch module)
    return adj, out


# --------------------------------------------------------------------------
# Pure-JAX reference with identical semantics
# --------------------------------------------------------------------------
def _reference_forward(params, graph_nodes, graph, eps):
    adj = graph.astype(jnp.float32)
    adj_list = [adj[:, 1], adj[:, 1], adj[:, 4], adj[:, 4]]
    heads = []
    for hd in range(4):
        a = adj_list[hd]
        support = jnp.matmul(graph_nodes, params["gcn_w1"][hd])
        hh = jax.nn.relu(jnp.matmul(a, support) + params["gcn_b1"][hd])
        support2 = jnp.matmul(hh, params["gcn_w2"][hd])
        heads.append(jnp.matmul(a, support2) + params["gcn_b2"][hd])
    g = jnp.concatenate(heads, axis=2)
    f_dim = g.shape[-1]
    mean = jnp.mean(g, axis=-1, keepdims=True)
    std = jnp.sqrt(jnp.sum((g - mean) ** 2, axis=-1, keepdims=True) / (f_dim - 1))
    g_feature = params["ln_a"] * (g - mean) / (std + eps) + params["ln_b"] + graph_nodes
    h1 = jax.nn.relu(jnp.matmul(g_feature, params["ffn_w1"]) + params["ffn_b1"])
    ffn = jnp.matmul(h1, params["ffn_w2"]) + params["ffn_b2"]
    return adj, ffn + g_feature


if __name__ == "__main__":
    key = jax.random.PRNGKey(0)
    batch, K = 2, 8
    indim = hiddim = outdim = 32      # residual connections require outdim == indim
    n_heads = 4
    d_k = outdim // n_heads
    eps = 1e-6

    keys = jax.random.split(key, 12)
    graph_nodes = jax.random.normal(keys[0], (batch, K, indim), dtype=jnp.float32)
    graph = jax.random.uniform(keys[1], (batch, 5, K, K), dtype=jnp.float32)

    # GCN head parameters (uniform(-1/sqrt(out), 1/sqrt(out)) like the PyTorch init).
    s1 = 1.0 / math.sqrt(hiddim)
    s2 = 1.0 / math.sqrt(d_k)
    gcn_w1 = jax.random.uniform(keys[2], (n_heads, indim, hiddim), jnp.float32, -s1, s1)
    gcn_b1 = jax.random.uniform(keys[3], (n_heads, 1, hiddim), jnp.float32, -s1, s1)
    gcn_w2 = jax.random.uniform(keys[4], (n_heads, hiddim, d_k), jnp.float32, -s2, s2)
    gcn_b2 = jax.random.uniform(keys[5], (n_heads, 1, d_k), jnp.float32, -s2, s2)

    # LayerNorm parameters (torch.ones / torch.zeros).
    ln_a = jnp.ones((outdim,), jnp.float32)
    ln_b = jnp.zeros((outdim,), jnp.float32)

    # FFN parameters.
    s3 = 1.0 / math.sqrt(indim)
    s4 = 1.0 / math.sqrt(hiddim)
    ffn_w1 = jax.random.uniform(keys[6], (indim, hiddim), jnp.float32, -s3, s3)
    ffn_b1 = jax.random.uniform(keys[7], (1, hiddim), jnp.float32, -s3, s3)
    ffn_w2 = jax.random.uniform(keys[8], (hiddim, outdim), jnp.float32, -s4, s4)
    ffn_b2 = jax.random.uniform(keys[9], (1, outdim), jnp.float32, -s4, s4)

    params = dict(gcn_w1=gcn_w1, gcn_b1=gcn_b1, gcn_w2=gcn_w2, gcn_b2=gcn_b2,
                  ln_a=ln_a, ln_b=ln_b,
                  ffn_w1=ffn_w1, ffn_b1=ffn_b1, ffn_w2=ffn_w2, ffn_b2=ffn_b2)

    fwd = jax.jit(functools.partial(graph_module_forward, eps=eps))

    with jax.default_matmul_precision("highest"):
        adj_out, feats = fwd(params, graph_nodes, graph)
        feats = jax.block_until_ready(feats)
        ref_adj, ref_feats = _reference_forward(params, graph_nodes, graph, eps)

    assert feats.shape == (batch, K, outdim) and feats.dtype == graph_nodes.dtype
    assert bool(jnp.allclose(adj_out, graph.astype(jnp.float32)))
    err = float(jnp.max(jnp.abs(feats - ref_feats)))
    tol = 2e-3 * (1.0 + float(jnp.max(jnp.abs(ref_feats))))
    assert err < tol, (err, tol)

    print("KERNEL_OK")
</pallas_src>

<mosaic_0001>
module attributes {stable_mosaic.version = 11 : i64} {
  func.func @_graph_module_kernel(%arg0: i32, %arg1: memref<1x8x32xf32, #tpu.memory_space<vmem>>, %arg2: memref<1x1x8x8xf32, #tpu.memory_space<vmem>>, %arg3: memref<1x1x8x8xf32, #tpu.memory_space<vmem>>, %arg4: memref<32x128xf32, #tpu.memory_space<vmem>>, %arg5: memref<1x128xf32, #tpu.memory_space<vmem>>, %arg6: memref<128x32xf32, #tpu.memory_space<vmem>>, %arg7: memref<1x32xf32, #tpu.memory_space<vmem>>, %arg8: memref<1x32xf32, #tpu.memory_space<vmem>>, %arg9: memref<1x32xf32, #tpu.memory_space<vmem>>, %arg10: memref<32x32xf32, #tpu.memory_space<vmem>>, %arg11: memref<1x32xf32, #tpu.memory_space<vmem>>, %arg12: memref<32x32xf32, #tpu.memory_space<vmem>>, %arg13: memref<1x32xf32, #tpu.memory_space<vmem>>, %arg14: memref<1x8x32xf32, #tpu.memory_space<vmem>>) attributes {dimension_semantics = [#tpu.dimension_semantics<parallel>], iteration_bounds = array<i64: 2>, scalar_prefetch = 0 : i64, scratch_operands = 0 : i64, tpu.core_type = #tpu.core_type<tc>, window_params = [{transform_indices = @transform_0, window_bounds = array<i64: 1, 8, 32>}, {transform_indices = @transform_1, window_bounds = array<i64: 1, 1, 8, 8>}, {transform_indices = @transform_2, window_bounds = array<i64: 1, 1, 8, 8>}, {pipeline_mode = #tpu.pipeline_mode<synchronous>, transform_indices = @transform_3, window_bounds = array<i64: 32, 128>}, {pipeline_mode = #tpu.pipeline_mode<synchronous>, transform_indices = @transform_4, window_bounds = array<i64: 1, 128>}, {pipeline_mode = #tpu.pipeline_mode<synchronous>, transform_indices = @transform_5, window_bounds = array<i64: 128, 32>}, {pipeline_mode = #tpu.pipeline_mode<synchronous>, transform_indices = @transform_6, window_bounds = array<i64: 1, 32>}, {pipeline_mode = #tpu.pipeline_mode<synchronous>, transform_indices = @transform_7, window_bounds = array<i64: 1, 32>}, {pipeline_mode = #tpu.pipeline_mode<synchronous>, transform_indices = @transform_8, window_bounds = array<i64: 1, 32>}, {pipeline_mode = #tpu.pipeline_mode<synchronous>, transform_indices = @transform_9, window_bounds = array<i64: 32, 32>}, {pipeline_mode = #tpu.pipeline_mode<synchronous>, transform_indices = @transform_10, window_bounds = array<i64: 1, 32>}, {pipeline_mode = #tpu.pipeline_mode<synchronous>, transform_indices = @transform_11, window_bounds = array<i64: 32, 32>}, {pipeline_mode = #tpu.pipeline_mode<synchronous>, transform_indices = @transform_12, window_bounds = array<i64: 1, 32>}, {transform_indices = @transform_13, window_bounds = array<i64: 1, 8, 32>}]} {
    %c0 = arith.constant 0 : index
    %c0_0 = arith.constant 0 : index
    %c0_1 = arith.constant 0 : index
    %0 = vector.load %arg1[%c0, %c0_0, %c0_1] : memref<1x8x32xf32, #tpu.memory_space<vmem>>, vector<1x8x32xf32>
    %1 = vector.shape_cast %0 : vector<1x8x32xf32> to vector<8x32xf32>
    %c0_2 = arith.constant 0 : index
    %c0_3 = arith.constant 0 : index
    %c0_4 = arith.constant 0 : index
    %c0_5 = arith.constant 0 : index
    %2 = vector.load %arg2[%c0_2, %c0_3, %c0_4, %c0_5] : memref<1x1x8x8xf32, #tpu.memory_space<vmem>>, vector<1x1x8x8xf32>
    %3 = vector.shape_cast %2 : vector<1x1x8x8xf32> to vector<8x8xf32>
    %c0_6 = arith.constant 0 : index
    %c0_7 = arith.constant 0 : index
    %c0_8 = arith.constant 0 : index
    %c0_9 = arith.constant 0 : index
    %4 = vector.load %arg3[%c0_6, %c0_7, %c0_8, %c0_9] : memref<1x1x8x8xf32, #tpu.memory_space<vmem>>, vector<1x1x8x8xf32>
    %5 = vector.shape_cast %4 : vector<1x1x8x8xf32> to vector<8x8xf32>
    %c0_10 = arith.constant 0 : index
    %c0_11 = arith.constant 0 : index
    %6 = vector.load %arg4[%c0_10, %c0_11] : memref<32x128xf32, #tpu.memory_space<vmem>>, vector<32x128xf32>
    %cst = arith.constant dense<0.000000e+00> : vector<8x128xf32>
    %7 = tpu.matmul %1, %6, %cst {dimension_numbers = #tpu.dot_dimension_numbers<[1], [0], [0], [1], [0, 0, 1, 1], [], []>, precision = #tpu.contract_precision<fp32>} : vector<8x32xf32>, vector<32x128xf32>, vector<8x128xf32> -> vector<8x128xf32>
    %8 = vector.extract_strided_slice %7 {offsets = [0, 0], sizes = [8, 64], strides = [1, 1]} : vector<8x128xf32> to vector<8x64xf32>
    %cst_12 = arith.constant dense<0.000000e+00> : vector<8x64xf32>
    %9 = tpu.matmul %3, %8, %cst_12 {dimension_numbers = #tpu.dot_dimension_numbers<[1], [0], [0], [1], [0, 0, 1, 1], [], []>, precision = #tpu.contract_precision<fp32>} : vector<8x8xf32>, vector<8x64xf32>, vector<8x64xf32> -> vector<8x64xf32>
    %10 = vector.extract_strided_slice %7 {offsets = [0, 64], sizes = [8, 64], strides = [1, 1]} : vector<8x128xf32> to vector<8x64xf32>
    %cst_13 = arith.constant dense<0.000000e+00> : vector<8x64xf32>
    %11 = tpu.matmul %5, %10, %cst_13 {dimension_numbers = #tpu.dot_dimension_numbers<[1], [0], [0], [1], [0, 0, 1, 1], [], []>, precision = #tpu.contract_precision<fp32>} : vector<8x8xf32>, vector<8x64xf32>, vector<8x64xf32> -> vector<8x64xf32>
    %12 = tpu.concatenate %9, %11 in 1 : vector<8x64xf32>, vector<8x64xf32> -> vector<8x128xf32>
    %c0_14 = arith.constant 0 : index
    %c0_15 = arith.constant 0 : index
    %13 = vector.load %arg5[%c0_14, %c0_15] : memref<1x128xf32, #tpu.memory_space<vmem>>, vector<1x128xf32>
    %14 = vector.broadcast %13 : vector<1x128xf32> to vector<8x128xf32>
    %15 = arith.addf %12, %14 : vector<8x128xf32>
    %cst_16 = arith.constant 0.000000e+00 : f32
    %16 = vector.broadcast %cst_16 : f32 to vector<8x128xf32>
    %17 = arith.maximumf %15, %16 : vector<8x128xf32>
    %c0_17 = arith.constant 0 : index
    %c0_18 = arith.constant 0 : index
    %18 = vector.load %arg6[%c0_17, %c0_18] : memref<128x32xf32, #tpu.memory_space<vmem>>, vector<128x32xf32>
    %cst_19 = arith.constant dense<0.000000e+00> : vector<8x32xf32>
    %19 = tpu.matmul %17, %18, %cst_19 {dimension_numbers = #tpu.dot_dimension_numbers<[1], [0], [0], [1], [0, 0, 1, 1], [], []>, precision = #tpu.contract_precision<fp32>} : vector<8x128xf32>, vector<128x32xf32>, vector<8x32xf32> -> vector<8x32xf32>
    %20 = vector.extract_strided_slice %19 {offsets = [0, 0], sizes = [8, 16], strides = [1, 1]} : vector<8x32xf32> to vector<8x16xf32>
    %cst_20 = arith.constant dense<0.000000e+00> : vector<8x16xf32>
    %21 = tpu.matmul %3, %20, %cst_20 {dimension_numbers = #tpu.dot_dimension_numbers<[1], [0], [0], [1], [0, 0, 1, 1], [], []>, precision = #tpu.contract_precision<fp32>} : vector<8x8xf32>, vector<8x16xf32>, vector<8x16xf32> -> vector<8x16xf32>
    %22 = vector.extract_strided_slice %19 {offsets = [0, 16], sizes = [8, 16], strides = [1, 1]} : vector<8x32xf32> to vector<8x16xf32>
    %cst_21 = arith.constant dense<0.000000e+00> : vector<8x16xf32>
    %23 = tpu.matmul %5, %22, %cst_21 {dimension_numbers = #tpu.dot_dimension_numbers<[1], [0], [0], [1], [0, 0, 1, 1], [], []>, precision = #tpu.contract_precision<fp32>} : vector<8x8xf32>, vector<8x16xf32>, vector<8x16xf32> -> vector<8x16xf32>
    %24 = tpu.concatenate %21, %23 in 1 : vector<8x16xf32>, vector<8x16xf32> -> vector<8x32xf32>
    %c0_22 = arith.constant 0 : index
    %c0_23 = arith.constant 0 : index
    %25 = vector.load %arg7[%c0_22, %c0_23] : memref<1x32xf32, #tpu.memory_space<vmem>>, vector<1x32xf32>
    %26 = vector.broadcast %25 : vector<1x32xf32> to vector<8x32xf32>
    %27 = arith.addf %24, %26 : vector<8x32xf32>
    %cst_24 = arith.constant dense<0.000000e+00> : vector<8xf32>
    %28 = vector.multi_reduction <add>, %27, %cst_24 [1] : vector<8x32xf32> to vector<8xf32>
    %29 = vector.shape_cast %28 : vector<8xf32> to vector<8x1xf32>
    %cst_25 = arith.constant 3.200000e+01 : f32
    %30 = vector.broadcast %cst_25 : f32 to vector<8x1xf32>
    %31 = arith.divf %29, %30 : vector<8x1xf32>
    %32 = vector.broadcast %31 : vector<8x1xf32> to vector<8x32xf32>
    %33 = arith.subf %27, %32 : vector<8x32xf32>
    %34 = arith.mulf %33, %33 : vector<8x32xf32>
    %cst_26 = arith.constant dense<0.000000e+00> : vector<8xf32>
    %35 = vector.multi_reduction <add>, %34, %cst_26 [1] : vector<8x32xf32> to vector<8xf32>
    %36 = vector.shape_cast %35 : vector<8xf32> to vector<8x1xf32>
    %cst_27 = arith.constant 3.100000e+01 : f32
    %37 = vector.broadcast %cst_27 : f32 to vector<8x1xf32>
    %38 = arith.divf %36, %37 : vector<8x1xf32>
    %39 = math.sqrt %38 : vector<8x1xf32>
    %cst_28 = arith.constant 9.99999997E-7 : f32
    %40 = vector.broadcast %cst_28 : f32 to vector<8x1xf32>
    %41 = arith.addf %39, %40 : vector<8x1xf32>
    %42 = tpu.reciprocal %41 {approx = true} : vector<8x1xf32> -> vector<8x1xf32>
    %c0_29 = arith.constant 0 : index
    %c0_30 = arith.constant 0 : index
    %43 = vector.load %arg8[%c0_29, %c0_30] : memref<1x32xf32, #tpu.memory_space<vmem>>, vector<1x32xf32>
    %44 = vector.broadcast %42 : vector<8x1xf32> to vector<8x32xf32>
    %45 = arith.mulf %33, %44 : vector<8x32xf32>
    %46 = vector.broadcast %43 : vector<1x32xf32> to vector<8x32xf32>
    %47 = arith.mulf %46, %45 : vector<8x32xf32>
    %c0_31 = arith.constant 0 : index
    %c0_32 = arith.constant 0 : index
    %48 = vector.load %arg9[%c0_31, %c0_32] : memref<1x32xf32, #tpu.memory_space<vmem>>, vector<1x32xf32>
    %49 = vector.broadcast %48 : vector<1x32xf32> to vector<8x32xf32>
    %50 = arith.addf %47, %49 : vector<8x32xf32>
    %51 = arith.addf %50, %1 : vector<8x32xf32>
    %c0_33 = arith.constant 0 : index
    %c0_34 = arith.constant 0 : index
    %52 = vector.load %arg10[%c0_33, %c0_34] : memref<32x32xf32, #tpu.memory_space<vmem>>, vector<32x32xf32>
    %cst_35 = arith.constant dense<0.000000e+00> : vector<8x32xf32>
    %53 = tpu.matmul %51, %52, %cst_35 {dimension_numbers = #tpu.dot_dimension_numbers<[1], [0], [0], [1], [0, 0, 1, 1], [], []>, precision = #tpu.contract_precision<fp32>} : vector<8x32xf32>, vector<32x32xf32>, vector<8x32xf32> -> vector<8x32xf32>
    %c0_36 = arith.constant 0 : index
    %c0_37 = arith.constant 0 : index
    %54 = vector.load %arg11[%c0_36, %c0_37] : memref<1x32xf32, #tpu.memory_space<vmem>>, vector<1x32xf32>
    %55 = vector.broadcast %54 : vector<1x32xf32> to vector<8x32xf32>
    %56 = arith.addf %53, %55 : vector<8x32xf32>
    %cst_38 = arith.constant 0.000000e+00 : f32
    %57 = vector.broadcast %cst_38 : f32 to vector<8x32xf32>
    %58 = arith.maximumf %56, %57 : vector<8x32xf32>
    %c0_39 = arith.constant 0 : index
    %c0_40 = arith.constant 0 : index
    %59 = vector.load %arg12[%c0_39, %c0_40] : memref<32x32xf32, #tpu.memory_space<vmem>>, vector<32x32xf32>
    %cst_41 = arith.constant dense<0.000000e+00> : vector<8x32xf32>
    %60 = tpu.matmul %58, %59, %cst_41 {dimension_numbers = #tpu.dot_dimension_numbers<[1], [0], [0], [1], [0, 0, 1, 1], [], []>, precision = #tpu.contract_precision<fp32>} : vector<8x32xf32>, vector<32x32xf32>, vector<8x32xf32> -> vector<8x32xf32>
    %c0_42 = arith.constant 0 : index
    %c0_43 = arith.constant 0 : index
    %61 = vector.load %arg13[%c0_42, %c0_43] : memref<1x32xf32, #tpu.memory_space<vmem>>, vector<1x32xf32>
    %62 = vector.broadcast %61 : vector<1x32xf32> to vector<8x32xf32>
    %63 = arith.addf %60, %62 : vector<8x32xf32>
    %64 = arith.addf %63, %51 : vector<8x32xf32>
    %65 = vector.shape_cast %64 : vector<8x32xf32> to vector<1x8x32xf32>
    %c0_44 = arith.constant 0 : index
    %c0_45 = arith.constant 0 : index
    %c0_46 = arith.constant 0 : index
    %66 = vector.load %arg14[%c0_44, %c0_45, %c0_46] : memref<1x8x32xf32, #tpu.memory_space<vmem>>, vector<1x8x32xf32>
    tpu.vector_store %arg14[%c0_44, %c0_45, %c0_46], %65 {strides = array<i32>} : memref<1x8x32xf32, #tpu.memory_space<vmem>>, vector<1x8x32xf32>,
    return
  }
  func.func @transform_0(%arg0: i32) -> (i32, i32, i32) {
    %c0_i32 = arith.constant 0 : i32
    %c0_i32_0 = arith.constant 0 : i32
    %c0_i32_1 = arith.constant 0 : i32
    return %arg0, %c0_i32, %c0_i32_0 : i32, i32, i32
  }
  func.func @transform_1(%arg0: i32) -> (i32, i32, i32, i32) {
    %c1_i32 = arith.constant 1 : i32
    %c0_i32 = arith.constant 0 : i32
    %c0_i32_0 = arith.constant 0 : i32
    %c0_i32_1 = arith.constant 0 : i32
    return %arg0, %c1_i32, %c0_i32, %c0_i32_0 : i32, i32, i32, i32
  }
  func.func @transform_2(%arg0: i32) -> (i32, i32, i32, i32) {
    %c4_i32 = arith.constant 4 : i32
    %c0_i32 = arith.constant 0 : i32
    %c0_i32_0 = arith.constant 0 : i32
    %c0_i32_1 = arith.constant 0 : i32
    return %arg0, %c4_i32, %c0_i32, %c0_i32_0 : i32, i32, i32, i32
  }
  func.func @transform_3(%arg0: i32) -> (i32, i32) {
    %c0_i32 = arith.constant 0 : i32
    %c0_i32_0 = arith.constant 0 : i32
    %c0_i32_1 = arith.constant 0 : i32
    return %c0_i32, %c0_i32_0 : i32, i32
  }
  func.func @transform_4(%arg0: i32) -> (i32, i32) {
    %c0_i32 = arith.constant 0 : i32
    %c0_i32_0 = arith.constant 0 : i32
    %c0_i32_1 = arith.constant 0 : i32
    return %c0_i32, %c0_i32_0 : i32, i32
  }
  func.func @transform_5(%arg0: i32) -> (i32, i32) {
    %c0_i32 = arith.constant 0 : i32
    %c0_i32_0 = arith.constant 0 : i32
    %c0_i32_1 = arith.constant 0 : i32
    return %c0_i32, %c0_i32_0 : i32, i32
  }
  func.func @transform_6(%arg0: i32) -> (i32, i32) {
    %c0_i32 = arith.constant 0 : i32
    %c0_i32_0 = arith.constant 0 : i32
    %c0_i32_1 = arith.constant 0 : i32
    return %c0_i32, %c0_i32_0 : i32, i32
  }
  func.func @transform_7(%arg0: i32) -> (i32, i32) {
    %c0_i32 = arith.constant 0 : i32
    %c0_i32_0 = arith.constant 0 : i32
    %c0_i32_1 = arith.constant 0 : i32
    return %c0_i32, %c0_i32_0 : i32, i32
  }
  func.func @transform_8(%arg0: i32) -> (i32, i32) {
    %c0_i32 = arith.constant 0 : i32
    %c0_i32_0 = arith.constant 0 : i32
    %c0_i32_1 = arith.constant 0 : i32
    return %c0_i32, %c0_i32_0 : i32, i32
  }
  func.func @transform_9(%arg0: i32) -> (i32, i32) {
    %c0_i32 = arith.constant 0 : i32
    %c0_i32_0 = arith.constant 0 : i32
    %c0_i32_1 = arith.constant 0 : i32
    return %c0_i32, %c0_i32_0 : i32, i32
  }
  func.func @transform_10(%arg0: i32) -> (i32, i32) {
    %c0_i32 = arith.constant 0 : i32
    %c0_i32_0 = arith.constant 0 : i32
    %c0_i32_1 = arith.constant 0 : i32
    return %c0_i32, %c0_i32_0 : i32, i32
  }
  func.func @transform_11(%arg0: i32) -> (i32, i32) {
    %c0_i32 = arith.constant 0 : i32
    %c0_i32_0 = arith.constant 0 : i32
    %c0_i32_1 = arith.constant 0 : i32
    return %c0_i32, %c0_i32_0 : i32, i32
  }
  func.func @transform_12(%arg0: i32) -> (i32, i32) {
    %c0_i32 = arith.constant 0 : i32
    %c0_i32_0 = arith.constant 0 : i32
    %c0_i32_1 = arith.constant 0 : i32
    return %c0_i32, %c0_i32_0 : i32, i32
  }
  func.func @transform_13(%arg0: i32) -> (i32, i32, i32) {
    %c0_i32 = arith.constant 0 : i32
    %c0_i32_0 = arith.constant 0 : i32
    %c0_i32_1 = arith.constant 0 : i32
    return %arg0, %c0_i32, %c0_i32_0 : i32, i32, i32
  }
}

</mosaic_0001>

<llo_original>
// kernel: graph_module_forward.1
$region0: #{graph_module_forward.1}
  #allocation0 [shape = 'u32[]', space=smem, size = 0x4, offset = 0x4, fixed_abs, tag = 'smem constant byte address 0x4 - core index']
  #allocation1 [shape = 'u32[144,128]{1,0:T(1,128)}', space=vmem, size = 0x12000, scoped, tag = 'internal scratch']
  %s0 = inlined_call_operand.vmem [shape: f32[2,8,32], index: 0, kind: input, shape index: {}]
  %s1 = inlined_call_operand.vmem [shape: f32[2,5,8,8], index: 1, kind: input, shape index: {}, may-alias: {1,2}]
  %s2 = inlined_call_operand.vmem [shape: f32[2,5,8,8], index: 2, kind: input, shape index: {}, may-alias: {1,2}]
  %s3 = inlined_call_operand.vmem [shape: f32[32,128], index: 3, kind: input, shape index: {}]
  %s4 = inlined_call_operand.vmem [shape: f32[1,128], index: 4, kind: input, shape index: {}]
  %s5 = inlined_call_operand.vmem [shape: f32[128,32], index: 5, kind: input, shape index: {}]
  %s6 = inlined_call_operand.vmem [shape: f32[1,32], index: 6, kind: input, shape index: {}]
  %s7 = inlined_call_operand.vmem [shape: f32[1,32], index: 7, kind: input, shape index: {}]
  %s8 = inlined_call_operand.vmem [shape: f32[1,32], index: 8, kind: input, shape index: {}]
  %s9 = inlined_call_operand.vmem [shape: f32[32,32], index: 9, kind: input, shape index: {}]
  %s10 = inlined_call_operand.vmem [shape: f32[1,32], index: 10, kind: input, shape index: {}]
  %s11 = inlined_call_operand.vmem [shape: f32[32,32], index: 11, kind: input, shape index: {}]
  %s12 = inlined_call_operand.vmem [shape: f32[1,32], index: 12, kind: input, shape index: {}]
  %s13 = inlined_call_operand.hbm [shape: f32[2,8,32], index: 13, kind: output, shape index: {}]
  %s14 = sld [smem:[#allocation0]]
  $region85: #{graph_module_forward.1} parent=0
    _
  %s16 = ssub.s32 1, %s14
  %s17 = scalar_select 0, %s16, %s14
  $region1: #{graph_module_forward.1} parent=0
    #allocation2 [shape = 'u8[8192]{0}', space=vmem, size = 0x2000, scoped, tag = 'output window, operand 0']
    #allocation3 [shape = 's32[2]{0}', space=sflag, size = 0x8, scoped, tag = 'scoped memory for graph_module_forward.1']
    %18 = vsyncpa [#allocation3], 0
    %s19 = scalar_lea.sflag [#allocation3], 1
    %20 = vsyncpa %s19, 0
    loop: start=0, step=1, limit=4
    $region2: #{graph_module_forward.1} parent=1 // loop_pre_header
      _
    $region3: #{graph_module_forward.1} parent=1 // loop_header
      %s22 = sphi 0, %s26
      %p23 = scmp.ge.s32.totalorder %s22, 4
      %s32 = sphi 0, %s34
      %s35 = sphi 0, %s32
      %s36 = sphi 0, %s35
      %s52 = sphi 0, %s36
      %s58 = sphi 0, %s60
      %s61 = sphi 0, %s58
      %s62 = sphi 0, %s61
      %s78 = sphi 0, %s62
      %s84 = sphi 0, %s86
      %s87 = sphi 0, %s84
      %s88 = sphi 0, %s87
      %s104 = sphi 0, %s88
      %s108 = sphi 0, %s108
      %s110 = sphi 0, %s108
      %s111 = sphi 0, %s110
      %s125 = sphi 0, %s111
      %s129 = sphi 0, %s129
      %s131 = sphi 0, %s129
      %s132 = sphi 0, %s131
      %s146 = sphi 0, %s132
      %s150 = sphi 0, %s150
      %s152 = sphi 0, %s150
      %s153 = sphi 0, %s152
      %s167 = sphi 0, %s153
      %s171 = sphi 0, %s171
      %s173 = sphi 0, %s171
      %s174 = sphi 0, %s173
      %s188 = sphi 0, %s174
      %s192 = sphi 0, %s192
      %s194 = sphi 0, %s192
      %s195 = sphi 0, %s194
      %s209 = sphi 0, %s195
      %s213 = sphi 0, %s213
      %s215 = sphi 0, %s213
      %s216 = sphi 0, %s215
      %s230 = sphi 0, %s216
      %s234 = sphi 0, %s234
      %s236 = sphi 0, %s234
      %s237 = sphi 0, %s236
      %s251 = sphi 0, %s237
      %s255 = sphi 0, %s255
      %s257 = sphi 0, %s255
      %s258 = sphi 0, %s257
      %s272 = sphi 0, %s258
      %s276 = sphi 0, %s276
      %s278 = sphi 0, %s276
      %s279 = sphi 0, %s278
      %s293 = sphi 0, %s279
      %s297 = sphi 0, %s297
      %s299 = sphi 0, %s297
      %s300 = sphi 0, %s299
      %s314 = sphi 0, %s300
      %s320 = sphi 0, %s322
      %s323 = sphi 0, %s320
      %s324 = sphi 0, %s323
      %s340 = sphi 0, %s324
    $region4: #{graph_module_forward.1} parent=1 // loop_header_branch
      %25 = sbr.rel (%p23) target = $region8
    $region5: #{graph_module_forward.1} parent=1 // loop_body
      %s27 = ssub.s32 %s22, 1
      %s28 = ssub.s32 %s22, 2
      %s29 = sadd.s32 %s22, 1
      %s30 = ssub.s32 %s22, %s29
      %p31 = scmp.eq.s32.totalorder %s30, 0
      %s33 = sadd.s32 %s32, 1
      %s34 = scalar_select %p31, %s32, %s33
      %p37 = pneg %p31
      %p38 = scmp.eq.s32.totalorder %s22, 1
      %p39 = por %p37, %p38
      %p40 = scmp.ne.s32.totalorder %s32, %s35
      %p41 = scmp.eq.s32.totalorder %s22, 0
      %p42 = por %p40, %p41
      %p43 = scmp.ne.s32.totalorder %s32, %s35
      %p44 = scmp.eq.s32.totalorder %s27, 1
      %p45 = por %p43, %p44
      %p46 = scmp.ne.s32.totalorder %s35, %s36
      %p47 = scmp.eq.s32.totalorder %s27, 0
      %p48 = por %p46, %p47
      %p49 = scmp.ne.s32.totalorder %s35, %s36
      %p50 = scmp.eq.s32.totalorder %s28, 1
      %p51 = por %p49, %p50
      %p53 = scmp.ne.s32.totalorder %s36, %s52
      %p54 = scmp.eq.s32.totalorder %s28, 0
      %p55 = por %p53, %p54
      %s56 = ssub.s32 %s22, %s29
      %p57 = scmp.eq.s32.totalorder %s56, 0
      %s59 = sadd.s32 %s58, 1
      %s60 = scalar_select %p57, %s58, %s59
      %p63 = pneg %p57
      %p64 = scmp.eq.s32.totalorder %s22, 1
      %p65 = por %p63, %p64
      %p66 = scmp.ne.s32.totalorder %s58, %s61
      %p67 = scmp.eq.s32.totalorder %s22, 0
      %p68 = por %p66, %p67
      %p69 = scmp.ne.s32.totalorder %s58, %s61
      %p70 = scmp.eq.s32.totalorder %s27, 1
      %p71 = por %p69, %p70
      %p72 = scmp.ne.s32.totalorder %s61, %s62
      %p73 = scmp.eq.s32.totalorder %s27, 0
      %p74 = por %p72, %p73
      %p75 = scmp.ne.s32.totalorder %s61, %s62
      %p76 = scmp.eq.s32.totalorder %s28, 1
      %p77 = por %p75, %p76
      %p79 = scmp.ne.s32.totalorder %s62, %s78
      %p80 = scmp.eq.s32.totalorder %s28, 0
      %p81 = por %p79, %p80
      %s82 = ssub.s32 %s22, %s29
      %p83 = scmp.eq.s32.totalorder %s82, 0
      %s85 = sadd.s32 %s84, 1
      %s86 = scalar_select %p83, %s84, %s85
      %p89 = pneg %p83
      %p90 = scmp.eq.s32.totalorder %s22, 1
      %p91 = por %p89, %p90
      %p92 = scmp.ne.s32.totalorder %s84, %s87
      %p93 = scmp.eq.s32.totalorder %s22, 0
      %p94 = por %p92, %p93
      %p95 = scmp.ne.s32.totalorder %s84, %s87
      %p96 = scmp.eq.s32.totalorder %s27, 1
      %p97 = por %p95, %p96
      %p98 = scmp.ne.s32.totalorder %s87, %s88
      %p99 = scmp.eq.s32.totalorder %s27, 0
      %p100 = por %p98, %p99
      %p101 = scmp.ne.s32.totalorder %s87, %s88
      %p102 = scmp.eq.s32.totalorder %s28, 1
      %p103 = por %p101, %p102
      %p105 = scmp.ne.s32.totalorder %s88, %s104
      %p106 = scmp.eq.s32.totalorder %s28, 0
      %p107 = por %p105, %p106
      %s109 = sadd.s32 %s108, 1
      %p112 = scmp.eq.s32.totalorder %s22, 1
      %p113 = scmp.ne.s32.totalorder %s108, %s110
      %p114 = scmp.eq.s32.totalorder %s22, 0
      %p115 = por %p113, %p114
      %p116 = scmp.ne.s32.totalorder %s108, %s110
      %p117 = scmp.eq.s32.totalorder %s27, 1
      %p118 = por %p116, %p117
      %p119 = scmp.ne.s32.totalorder %s110, %s111
      %p120 = scmp.eq.s32.totalorder %s27, 0
      %p121 = por %p119, %p120
      %p122 = scmp.ne.s32.totalorder %s110, %s111
      %p123 = scmp.eq.s32.totalorder %s28, 1
      %p124 = por %p122, %p123
      %p126 = scmp.ne.s32.totalorder %s111, %s125
      %p127 = scmp.eq.s32.totalorder %s28, 0
      %p128 = por %p126, %p127
      %s130 = sadd.s32 %s129, 1
      %p133 = scmp.eq.s32.totalorder %s22, 1
      %p134 = scmp.ne.s32.totalorder %s129, %s131
      %p135 = scmp.eq.s32.totalorder %s22, 0
      %p136 = por %p134, %p135
      %p137 = scmp.ne.s32.totalorder %s129, %s131
      %p138 = scmp.eq.s32.totalorder %s27, 1
      %p139 = por %p137, %p138
      %p140 = scmp.ne.s32.totalorder %s131, %s132
      %p141 = scmp.eq.s32.totalorder %s27, 0
      %p142 = por %p140, %p141
      %p143 = scmp.ne.s32.totalorder %s131, %s132
      %p144 = scmp.eq.s32.totalorder %s28, 1
      %p145 = por %p143, %p144
      %p147 = scmp.ne.s32.totalorder %s132, %s146
      %p148 = scmp.eq.s32.totalorder %s28, 0
      %p149 = por %p147, %p148
      %s151 = sadd.s32 %s150, 1
      %p154 = scmp.eq.s32.totalorder %s22, 1
      %p155 = scmp.ne.s32.totalorder %s150, %s152
      %p156 = scmp.eq.s32.totalorder %s22, 0
      %p157 = por %p155, %p156
      %p158 = scmp.ne.s32.totalorder %s150, %s152
      %p159 = scmp.eq.s32.totalorder %s27, 1
      %p160 = por %p158, %p159
      %p161 = scmp.ne.s32.totalorder %s152, %s153
      %p162 = scmp.eq.s32.totalorder %s27, 0
      %p163 = por %p161, %p162
      %p164 = scmp.ne.s32.totalorder %s152, %s153
      %p165 = scmp.eq.s32.totalorder %s28, 1
      %p166 = por %p164, %p165
      %p168 = scmp.ne.s32.totalorder %s153, %s167
      %p169 = scmp.eq.s32.totalorder %s28, 0
      %p170 = por %p168, %p169
      %s172 = sadd.s32 %s171, 1
      %p175 = scmp.eq.s32.totalorder %s22, 1
      %p176 = scmp.ne.s32.totalorder %s171, %s173
      %p177 = scmp.eq.s32.totalorder %s22, 0
      %p178 = por %p176, %p177
      %p179 = scmp.ne.s32.totalorder %s171, %s173
      %p180 = scmp.eq.s32.totalorder %s27, 1
      %p181 = por %p179, %p180
      %p182 = scmp.ne.s32.totalorder %s173, %s174
      %p183 = scmp.eq.s32.totalorder %s27, 0
      %p184 = por %p182, %p183
      %p185 = scmp.ne.s32.totalorder %s173, %s174
      %p186 = scmp.eq.s32.totalorder %s28, 1
      %p187 = por %p185, %p186
      %p189 = scmp.ne.s32.totalorder %s174, %s188
      %p190 = scmp.eq.s32.totalorder %s28, 0
      %p191 = por %p189, %p190
      %s193 = sadd.s32 %s192, 1
      %p196 = scmp.eq.s32.totalorder %s22, 1
      %p197 = scmp.ne.s32.totalorder %s192, %s194
      %p198 = scmp.eq.s32.totalorder %s22, 0
      %p199 = por %p197, %p198
      %p200 = scmp.ne.s32.totalorder %s192, %s194
      %p201 = scmp.eq.s32.totalorder %s27, 1
      %p202 = por %p200, %p201
      %p203 = scmp.ne.s32.totalorder %s194, %s195
      %p204 = scmp.eq.s32.totalorder %s27, 0
      %p205 = por %p203, %p204
      %p206 = scmp.ne.s32.totalorder %s194, %s195
      %p207 = scmp.eq.s32.totalorder %s28, 1
      %p208 = por %p206, %p207
      %p210 = scmp.ne.s32.totalorder %s195, %s209
      %p211 = scmp.eq.s32.totalorder %s28, 0
      %p212 = por %p210, %p211
      %s214 = sadd.s32 %s213, 1
      %p217 = scmp.eq.s32.totalorder %s22, 1
      %p218 = scmp.ne.s32.totalorder %s213, %s215
      %p219 = scmp.eq.s32.totalorder %s22, 0
      %p220 = por %p218, %p219
      %p221 = scmp.ne.s32.totalorder %s213, %s215
      %p222 = scmp.eq.s32.totalorder %s27, 1
      %p223 = por %p221, %p222
      %p224 = scmp.ne.s32.totalorder %s215, %s216
      %p225 = scmp.eq.s32.totalorder %s27, 0
      %p226 = por %p224, %p225
      %p227 = scmp.ne.s32.totalorder %s215, %s216
      %p228 = scmp.eq.s32.totalorder %s28, 1
      %p229 = por %p227, %p228
      %p231 = scmp.ne.s32.totalorder %s216, %s230
      %p232 = scmp.eq.s32.totalorder %s28, 0
      %p233 = por %p231, %p232
      %s235 = sadd.s32 %s234, 1
      %p238 = scmp.eq.s32.totalorder %s22, 1
      %p239 = scmp.ne.s32.totalorder %s234, %s236
      %p240 = scmp.eq.s32.totalorder %s22, 0
      %p241 = por %p239, %p240
      %p242 = scmp.ne.s32.totalorder %s234, %s236
      %p243 = scmp.eq.s32.totalorder %s27, 1
      %p244 = por %p242, %p243
      %p245 = scmp.ne.s32.totalorder %s236, %s237
      %p246 = scmp.eq.s32.totalorder %s27, 0
      %p247 = por %p245, %p246
      %p248 = scmp.ne.s32.totalorder %s236, %s237
      %p249 = scmp.eq.s32.totalorder %s28, 1
      %p250 = por %p248, %p249
      %p252 = scmp.ne.s32.totalorder %s237, %s251
      %p253 = scmp.eq.s32.totalorder %s28, 0
      %p254 = por %p252, %p253
      %s256 = sadd.s32 %s255, 1
      %p259 = scmp.eq.s32.totalorder %s22, 1
      %p260 = scmp.ne.s32.totalorder %s255, %s257
      %p261 = scmp.eq.s32.totalorder %s22, 0
      %p262 = por %p260, %p261
      %p263 = scmp.ne.s32.totalorder %s255, %s257
      %p264 = scmp.eq.s32.totalorder %s27, 1
      %p265 = por %p263, %p264
      %p266 = scmp.ne.s32.totalorder %s257, %s258
      %p267 = scmp.eq.s32.totalorder %s27, 0
      %p268 = por %p266, %p267
      %p269 = scmp.ne.s32.totalorder %s257, %s258
      %p270 = scmp.eq.s32.totalorder %s28, 1
      %p271 = por %p269, %p270
      %p273 = scmp.ne.s32.totalorder %s258, %s272
      %p274 = scmp.eq.s32.totalorder %s28, 0
      %p275 = por %p273, %p274
      %s277 = sadd.s32 %s276, 1
      %p280 = scmp.eq.s32.totalorder %s22, 1
      %p281 = scmp.ne.s32.totalorder %s276, %s278
      %p282 = scmp.eq.s32.totalorder %s22, 0
      %p283 = por %p281, %p282
      %p284 = scmp.ne.s32.totalorder %s276, %s278
      %p285 = scmp.eq.s32.totalorder %s27, 1
      %p286 = por %p284, %p285
      %p287 = scmp.ne.s32.totalorder %s278, %s279
      %p288 = scmp.eq.s32.totalorder %s27, 0
      %p289 = por %p287, %p288
      %p290 = scmp.ne.s32.totalorder %s278, %s279
      %p291 = scmp.eq.s32.totalorder %s28, 1
      %p292 = por %p290, %p291
      %p294 = scmp.ne.s32.totalorder %s279, %s293
      %p295 = scmp.eq.s32.totalorder %s28, 0
      %p296 = por %p294, %p295
      %s298 = sadd.s32 %s297, 1
      %p301 = scmp.eq.s32.totalorder %s22, 1
      %p302 = scmp.ne.s32.totalorder %s297, %s299
      %p303 = scmp.eq.s32.totalorder %s22, 0
      %p304 = por %p302, %p303
      %p305 = scmp.ne.s32.totalorder %s297, %s299
      %p306 = scmp.eq.s32.totalorder %s27, 1
      %p307 = por %p305, %p306
      %p308 = scmp.ne.s32.totalorder %s299, %s300
      %p309 = scmp.eq.s32.totalorder %s27, 0
      %p310 = por %p308, %p309
      %p311 = scmp.ne.s32.totalorder %s299, %s300
      %p312 = scmp.eq.s32.totalorder %s28, 1
      %p313 = por %p311, %p312
      %p315 = scmp.ne.s32.totalorder %s300, %s314
      %p316 = scmp.eq.s32.totalorder %s28, 0
      %p317 = por %p315, %p316
      %s318 = ssub.s32 %s22, %s29
      %p319 = scmp.eq.s32.totalorder %s318, 0
      %s321 = sadd.s32 %s320, 1
      %s322 = scalar_select %p319, %s320, %s321
      %p325 = pneg %p319
      %p326 = scmp.eq.s32.totalorder %s22, 1
      %p327 = por %p325, %p326
      %p328 = scmp.ne.s32.totalorder %s320, %s323
      %p329 = scmp.eq.s32.totalorder %s22, 0
      %p330 = por %p328, %p329
      %p331 = scmp.ne.s32.totalorder %s320, %s323
      %p332 = scmp.eq.s32.totalorder %s27, 1
      %p333 = por %p331, %p332
      %p334 = scmp.ne.s32.totalorder %s323, %s324
      %p335 = scmp.eq.s32.totalorder %s27, 0
      %p336 = por %p334, %p335
      %p337 = scmp.ne.s32.totalorder %s323, %s324
      %p338 = scmp.eq.s32.totalorder %s28, 1
      %p339 = por %p337, %p338
      %p341 = scmp.ne.s32.totalorder %s324, %s340
      %p342 = scmp.eq.s32.totalorder %s28, 0
      %p343 = por %p341, %p342
      %p344 = scmp.le.s32.totalorder 1, %s22
      %p345 = scmp.lt.s32.totalorder %s22, 3
      %p346 = pnand %p344, %p345
      %p347 = pneg %p346
      // Predicated region
      $region9: #{graph_module_forward.1} parent=5 // pred_check
        _
      $region10: #{graph_module_forward.1} parent=5 // pred_check_branch
        %349 = sbr.rel (%p346) target = $region12
      $region11: #{graph_module_forward.1} parent=5 // pred_region
        %s350 = ssub.s32 %s22, 1
        // Predicated region
        $region13: #{graph_module_forward.1} parent=11 // pred_check
          %p351 = pneg %p121
        $region14: #{graph_module_forward.1} parent=11 // pred_check_branch
          %353 = sbr.rel (%p351) target = $region16
        $region15: #{graph_module_forward.1} parent=11 // pred_region
          _
        $region16: #{graph_module_forward.1} parent=11 // pred_fallthru
          _
        // Predicated region
        $region17: #{graph_module_forward.1} parent=11 // pred_check
          %p354 = pneg %p142
        $region18: #{graph_module_forward.1} parent=11 // pred_check_branch
          %356 = sbr.rel (%p354) target = $region20
        $region19: #{graph_module_forward.1} parent=11 // pred_region
          _
        $region20: #{graph_module_forward.1} parent=11 // pred_fallthru
          _
        // Predicated region
        $region21: #{graph_module_forward.1} parent=11 // pred_check
          %p357 = pneg %p163
        $region22: #{graph_module_forward.1} parent=11 // pred_check_branch
          %359 = sbr.rel (%p357) target = $region24
        $region23: #{graph_module_forward.1} parent=11 // pred_region
          _
        $region24: #{graph_module_forward.1} parent=11 // pred_fallthru
          _
        // Predicated region
        $region25: #{graph_module_forward.1} parent=11 // pred_check
          %p360 = pneg %p184
        $region26: #{graph_module_forward.1} parent=11 // pred_check_branch
          %362 = sbr.rel (%p360) target = $region28
        $region27: #{graph_module_forward.1} parent=11 // pred_region
          _
        $region28: #{graph_module_forward.1} parent=11 // pred_fallthru
          _
        // Predicated region
        $region29: #{graph_module_forward.1} parent=11 // pred_check
          %p363 = pneg %p205
        $region30: #{graph_module_forward.1} parent=11 // pred_check_branch
          %365 = sbr.rel (%p363) target = $region32
        $region31: #{graph_module_forward.1} parent=11 // pred_region
          _
        $region32: #{graph_module_forward.1} parent=11 // pred_fallthru
          _
        // Predicated region
        $region33: #{graph_module_forward.1} parent=11 // pred_check
          %p366 = pneg %p226
        $region34: #{graph_module_forward.1} parent=11 // pred_check_branch
          %368 = sbr.rel (%p366) target = $region36
        $region35: #{graph_module_forward.1} parent=11 // pred_region
          _
        $region36: #{graph_module_forward.1} parent=11 // pred_fallthru
          _
        // Predicated region
        $region37: #{graph_module_forward.1} parent=11 // pred_check
          %p369 = pneg %p247
        $region38: #{graph_module_forward.1} parent=11 // pred_check_branch
          %371 = sbr.rel (%p369) target = $region40
        $region39: #{graph_module_forward.1} parent=11 // pred_region
          _
        $region40: #{graph_module_forward.1} parent=11 // pred_fallthru
          _
        // Predicated region
        $region41: #{graph_module_forward.1} parent=11 // pred_check
          %p372 = pneg %p268
        $region42: #{graph_module_forward.1} parent=11 // pred_check_branch
          %374 = sbr.rel (%p372) target = $region44
        $region43: #{graph_module_forward.1} parent=11 // pred_region
          _
        $region44: #{graph_module_forward.1} parent=11 // pred_fallthru
          _
        // Predicated region
        $region45: #{graph_module_forward.1} parent=11 // pred_check
          %p375 = pneg %p289
        $region46: #{graph_module_forward.1} parent=11 // pred_check_branch
          %377 = sbr.rel (%p375) target = $region48
        $region47: #{graph_module_forward.1} parent=11 // pred_region
          _
        $region48: #{graph_module_forward.1} parent=11 // pred_fallthru
          _
        // Predicated region
        $region49: #{graph_module_forward.1} parent=11 // pred_check
          %p378 = pneg %p310
        $region50: #{graph_module_forward.1} parent=11 // pred_check_branch
          %380 = sbr.rel (%p378) target = $region52
        $region51: #{graph_module_forward.1} parent=11 // pred_region
          _
        $region52: #{graph_module_forward.1} parent=11 // pred_fallthru
          _
      $region12: #{graph_module_forward.1} parent=5 // pred_fallthru
        _
      %p381 = scmp.lt.s32.totalorder %s22, 2
      // Predicated region
      $region53: #{graph_module_forward.1} parent=5 // pred_check
        %p382 = pneg %p381
      $region54: #{graph_module_forward.1} parent=5 // pred_check_branch
        %384 = sbr.rel (%p382) target = $region56
      $region55: #{graph_module_forward.1} parent=5 // pred_region
        // Predicated region
        $region57: #{graph_module_forward.1} parent=55 // pred_check
          %p385 = pneg %p42
        $region58: #{graph_module_forward.1} parent=55 // pred_check_branch
          %387 = sbr.rel (%p385) target = $region60
        $region59: #{graph_module_forward.1} parent=55 // pred_region
          %p388 = scmp.lt.s32.totalorder %s22, 1
          %s389 = scalar_select %p388, %s22, 1
          %s390 = smul.addr %s389, 8
          %s391 = scalar_lea.vmem %s0, %s390
        $region60: #{graph_module_forward.1} parent=55 // pred_fallthru
          _
        // Predicated region
        $region61: #{graph_module_forward.1} parent=55 // pred_check
          %p392 = pneg %p68
        $region62: #{graph_module_forward.1} parent=55 // pred_check_branch
          %394 = sbr.rel (%p392) target = $region64
        $region63: #{graph_module_forward.1} parent=55 // pred_region
          %p395 = scmp.lt.s32.totalorder %s22, 1
          %s396 = scalar_select %p395, %s22, 1
          %s397 = smul.addr %s396, 5
          %s398 = sadd.s32 1, %s397
          %s399 = smul.addr %s398, 8
          %s400 = scalar_lea.vmem %s1, %s399
        $region64: #{graph_module_forward.1} parent=55 // pred_fallthru
          _
        // Predicated region
        $region65: #{graph_module_forward.1} parent=55 // pred_check
          %p401 = pneg %p94
        $region66: #{graph_module_forward.1} parent=55 // pred_check_branch
          %403 = sbr.rel (%p401) target = $region68
        $region67: #{graph_module_forward.1} parent=55 // pred_region
          %p404 = scmp.lt.s32.totalorder %s22, 1
          %s405 = scalar_select %p404, %s22, 1
          %s406 = smul.addr %s405, 5
          %s407 = sadd.s32 4, %s406
          %s408 = smul.addr %s407, 8
          %s409 = scalar_lea.vmem %s2, %s408
        $region68: #{graph_module_forward.1} parent=55 // pred_fallthru
          _
      $region56: #{graph_module_forward.1} parent=5 // pred_fallthru
        _
      %p410 = scmp.le.s32.totalorder 1, %s22
      %p411 = scmp.lt.s32.totalorder %s22, 3
      %p412 = pnand %p410, %p411
      %p413 = pneg %p412
      // Predicated region
      $region69: #{graph_module_forward.1} parent=5 // pred_check
        _
      $region70: #{graph_module_forward.1} parent=5 // pred_check_branch
        %415 = sbr.rel (%p412) target = $region72
      $region71: #{graph_module_forward.1} parent=5 // pred_region
        %s416 = ssub.s32 %s22, 1
        %p417 = scmp.lt.s32.totalorder %s27, 1
        %s418 = scalar_select %p417, %s27, 1
        %s419 = smul.addr %s418, 8
        %s420 = scalar_lea.vmem %s0, %s419
        %p421 = pneg %p48
        %p422 = pneg %p45
        %p423 = scmp.lt.s32.totalorder %s27, 1
        %s424 = scalar_select %p423, %s27, 1
        %s425 = smul.addr %s424, 5
        %s426 = sadd.s32 1, %s425
        %s427 = smul.addr %s426, 8
        %s428 = scalar_lea.vmem %s1, %s427
        %p429 = pneg %p74
        %p430 = pneg %p71
        %p431 = scmp.lt.s32.totalorder %s27, 1
        %s432 = scalar_select %p431, %s27, 1
        %s433 = smul.addr %s432, 5
        %s434 = sadd.s32 4, %s433
        %s435 = smul.addr %s434, 8
        %s436 = scalar_lea.vmem %s2, %s435
        %p437 = pneg %p100
        %p438 = pneg %p97
        %p439 = pneg %p121
        %p440 = pneg %p118
        %p441 = pneg %p142
        %p442 = pneg %p139
        %p443 = pneg %p163
        %p444 = pneg %p160
        %p445 = pneg %p184
        %p446 = pneg %p181
        %p447 = pneg %p205
        %p448 = pneg %p202
        %p449 = pneg %p226
        %p450 = pneg %p223
        %p451 = pneg %p247
        %p452 = pneg %p244
        %p453 = pneg %p268
        %p454 = pneg %p265
        %p455 = pneg %p289
        %p456 = pneg %p286
        %p457 = pneg %p310
        %p458 = pneg %p307
        %p459 = pneg %p336
        %p460 = pneg %p333
        %s461 = sand.u32 %s323, 1
        %s462 = scalar_lea.sflag [#allocation3], %s461
        %s463 = sand.u32 %s323, 1
        %s464 = smul.addr %s463, 8
        %s465 = scalar_lea.vmem [#allocation2], %s464
        %p466 = scmp.lt.s32.totalorder %s27, 1
        %s467 = scalar_select %p466, %s27, 1
        %s468 = smul.addr %s467, 8
        %s469 = scalar_lea.vmem %s0, %s468
        %p470 = scmp.lt.s32.totalorder %s27, 1
        %s471 = scalar_select %p470, %s27, 1
        %s472 = smul.addr %s471, 5
        %s473 = sadd.s32 1, %s472
        %s474 = smul.addr %s473, 8
        %s475 = scalar_lea.vmem %s1, %s474
        %p476 = scmp.lt.s32.totalorder %s27, 1
        %s477 = scalar_select %p476, %s27, 1
        %s478 = smul.addr %s477, 5
        %s479 = sadd.s32 4, %s478
        %s480 = smul.addr %s479, 8
        %s481 = scalar_lea.vmem %s2, %s480
        %v482 = vld [vmem:[%s469] sm:$0xff]
        %v483 = vld [vmem:[%s475] sm:$0xff]
        %v484 = vld [vmem:[%s481] sm:$0xff]
        %v485 = vld [vmem:[%s3] sm:$0xff]
        %v486 = vld [vmem:[%s3 + $0x8] sm:$0xff]
        %v487 = vld [vmem:[%s3 + $0x10] sm:$0xff]
        %v488 = vld [vmem:[%s3 + $0x18] sm:$0xff]
        %vm489 = vcmask 261120
        %v491 = vsel %vm489, %v482, 0
        %493 = vmatprep.subr.mxu0 0.0
        %494 = vmatpush1.msra.mxu0 0.0
        %495 = vmatprep.subr.mxu0 0.0
        %496 = vmatpush1.msra.mxu0 0.0
        %497 = vmatprep.subr.mxu0 0.0
        %498 = vmatpush1.msra.mxu0 0.0
        %499 = vmatprep.subr.mxu0 0.0
        %500 = vmatpush1.msra.mxu0 0.0
        %501 = vmatprep.subr.mxu0 0.0
        %502 = vmatpush1.msra.mxu0 0.0
        %503 = vmatprep.subr.mxu0 0.0
        %504 = vmatpush1.msra.mxu0 0.0
        %505 = vmatprep.subr.mxu0 0.0
        %506 = vmatpush1.msra.mxu0 0.0
        %507 = vmatprep.subr.mxu0 0.0
        %508 = vmatpush1.msra.mxu0 0.0
        %509 = vmatprep.subr.mxu0 0.0
        %510 = vmatpush1.msra.mxu0 0.0
        %511 = vmatprep.subr.mxu0 0.0
        %512 = vmatpush1.msra.mxu0 0.0
        %513 = vmatprep.subr.mxu0 0.0
        %514 = vmatpush1.msra.mxu0 0.0
        %515 = vmatprep.subr.mxu0 0.0
        %516 = vmatpush1.msra.mxu0 0.0
        %517 = vmatprep.subr.mxu0 0.0
        %v518 = vand.u32 %v488, 4294901760
        %519 = vmatpush1.msra.mxu0 %v518
        %520 = vmatprep.subr.mxu0 0.0
        %v521 = vand.u32 %v487, 4294901760
        %522 = vmatpush1.msra.mxu0 %v521
        %523 = vmatprep.subr.mxu0 0.0
        %v524 = vand.u32 %v486, 4294901760
        %525 = vmatpush1.msra.mxu0 %v524
        %526 = vmatprep.subr.mxu0 0.0
        %v527 = vand.u32 %v485, 4294901760
        %528 = vmatpush1.msra.mxu0 %v527
        %529 = vmatprep.subr.mxu0 0.0
        %530 = vmatpush2.msra.mxu0 0.0
        %531 = vmatprep.subr.mxu0 0.0
        %532 = vmatpush2.msra.mxu0 0.0
        %533 = vmatprep.subr.mxu0 0.0
        %534 = vmatpush2.msra.mxu0 0.0
        %535 = vmatprep.subr.mxu0 0.0
        %536 = vmatpush2.msra.mxu0 0.0
        %537 = vmatprep.subr.mxu0 0.0
        %538 = vmatpush2.msra.mxu0 0.0
        %539 = vmatprep.subr.mxu0 0.0
        %540 = vmatpush2.msra.mxu0 0.0
        %541 = vmatprep.subr.mxu0 0.0
        %542 = vmatpush2.msra.mxu0 0.0
        %543 = vmatprep.subr.mxu0 0.0
        %544 = vmatpush2.msra.mxu0 0.0
        %545 = vmatprep.subr.mxu0 0.0
        %546 = vmatpush2.msra.mxu0 0.0
        %547 = vmatprep.subr.mxu0 0.0
        %548 = vmatpush2.msra.mxu0 0.0
        %549 = vmatprep.subr.mxu0 0.0
        %550 = vmatpush2.msra.mxu0 0.0
        %551 = vmatprep.subr.mxu0 0.0
        %552 = vmatpush2.msra.mxu0 0.0
        %553 = vmatprep.subr.mxu0 0.0
        %554 = vmatpush2.msra.mxu0 0.0
        %555 = vmatprep.subr.mxu0 0.0
        %556 = vmatpush2.msra.mxu0 0.0
        %557 = vmatprep.subr.mxu0 0.0
        %558 = vmatpush2.msra.mxu0 0.0
        %559 = vmatprep.subr.mxu0 0.0
        %560 = vmatpush2.msra.mxu0 0.0
        %561 = vmatprep.mubr.f32.mxu0 0.0
        %v562 = vand.u32 %v491, 4294901760
        %v563 = vsub.f32 %v491, %v562
        %v564 = vand.u32 %v563, 4294901760
        %v565 = vsub.f32 %v563, %v564
        %v566 = vand.u32 %v565, 4294901760
        %567 = vmatmul.mubr.f32.gmra.mxu0 %v566
        %v568 = vpop.f32.mrf.mxu0
        %v569 = vadd.f32 0.0, %v568
        %v570 = vpop.f32.mrf.mxu0
        %571 = vdwg.mxu0
        %572 = vmatprep.subr.mxu0 0.0
        %573 = vmatpush1.msra.mxu0 0.0
        %574 = vmatprep.subr.mxu0 0.0
        %575 = vmatpush1.msra.mxu0 0.0
        %576 = vmatprep.subr.mxu0 0.0
        %577 = vmatpush1.msra.mxu0 0.0
        %578 = vmatprep.subr.mxu0 0.0
        %579 = vmatpush1.msra.mxu0 0.0
        %580 = vmatprep.subr.mxu0 0.0
        %581 = vmatpush1.msra.mxu0 0.0
        %582 = vmatprep.subr.mxu0 0.0
        %583 = vmatpush1.msra.mxu0 0.0
        %584 = vmatprep.subr.mxu0 0.0
        %585 = vmatpush1.msra.mxu0 0.0
        %586 = vmatprep.subr.mxu0 0.0
        %587 = vmatpush1.msra.mxu0 0.0
        %588 = vmatprep.subr.mxu0 0.0
        %589 = vmatpush1.msra.mxu0 0.0
        %590 = vmatprep.subr.mxu0 0.0
        %591 = vmatpush1.msra.mxu0 0.0
        %592 = vmatprep.subr.mxu0 0.0
        %593 = vmatpush1.msra.mxu0 0.0
        %594 = vmatprep.subr.mxu0 0.0
        %595 = vmatpush1.msra.mxu0 0.0
        %596 = vmatprep.subr.mxu0 0.0
        %v597 = vand.u32 %v488, 4294901760
        %v598 = vsub.f32 %v488, %v597
        %v599 = vand.u32 %v598, 4294901760
        %v600 = vsub.f32 %v598, %v599
        %v601 = vand.u32 %v600, 4294901760
        %602 = vmatpush1.msra.mxu0 %v601
        %603 = vmatprep.subr.mxu0 0.0
        %v604 = vand.u32 %v487, 4294901760
        %v605 = vsub.f32 %v487, %v604
        %v606 = vand.u32 %v605, 4294901760
        %v607 = vsub.f32 %v605, %v606
        %v608 = vand.u32 %v607, 4294901760
        %609 = vmatpush1.msra.mxu0 %v608
        %610 = vmatprep.subr.mxu0 0.0
        %v611 = vand.u32 %v486, 4294901760
        %v612 = vsub.f32 %v486, %v611
        %v613 = vand.u32 %v612, 4294901760
        %v614 = vsub.f32 %v612, %v613
        %v615 = vand.u32 %v614, 4294901760
        %616 = vmatpush1.msra.mxu0 %v615
        %617 = vmatprep.subr.mxu0 0.0
        %v618 = vand.u32 %v485, 4294901760
        %v619 = vsub.f32 %v485, %v618
        %v620 = vand.u32 %v619, 4294901760
        %v621 = vsub.f32 %v619, %v620
        %v622 = vand.u32 %v621, 4294901760
        %623 = vmatpush1.msra.mxu0 %v622
        %624 = vmatprep.subr.mxu0 0.0
        %625 = vmatpush2.msra.mxu0 0.0
        %626 = vmatprep.subr.mxu0 0.0
        %627 = vmatpush2.msra.mxu0 0.0
        %628 = vmatprep.subr.mxu0 0.0
        %629 = vmatpush2.msra.mxu0 0.0
        %630 = vmatprep.subr.mxu0 0.0
        %631 = vmatpush2.msra.mxu0 0.0
        %632 = vmatprep.subr.mxu0 0.0
        %633 = vmatpush2.msra.mxu0 0.0
        %634 = vmatprep.subr.mxu0 0.0
        %635 = vmatpush2.msra.mxu0 0.0
        %636 = vmatprep.subr.mxu0 0.0
        %637 = vmatpush2.msra.mxu0 0.0
        %638 = vmatprep.subr.mxu0 0.0
        %639 = vmatpush2.msra.mxu0 0.0
        %640 = vmatprep.subr.mxu0 0.0
        %641 = vmatpush2.msra.mxu0 0.0
        %642 = vmatprep.subr.mxu0 0.0
        %643 = vmatpush2.msra.mxu0 0.0
        %644 = vmatprep.subr.mxu0 0.0
        %645 = vmatpush2.msra.mxu0 0.0
        %646 = vmatprep.subr.mxu0 0.0
        %647 = vmatpush2.msra.mxu0 0.0
        %648 = vmatprep.subr.mxu0 0.0
        %649 = vmatpush2.msra.mxu0 0.0
        %650 = vmatprep.subr.mxu0 0.0
        %651 = vmatpush2.msra.mxu0 0.0
        %652 = vmatprep.subr.mxu0 0.0
        %653 = vmatpush2.msra.mxu0 0.0
        %654 = vmatprep.subr.mxu0 0.0
        %655 = vmatpush2.msra.mxu0 0.0
        %656 = vmatprep.mubr.f32.mxu0 0.0
        %v657 = vand.u32 %v491, 4294901760
        %658 = vmatmul.mubr.f32.gmra.mxu0 %v657
        %v659 = vpop.f32.mrf.mxu0
        %v660 = vadd.f32 %v569, %v659
        %v661 = vpop.f32.mrf.mxu0
        %662 = vdwg.mxu0
        %663 = vmatprep.subr.mxu0 0.0
        %664 = vmatpush1.msra.mxu0 0.0
        %665 = vmatprep.subr.mxu0 0.0
        %666 = vmatpush1.msra.mxu0 0.0
        %667 = vmatprep.subr.mxu0 0.0
        %668 = vmatpush1.msra.mxu0 0.0
        %669 = vmatprep.subr.mxu0 0.0
        %670 = vmatpush1.msra.mxu0 0.0
        %671 = vmatprep.subr.mxu0 0.0
        %672 = vmatpush1.msra.mxu0 0.0
        %673 = vmatprep.subr.mxu0 0.0
        %674 = vmatpush1.msra.mxu0 0.0
        %675 = vmatprep.subr.mxu0 0.0
        %676 = vmatpush1.msra.mxu0 0.0
        %677 = vmatprep.subr.mxu0 0.0
        %678 = vmatpush1.msra.mxu0 0.0
        %679 = vmatprep.subr.mxu0 0.0
        %680 = vmatpush1.msra.mxu0 0.0
        %681 = vmatprep.subr.mxu0 0.0
        %682 = vmatpush1.msra.mxu0 0.0
        %683 = vmatprep.subr.mxu0 0.0
        %684 = vmatpush1.msra.mxu0 0.0
        %685 = vmatprep.subr.mxu0 0.0
        %686 = vmatpush1.msra.mxu0 0.0
        %687 = vmatprep.subr.mxu0 0.0
        %v688 = vand.u32 %v488, 4294901760
        %v689 = vsub.f32 %v488, %v688
        %690 = vmatpush1.msra.mxu0 %v689
        %691 = vmatprep.subr.mxu0 0.0
        %v692 = vand.u32 %v487, 4294901760
        %v693 = vsub.f32 %v487, %v692
        %694 = vmatpush1.msra.mxu0 %v693
        %695 = vmatprep.subr.mxu0 0.0
        %v696 = vand.u32 %v486, 4294901760
        %v697 = vsub.f32 %v486, %v696
        %698 = vmatpush1.msra.mxu0 %v697
        %699 = vmatprep.subr.mxu0 0.0
        %v700 = vand.u32 %v485, 4294901760
        %v701 = vsub.f32 %v485, %v700
        %702 = vmatpush1.msra.mxu0 %v701
        %703 = vmatprep.subr.mxu0 0.0
        %704 = vmatpush2.msra.mxu0 0.0
        %705 = vmatprep.subr.mxu0 0.0
        %706 = vmatpush2.msra.mxu0 0.0
        %707 = vmatprep.subr.mxu0 0.0
        %708 = vmatpush2.msra.mxu0 0.0
        %709 = vmatprep.subr.mxu0 0.0
        %710 = vmatpush2.msra.mxu0 0.0
        %711 = vmatprep.subr.mxu0 0.0
        %712 = vmatpush2.msra.mxu0 0.0
        %713 = vmatprep.subr.mxu0 0.0
        %714 = vmatpush2.msra.mxu0 0.0
        %715 = vmatprep.subr.mxu0 0.0
        %716 = vmatpush2.msra.mxu0 0.0
        %717 = vmatprep.subr.mxu0 0.0
        %718 = vmatpush2.msra.mxu0 0.0
        %719 = vmatprep.subr.mxu0 0.0
        %720 = vmatpush2.msra.mxu0 0.0
        %721 = vmatprep.subr.mxu0 0.0
        %722 = vmatpush2.msra.mxu0 0.0
        %723 = vmatprep.subr.mxu0 0.0
        %724 = vmatpush2.msra.mxu0 0.0
        %725 = vmatprep.subr.mxu0 0.0
        %726 = vmatpush2.msra.mxu0 0.0
        %727 = vmatprep.subr.mxu0 0.0
        %728 = vmatpush2.msra.mxu0 0.0
        %729 = vmatprep.subr.mxu0 0.0
        %730 = vmatpush2.msra.mxu0 0.0
        %731 = vmatprep.subr.mxu0 0.0
        %732 = vmatpush2.msra.mxu0 0.0
        %733 = vmatprep.subr.mxu0 0.0
        %734 = vmatpush2.msra.mxu0 0.0
        %735 = vmatprep.mubr.f32.mxu0 0.0
        %v736 = vand.u32 %v491, 4294901760
        %v737 = vsub.f32 %v491, %v736
        %738 = vmatmul.mubr.f32.gmra.mxu0 %v737
        %v739 = vpop.f32.mrf.mxu0
        %v740 = vadd.f32 %v660, %v739
        %v741 = vpop.f32.mrf.mxu0
        %742 = vdwg.mxu0
        %743 = vmatprep.subr.mxu0 0.0
        %744 = vmatpush1.msra.mxu0 0.0
        %745 = vmatprep.subr.mxu0 0.0
        %746 = vmatpush1.msra.mxu0 0.0
        %747 = vmatprep.subr.mxu0 0.0
        %748 = vmatpush1.msra.mxu0 0.0
        %749 = vmatprep.subr.mxu0 0.0
        %750 = vmatpush1.msra.mxu0 0.0
        %751 = vmatprep.subr.mxu0 0.0
        %752 = vmatpush1.msra.mxu0 0.0
        %753 = vmatprep.subr.mxu0 0.0
        %754 = vmatpush1.msra.mxu0 0.0
        %755 = vmatprep.subr.mxu0 0.0
        %756 = vmatpush1.msra.mxu0 0.0
        %757 = vmatprep.subr.mxu0 0.0
        %758 = vmatpush1.msra.mxu0 0.0
        %759 = vmatprep.subr.mxu0 0.0
        %760 = vmatpush1.msra.mxu0 0.0
        %761 = vmatprep.subr.mxu0 0.0
        %762 = vmatpush1.msra.mxu0 0.0
        %763 = vmatprep.subr.mxu0 0.0
        %764 = vmatpush1.msra.mxu0 0.0
        %765 = vmatprep.subr.mxu0 0.0
        %766 = vmatpush1.msra.mxu0 0.0
        %767 = vmatprep.subr.mxu0 0.0
        %v768 = vand.u32 %v488, 4294901760
        %769 = vmatpush1.msra.mxu0 %v768
        %770 = vmatprep.subr.mxu0 0.0
        %v771 = vand.u32 %v487, 4294901760
        %772 = vmatpush1.msra.mxu0 %v771
        %773 = vmatprep.subr.mxu0 0.0
        %v774 = vand.u32 %v486, 4294901760
        %775 = vmatpush1.msra.mxu0 %v774
        %776 = vmatprep.subr.mxu0 0.0
        %v777 = vand.u32 %v485, 4294901760
        %778 = vmatpush1.msra.mxu0 %v777
        %779 = vmatprep.subr.mxu0 0.0
        %780 = vmatpush2.msra.mxu0 0.0
        %781 = vmatprep.subr.mxu0 0.0
        %782 = vmatpush2.msra.mxu0 0.0
        %783 = vmatprep.subr.mxu0 0.0
        %784 = vmatpush2.msra.mxu0 0.0
        %785 = vmatprep.subr.mxu0 0.0
        %786 = vmatpush2.msra.mxu0 0.0
        %787 = vmatprep.subr.mxu0 0.0
        %788 = vmatpush2.msra.mxu0 0.0
        %789 = vmatprep.subr.mxu0 0.0
        %790 = vmatpush2.msra.mxu0 0.0
        %791 = vmatprep.subr.mxu0 0.0
        %792 = vmatpush2.msra.mxu0 0.0
        %793 = vmatprep.subr.mxu0 0.0
        %794 = vmatpush2.msra.mxu0 0.0
        %795 = vmatprep.subr.mxu0 0.0
        %796 = vmatpush2.msra.mxu0 0.0
        %797 = vmatprep.subr.mxu0 0.0
        %798 = vmatpush2.msra.mxu0 0.0
        %799 = vmatprep.subr.mxu0 0.0
        %800 = vmatpush2.msra.mxu0 0.0
        %801 = vmatprep.subr.mxu0 0.0
        %802 = vmatpush2.msra.mxu0 0.0
        %803 = vmatprep.subr.mxu0 0.0
        %804 = vmatpush2.msra.mxu0 0.0
        %805 = vmatprep.subr.mxu0 0.0
        %806 = vmatpush2.msra.mxu0 0.0
        %807 = vmatprep.subr.mxu0 0.0
        %808 = vmatpush2.msra.mxu0 0.0
        %809 = vmatprep.subr.mxu0 0.0
        %810 = vmatpush2.msra.mxu0 0.0
        %811 = vmatprep.mubr.f32.mxu0 0.0
        %v812 = vand.u32 %v491, 4294901760
        %v813 = vsub.f32 %v491, %v812
        %v814 = vand.u32 %v813, 4294901760
        %815 = vmatmul.mubr.f32.gmra.mxu0 %v814
        %v816 = vpop.f32.mrf.mxu0
        %v817 = vadd.f32 %v740, %v816
        %v818 = vpop.f32.mrf.mxu0
        %819 = vdwg.mxu0
        %820 = vmatprep.subr.mxu0 0.0
        %821 = vmatpush1.msra.mxu0 0.0
        %822 = vmatprep.subr.mxu0 0.0
        %823 = vmatpush1.msra.mxu0 0.0
        %824 = vmatprep.subr.mxu0 0.0
        %825 = vmatpush1.msra.mxu0 0.0
        %826 = vmatprep.subr.mxu0 0.0
        %827 = vmatpush1.msra.mxu0 0.0
        %828 = vmatprep.subr.mxu0 0.0
        %829 = vmatpush1.msra.mxu0 0.0
        %830 = vmatprep.subr.mxu0 0.0
        %831 = vmatpush1.msra.mxu0 0.0
        %832 = vmatprep.subr.mxu0 0.0
        %833 = vmatpush1.msra.mxu0 0.0
        %834 = vmatprep.subr.mxu0 0.0
        %835 = vmatpush1.msra.mxu0 0.0
        %836 = vmatprep.subr.mxu0 0.0
        %837 = vmatpush1.msra.mxu0 0.0
        %838 = vmatprep.subr.mxu0 0.0
        %839 = vmatpush1.msra.mxu0 0.0
        %840 = vmatprep.subr.mxu0 0.0
        %841 = vmatpush1.msra.mxu0 0.0
        %842 = vmatprep.subr.mxu0 0.0
        %843 = vmatpush1.msra.mxu0 0.0
        %844 = vmatprep.subr.mxu0 0.0
        %v845 = vand.u32 %v488, 4294901760
        %v846 = vsub.f32 %v488, %v845
        %v847 = vand.u32 %v846, 4294901760
        %848 = vmatpush1.msra.mxu0 %v847
        %849 = vmatprep.subr.mxu0 0.0
        %v850 = vand.u32 %v487, 4294901760
        %v851 = vsub.f32 %v487, %v850
        %v852 = vand.u32 %v851, 4294901760
        %853 = vmatpush1.msra.mxu0 %v852
        %854 = vmatprep.subr.mxu0 0.0
        %v855 = vand.u32 %v486, 4294901760
        %v856 = vsub.f32 %v486, %v855
        %v857 = vand.u32 %v856, 4294901760
        %858 = vmatpush1.msra.mxu0 %v857
        %859 = vmatprep.subr.mxu0 0.0
        %v860 = vand.u32 %v485, 4294901760
        %v861 = vsub.f32 %v485, %v860
        %v862 = vand.u32 %v861, 4294901760
        %863 = vmatpush1.msra.mxu0 %v862
        %864 = vmatprep.subr.mxu0 0.0
        %865 = vmatpush2.msra.mxu0 0.0
        %866 = vmatprep.subr.mxu0 0.0
        %867 = vmatpush2.msra.mxu0 0.0
        %868 = vmatprep.subr.mxu0 0.0
        %869 = vmatpush2.msra.mxu0 0.0
        %870 = vmatprep.subr.mxu0 0.0
        %871 = vmatpush2.msra.mxu0 0.0
        %872 = vmatprep.subr.mxu0 0.0
        %873 = vmatpush2.msra.mxu0 0.0
        %874 = vmatprep.subr.mxu0 0.0
        %875 = vmatpush2.msra.mxu0 0.0
        %876 = vmatprep.subr.mxu0 0.0
        %877 = vmatpush2.msra.mxu0 0.0
        %878 = vmatprep.subr.mxu0 0.0
        %879 = vmatpush2.msra.mxu0 0.0
        %880 = vmatprep.subr.mxu0 0.0
        %881 = vmatpush2.msra.mxu0 0.0
        %882 = vmatprep.subr.mxu0 0.0
        %883 = vmatpush2.msra.mxu0 0.0
        %884 = vmatprep.subr.mxu0 0.0
        %885 = vmatpush2.msra.mxu0 0.0
        %886 = vmatprep.subr.mxu0 0.0
        %887 = vmatpush2.msra.mxu0 0.0
        %888 = vmatprep.subr.mxu0 0.0
        %889 = vmatpush2.msra.mxu0 0.0
        %890 = vmatprep.subr.mxu0 0.0
        %891 = vmatpush2.msra.mxu0 0.0
        %892 = vmatprep.subr.mxu0 0.0
        %893 = vmatpush2.msra.mxu0 0.0
        %894 = vmatprep.subr.mxu0 0.0
        %895 = vmatpush2.msra.mxu0 0.0
        %896 = vmatprep.mubr.f32.mxu0 0.0
        %v897 = vand.u32 %v491, 4294901760
        %898 = vmatmul.mubr.f32.gmra.mxu0 %v897
        %v899 = vpop.f32.mrf.mxu0
        %v900 = vadd.f32 %v817, %v899
        %v901 = vpop.f32.mrf.mxu0
        %902 = vdwg.mxu0
        %903 = vmatprep.subr.mxu0 0.0
        %904 = vmatpush1.msra.mxu0 0.0
        %905 = vmatprep.subr.mxu0 0.0
        %906 = vmatpush1.msra.mxu0 0.0
        %907 = vmatprep.subr.mxu0 0.0
        %908 = vmatpush1.msra.mxu0 0.0
        %909 = vmatprep.subr.mxu0 0.0
        %910 = vmatpush1.msra.mxu0 0.0
        %911 = vmatprep.subr.mxu0 0.0
        %912 = vmatpush1.msra.mxu0 0.0
        %913 = vmatprep.subr.mxu0 0.0
        %914 = vmatpush1.msra.mxu0 0.0
        %915 = vmatprep.subr.mxu0 0.0
        %916 = vmatpush1.msra.mxu0 0.0
        %917 = vmatprep.subr.mxu0 0.0
        %918 = vmatpush1.msra.mxu0 0.0
        %919 = vmatprep.subr.mxu0 0.0
        %920 = vmatpush1.msra.mxu0 0.0
        %921 = vmatprep.subr.mxu0 0.0
        %922 = vmatpush1.msra.mxu0 0.0
        %923 = vmatprep.subr.mxu0 0.0
        %924 = vmatpush1.msra.mxu0 0.0
        %925 = vmatprep.subr.mxu0 0.0
        %926 = vmatpush1.msra.mxu0 0.0
        %927 = vmatprep.subr.mxu0 0.0
        %v928 = vand.u32 %v488, 4294901760
        %929 = vmatpush1.msra.mxu0 %v928
        %930 = vmatprep.subr.mxu0 0.0
        %v931 = vand.u32 %v487, 4294901760
        %932 = vmatpush1.msra.mxu0 %v931
        %933 = vmatprep.subr.mxu0 0.0
        %v934 = vand.u32 %v486, 4294901760
        %935 = vmatpush1.msra.mxu0 %v934
        %936 = vmatprep.subr.mxu0 0.0
        %v937 = vand.u32 %v485, 4294901760
        %938 = vmatpush1.msra.mxu0 %v937
        %939 = vmatprep.subr.mxu0 0.0
        %940 = vmatpush2.msra.mxu0 0.0
        %941 = vmatprep.subr.mxu0 0.0
        %942 = vmatpush2.msra.mxu0 0.0
        %943 = vmatprep.subr.mxu0 0.0
        %944 = vmatpush2.msra.mxu0 0.0
        %945 = vmatprep.subr.mxu0 0.0
        %946 = vmatpush2.msra.mxu0 0.0
        %947 = vmatprep.subr.mxu0 0.0
        %948 = vmatpush2.msra.mxu0 0.0
        %949 = vmatprep.subr.mxu0 0.0
        %950 = vmatpush2.msra.mxu0 0.0
        %951 = vmatprep.subr.mxu0 0.0
        %952 = vmatpush2.msra.mxu0 0.0
        %953 = vmatprep.subr.mxu0 0.0
        %954 = vmatpush2.msra.mxu0 0.0
        %955 = vmatprep.subr.mxu0 0.0
        %956 = vmatpush2.msra.mxu0 0.0
        %957 = vmatprep.subr.mxu0 0.0
        %958 = vmatpush2.msra.mxu0 0.0
        %959 = vmatprep.subr.mxu0 0.0
        %960 = vmatpush2.msra.mxu0 0.0
        %961 = vmatprep.subr.mxu0 0.0
        %962 = vmatpush2.msra.mxu0 0.0
        %963 = vmatprep.subr.mxu0 0.0
        %964 = vmatpush2.msra.mxu0 0.0
        %965 = vmatprep.subr.mxu0 0.0
        %966 = vmatpush2.msra.mxu0 0.0
        %967 = vmatprep.subr.mxu0 0.0
        %968 = vmatpush2.msra.mxu0 0.0
        %969 = vmatprep.subr.mxu0 0.0
        %970 = vmatpush2.msra.mxu0 0.0
        %971 = vmatprep.mubr.f32.mxu0 0.0
        %v972 = vand.u32 %v491, 4294901760
        %973 = vmatmul.mubr.f32.gmra.mxu0 %v972
        %v974 = vpop.f32.mrf.mxu0
        %v975 = vadd.f32 %v900, %v974
        %v976 = vpop.f32.mrf.mxu0
        %977 = vdwg.mxu0
        %vm978 = vcmask 64512
        %v980 = vsel %vm978, %v483, 0
        %982 = vmatprep.subr.mxu0 0.0
        %983 = vmatpush1.msra.mxu0 0.0
        %984 = vmatprep.subr.mxu0 0.0
        %985 = vmatpush1.msra.mxu0 0.0
        %986 = vmatprep.subr.mxu0 0.0
        %987 = vmatpush1.msra.mxu0 0.0
        %988 = vmatprep.subr.mxu0 0.0
        %989 = vmatpush1.msra.mxu0 0.0
        %990 = vmatprep.subr.mxu0 0.0
        %991 = vmatpush1.msra.mxu0 0.0
        %992 = vmatprep.subr.mxu0 0.0
        %993 = vmatpush1.msra.mxu0 0.0
        %994 = vmatprep.subr.mxu0 0.0
        %995 = vmatpush1.msra.mxu0 0.0
        %996 = vmatprep.subr.mxu0 0.0
        %997 = vmatpush1.msra.mxu0 0.0
        %998 = vmatprep.subr.mxu0 0.0
        %999 = vmatpush1.msra.mxu0 0.0
        %1000 = vmatprep.subr.mxu0 0.0
        %1001 = vmatpush1.msra.mxu0 0.0
        %1002 = vmatprep.subr.mxu0 0.0
        %1003 = vmatpush1.msra.mxu0 0.0
        %1004 = vmatprep.subr.mxu0 0.0
        %1005 = vmatpush1.msra.mxu0 0.0
        %1006 = vmatprep.subr.mxu0 0.0
        %1007 = vmatpush1.msra.mxu0 0.0
        %1008 = vmatprep.subr.mxu0 0.0
        %1009 = vmatpush1.msra.mxu0 0.0
        %1010 = vmatprep.subr.mxu0 0.0
        %1011 = vmatpush1.msra.mxu0 0.0
        %1012 = vmatprep.subr.mxu0 0.0
        %v1013 = vand.u32 %v975, 4294901760
        %1014 = vmatpush1.msra.mxu0 %v1013
        %1015 = vmatprep.subr.mxu0 0.0
        %1016 = vmatpush2.msra.mxu0 0.0
        %1017 = vmatprep.subr.mxu0 0.0
        %1018 = vmatpush2.msra.mxu0 0.0
        %1019 = vmatprep.subr.mxu0 0.0
        %1020 = vmatpush2.msra.mxu0 0.0
        %1021 = vmatprep.subr.mxu0 0.0
        %1022 = vmatpush2.msra.mxu0 0.0
        %1023 = vmatprep.subr.mxu0 0.0
        %1024 = vmatpush2.msra.mxu0 0.0
        %1025 = vmatprep.subr.mxu0 0.0
        %1026 = vmatpush2.msra.mxu0 0.0
        %1027 = vmatprep.subr.mxu0 0.0
        %1028 = vmatpush2.msra.mxu0 0.0
        %1029 = vmatprep.subr.mxu0 0.0
        %1030 = vmatpush2.msra.mxu0 0.0
        %1031 = vmatprep.subr.mxu0 0.0
        %1032 = vmatpush2.msra.mxu0 0.0
        %1033 = vmatprep.subr.mxu0 0.0
        %1034 = vmatpush2.msra.mxu0 0.0
        %1035 = vmatprep.subr.mxu0 0.0
        %1036 = vmatpush2.msra.mxu0 0.0
        %1037 = vmatprep.subr.mxu0 0.0
        %1038 = vmatpush2.msra.mxu0 0.0
        %1039 = vmatprep.subr.mxu0 0.0
        %1040 = vmatpush2.msra.mxu0 0.0
        %1041 = vmatprep.subr.mxu0 0.0
        %1042 = vmatpush2.msra.mxu0 0.0
        %1043 = vmatprep.subr.mxu0 0.0
        %1044 = vmatpush2.msra.mxu0 0.0
        %1045 = vmatprep.subr.mxu0 0.0
        %1046 = vmatpush2.msra.mxu0 0.0
        %1047 = vmatprep.mubr.f32.mxu0 0.0
        %v1048 = vand.u32 %v980, 4294901760
        %v1049 = vsub.f32 %v980, %v1048
        %v1050 = vand.u32 %v1049, 4294901760
        %v1051 = vsub.f32 %v1049, %v1050
        %v1052 = vand.u32 %v1051, 4294901760
        %1053 = vmatmul.mubr.f32.gmra.mxu0 %v1052
        %v1054 = vpop.f32.mrf.mxu0
        %v1055 = vadd.f32 0.0, %v1054
        %v1056 = vpop.f32.mrf.mxu0
        %1057 = vdwg.mxu0
        %1058 = vmatprep.subr.mxu0 0.0
        %1059 = vmatpush1.msra.mxu0 0.0
        %1060 = vmatprep.subr.mxu0 0.0
        %1061 = vmatpush1.msra.mxu0 0.0
        %1062 = vmatprep.subr.mxu0 0.0
        %1063 = vmatpush1.msra.mxu0 0.0
        %1064 = vmatprep.subr.mxu0 0.0
        %1065 = vmatpush1.msra.mxu0 0.0
        %1066 = vmatprep.subr.mxu0 0.0
        %1067 = vmatpush1.msra.mxu0 0.0
        %1068 = vmatprep.subr.mxu0 0.0
        %1069 = vmatpush1.msra.mxu0 0.0
        %1070 = vmatprep.subr.mxu0 0.0
        %1071 = vmatpush1.msra.mxu0 0.0
        %1072 = vmatprep.subr.mxu0 0.0
        %1073 = vmatpush1.msra.mxu0 0.0
        %1074 = vmatprep.subr.mxu0 0.0
        %1075 = vmatpush1.msra.mxu0 0.0
        %1076 = vmatprep.subr.mxu0 0.0
        %1077 = vmatpush1.msra.mxu0 0.0
        %1078 = vmatprep.subr.mxu0 0.0
        %1079 = vmatpush1.msra.mxu0 0.0
        %1080 = vmatprep.subr.mxu0 0.0
        %1081 = vmatpush1.msra.mxu0 0.0
        %1082 = vmatprep.subr.mxu0 0.0
        %1083 = vmatpush1.msra.mxu0 0.0
        %1084 = vmatprep.subr.mxu0 0.0
        %1085 = vmatpush1.msra.mxu0 0.0
        %1086 = vmatprep.subr.mxu0 0.0
        %1087 = vmatpush1.msra.mxu0 0.0
        %1088 = vmatprep.subr.mxu0 0.0
        %v1089 = vand.u32 %v975, 4294901760
        %v1090 = vsub.f32 %v975, %v1089
        %v1091 = vand.u32 %v1090, 4294901760
        %v1092 = vsub.f32 %v1090, %v1091
        %v1093 = vand.u32 %v1092, 4294901760
        %1094 = vmatpush1.msra.mxu0 %v1093
        %1095 = vmatprep.subr.mxu0 0.0
        %1096 = vmatpush2.msra.mxu0 0.0
        %1097 = vmatprep.subr.mxu0 0.0
        %1098 = vmatpush2.msra.mxu0 0.0
        %1099 = vmatprep.subr.mxu0 0.0
        %1100 = vmatpush2.msra.mxu0 0.0
        %1101 = vmatprep.subr.mxu0 0.0
        %1102 = vmatpush2.msra.mxu0 0.0
        %1103 = vmatprep.subr.mxu0 0.0
        %1104 = vmatpush2.msra.mxu0 0.0
        %1105 = vmatprep.subr.mxu0 0.0
        %1106 = vmatpush2.msra.mxu0 0.0
        %1107 = vmatprep.subr.mxu0 0.0
        %1108 = vmatpush2.msra.mxu0 0.0
        %1109 = vmatprep.subr.mxu0 0.0
        %1110 = vmatpush2.msra.mxu0 0.0
        %1111 = vmatprep.subr.mxu0 0.0
        %1112 = vmatpush2.msra.mxu0 0.0
        %1113 = vmatprep.subr.mxu0 0.0
        %1114 = vmatpush2.msra.mxu0 0.0
        %1115 = vmatprep.subr.mxu0 0.0
        %1116 = vmatpush2.msra.mxu0 0.0
        %1117 = vmatprep.subr.mxu0 0.0
        %1118 = vmatpush2.msra.mxu0 0.0
        %1119 = vmatprep.subr.mxu0 0.0
        %1120 = vmatpush2.msra.mxu0 0.0
        %1121 = vmatprep.subr.mxu0 0.0
        %1122 = vmatpush2.msra.mxu0 0.0
        %1123 = vmatprep.subr.mxu0 0.0
        %1124 = vmatpush2.msra.mxu0 0.0
        %1125 = vmatprep.subr.mxu0 0.0
        %1126 = vmatpush2.msra.mxu0 0.0
        %1127 = vmatprep.mubr.f32.mxu0 0.0
        %v1128 = vand.u32 %v980, 4294901760
        %1129 = vmatmul.mubr.f32.gmra.mxu0 %v1128
        %v1130 = vpop.f32.mrf.mxu0
        %v1131 = vadd.f32 %v1055, %v1130
        %v1132 = vpop.f32.mrf.mxu0
        %1133 = vdwg.mxu0
        %1134 = vmatprep.subr.mxu0 0.0
        %1135 = vmatpush1.msra.mxu0 0.0
        %1136 = vmatprep.subr.mxu0 0.0
        %1137 = vmatpush1.msra.mxu0 0.0
        %1138 = vmatprep.subr.mxu0 0.0
        %1139 = vmatpush1.msra.mxu0 0.0
        %1140 = vmatprep.subr.mxu0 0.0
        %1141 = vmatpush1.msra.mxu0 0.0
        %1142 = vmatprep.subr.mxu0 0.0
        %1143 = vmatpush1.msra.mxu0 0.0
        %1144 = vmatprep.subr.mxu0 0.0
        %1145 = vmatpush1.msra.mxu0 0.0
        %1146 = vmatprep.subr.mxu0 0.0
        %1147 = vmatpush1.msra.mxu0 0.0
        %1148 = vmatprep.subr.mxu0 0.0
        %1149 = vmatpush1.msra.mxu0 0.0
        %1150 = vmatprep.subr.mxu0 0.0
        %1151 = vmatpush1.msra.mxu0 0.0
        %1152 = vmatprep.subr.mxu0 0.0
        %1153 = vmatpush1.msra.mxu0 0.0
        %1154 = vmatprep.subr.mxu0 0.0
        %1155 = vmatpush1.msra.mxu0 0.0
        %1156 = vmatprep.subr.mxu0 0.0
        %1157 = vmatpush1.msra.mxu0 0.0
        %1158 = vmatprep.subr.mxu0 0.0
        %1159 = vmatpush1.msra.mxu0 0.0
        %1160 = vmatprep.subr.mxu0 0.0
        %1161 = vmatpush1.msra.mxu0 0.0
        %1162 = vmatprep.subr.mxu0 0.0
        %1163 = vmatpush1.msra.mxu0 0.0
        %1164 = vmatprep.subr.mxu0 0.0
        %v1165 = vand.u32 %v975, 4294901760
        %v1166 = vsub.f32 %v975, %v1165
        %1167 = vmatpush1.msra.mxu0 %v1166
        %1168 = vmatprep.subr.mxu0 0.0
        %1169 = vmatpush2.msra.mxu0 0.0
        %1170 = vmatprep.subr.mxu0 0.0
        %1171 = vmatpush2.msra.mxu0 0.0
        %1172 = vmatprep.subr.mxu0 0.0
        %1173 = vmatpush2.msra.mxu0 0.0
        %1174 = vmatprep.subr.mxu0 0.0
        %1175 = vmatpush2.msra.mxu0 0.0
        %1176 = vmatprep.subr.mxu0 0.0
        %1177 = vmatpush2.msra.mxu0 0.0
        %1178 = vmatprep.subr.mxu0 0.0
        %1179 = vmatpush2.msra.mxu0 0.0
        %1180 = vmatprep.subr.mxu0 0.0
        %1181 = vmatpush2.msra.mxu0 0.0
        %1182 = vmatprep.subr.mxu0 0.0
        %1183 = vmatpush2.msra.mxu0 0.0
        %1184 = vmatprep.subr.mxu0 0.0
        %1185 = vmatpush2.msra.mxu0 0.0
        %1186 = vmatprep.subr.mxu0 0.0
        %1187 = vmatpush2.msra.mxu0 0.0
        %1188 = vmatprep.subr.mxu0 0.0
        %1189 = vmatpush2.msra.mxu0 0.0
        %1190 = vmatprep.subr.mxu0 0.0
        %1191 = vmatpush2.msra.mxu0 0.0
        %1192 = vmatprep.subr.mxu0 0.0
        %1193 = vmatpush2.msra.mxu0 0.0
        %1194 = vmatprep.subr.mxu0 0.0
        %1195 = vmatpush2.msra.mxu0 0.0
        %1196 = vmatprep.subr.mxu0 0.0
        %1197 = vmatpush2.msra.mxu0 0.0
        %1198 = vmatprep.subr.mxu0 0.0
        %1199 = vmatpush2.msra.mxu0 0.0
        %1200 = vmatprep.mubr.f32.mxu0 0.0
        %v1201 = vand.u32 %v980, 4294901760
        %v1202 = vsub.f32 %v980, %v1201
        %1203 = vmatmul.mubr.f32.gmra.mxu0 %v1202
        %v1204 = vpop.f32.mrf.mxu0
        %v1205 = vadd.f32 %v1131, %v1204
        %v1206 = vpop.f32.mrf.mxu0
        %1207 = vdwg.mxu0
        %1208 = vmatprep.subr.mxu0 0.0
        %1209 = vmatpush1.msra.mxu0 0.0
        %1210 = vmatprep.subr.mxu0 0.0
        %1211 = vmatpush1.msra.mxu0 0.0
        %1212 = vmatprep.subr.mxu0 0.0
        %1213 = vmatpush1.msra.mxu0 0.0
        %1214 = vmatprep.subr.mxu0 0.0
        %1215 = vmatpush1.msra.mxu0 0.0
        %1216 = vmatprep.subr.mxu0 0.0
        %1217 = vmatpush1.msra.mxu0 0.0
        %1218 = vmatprep.subr.mxu0 0.0
        %1219 = vmatpush1.msra.mxu0 0.0
        %1220 = vmatprep.subr.mxu0 0.0
        %1221 = vmatpush1.msra.mxu0 0.0
        %1222 = vmatprep.subr.mxu0 0.0
        %1223 = vmatpush1.msra.mxu0 0.0
        %1224 = vmatprep.subr.mxu0 0.0
        %1225 = vmatpush1.msra.mxu0 0.0
        %1226 = vmatprep.subr.mxu0 0.0
        %1227 = vmatpush1.msra.mxu0 0.0
        %1228 = vmatprep.subr.mxu0 0.0
        %1229 = vmatpush1.msra.mxu0 0.0
        %1230 = vmatprep.subr.mxu0 0.0
        %1231 = vmatpush1.msra.mxu0 0.0
        %1232 = vmatprep.subr.mxu0 0.0
        %1233 = vmatpush1.msra.mxu0 0.0
        %1234 = vmatprep.subr.mxu0 0.0
        %1235 = vmatpush1.msra.mxu0 0.0
        %1236 = vmatprep.subr.mxu0 0.0
        %1237 = vmatpush1.msra.mxu0 0.0
        %1238 = vmatprep.subr.mxu0 0.0
        %v1239 = vand.u32 %v975, 4294901760
        %1240 = vmatpush1.msra.mxu0 %v1239
        %1241 = vmatprep.subr.mxu0 0.0
        %1242 = vmatpush2.msra.mxu0 0.0
        %1243 = vmatprep.subr.mxu0 0.0
        %1244 = vmatpush2.msra.mxu0 0.0
        %1245 = vmatprep.subr.mxu0 0.0
        %1246 = vmatpush2.msra.mxu0 0.0
        %1247 = vmatprep.subr.mxu0 0.0
        %1248 = vmatpush2.msra.mxu0 0.0
        %1249 = vmatprep.subr.mxu0 0.0
        %1250 = vmatpush2.msra.mxu0 0.0
        %1251 = vmatprep.subr.mxu0 0.0
        %1252 = vmatpush2.msra.mxu0 0.0
        %1253 = vmatprep.subr.mxu0 0.0
        %1254 = vmatpush2.msra.mxu0 0.0
        %1255 = vmatprep.subr.mxu0 0.0
        %1256 = vmatpush2.msra.mxu0 0.0
        %1257 = vmatprep.subr.mxu0 0.0
        %1258 = vmatpush2.msra.mxu0 0.0
        %1259 = vmatprep.subr.mxu0 0.0
        %1260 = vmatpush2.msra.mxu0 0.0
        %1261 = vmatprep.subr.mxu0 0.0
        %1262 = vmatpush2.msra.mxu0 0.0
        %1263 = vmatprep.subr.mxu0 0.0
        %1264 = vmatpush2.msra.mxu0 0.0
        %1265 = vmatprep.subr.mxu0 0.0
        %1266 = vmatpush2.msra.mxu0 0.0
        %1267 = vmatprep.subr.mxu0 0.0
        %1268 = vmatpush2.msra.mxu0 0.0
        %1269 = vmatprep.subr.mxu0 0.0
        %1270 = vmatpush2.msra.mxu0 0.0
        %1271 = vmatprep.subr.mxu0 0.0
        %1272 = vmatpush2.msra.mxu0 0.0
        %1273 = vmatprep.mubr.f32.mxu0 0.0
        %v1274 = vand.u32 %v980, 4294901760
        %v1275 = vsub.f32 %v980, %v1274
        %v1276 = vand.u32 %v1275, 4294901760
        %1277 = vmatmul.mubr.f32.gmra.mxu0 %v1276
        %v1278 = vpop.f32.mrf.mxu0
        %v1279 = vadd.f32 %v1205, %v1278
        %v1280 = vpop.f32.mrf.mxu0
        %1281 = vdwg.mxu0
        %1282 = vmatprep.subr.mxu0 0.0
        %1283 = vmatpush1.msra.mxu0 0.0
        %1284 = vmatprep.subr.mxu0 0.0
        %1285 = vmatpush1.msra.mxu0 0.0
        %1286 = vmatprep.subr.mxu0 0.0
        %1287 = vmatpush1.msra.mxu0 0.0
        %1288 = vmatprep.subr.mxu0 0.0
        %1289 = vmatpush1.msra.mxu0 0.0
        %1290 = vmatprep.subr.mxu0 0.0
        %1291 = vmatpush1.msra.mxu0 0.0
        %1292 = vmatprep.subr.mxu0 0.0
        %1293 = vmatpush1.msra.mxu0 0.0
        %1294 = vmatprep.subr.mxu0 0.0
        %1295 = vmatpush1.msra.mxu0 0.0
        %1296 = vmatprep.subr.mxu0 0.0
        %1297 = vmatpush1.msra.mxu0 0.0
        %1298 = vmatprep.subr.mxu0 0.0
        %1299 = vmatpush1.msra.mxu0 0.0
        %1300 = vmatprep.subr.mxu0 0.0
        %1301 = vmatpush1.msra.mxu0 0.0
        %1302 = vmatprep.subr.mxu0 0.0
        %1303 = vmatpush1.msra.mxu0 0.0
        %1304 = vmatprep.subr.mxu0 0.0
        %1305 = vmatpush1.msra.mxu0 0.0
        %1306 = vmatprep.subr.mxu0 0.0
        %1307 = vmatpush1.msra.mxu0 0.0
        %1308 = vmatprep.subr.mxu0 0.0
        %1309 = vmatpush1.msra.mxu0 0.0
        %1310 = vmatprep.subr.mxu0 0.0
        %1311 = vmatpush1.msra.mxu0 0.0
        %1312 = vmatprep.subr.mxu0 0.0
        %v1313 = vand.u32 %v975, 4294901760
        %v1314 = vsub.f32 %v975, %v1313
        %v1315 = vand.u32 %v1314, 4294901760
        %1316 = vmatpush1.msra.mxu0 %v1315
        %1317 = vmatprep.subr.mxu0 0.0
        %1318 = vmatpush2.msra.mxu0 0.0
        %1319 = vmatprep.subr.mxu0 0.0
        %1320 = vmatpush2.msra.mxu0 0.0
        %1321 = vmatprep.subr.mxu0 0.0
        %1322 = vmatpush2.msra.mxu0 0.0
        %1323 = vmatprep.subr.mxu0 0.0
        %1324 = vmatpush2.msra.mxu0 0.0
        %1325 = vmatprep.subr.mxu0 0.0
        %1326 = vmatpush2.msra.mxu0 0.0
        %1327 = vmatprep.subr.mxu0 0.0
        %1328 = vmatpush2.msra.mxu0 0.0
        %1329 = vmatprep.subr.mxu0 0.0
        %1330 = vmatpush2.msra.mxu0 0.0
        %1331 = vmatprep.subr.mxu0 0.0
        %1332 = vmatpush2.msra.mxu0 0.0
        %1333 = vmatprep.subr.mxu0 0.0
        %1334 = vmatpush2.msra.mxu0 0.0
        %1335 = vmatprep.subr.mxu0 0.0
        %1336 = vmatpush2.msra.mxu0 0.0
        %1337 = vmatprep.subr.mxu0 0.0
        %1338 = vmatpush2.msra.mxu0 0.0
        %1339 = vmatprep.subr.mxu0 0.0
        %1340 = vmatpush2.msra.mxu0 0.0
        %1341 = vmatprep.subr.mxu0 0.0
        %1342 = vmatpush2.msra.mxu0 0.0
        %1343 = vmatprep.subr.mxu0 0.0
        %1344 = vmatpush2.msra.mxu0 0.0
        %1345 = vmatprep.subr.mxu0 0.0
        %1346 = vmatpush2.msra.mxu0 0.0
        %1347 = vmatprep.subr.mxu0 0.0
        %1348 = vmatpush2.msra.mxu0 0.0
        %1349 = vmatprep.mubr.f32.mxu0 0.0
        %v1350 = vand.u32 %v980, 4294901760
        %1351 = vmatmul.mubr.f32.gmra.mxu0 %v1350
        %v1352 = vpop.f32.mrf.mxu0
        %v1353 = vadd.f32 %v1279, %v1352
        %v1354 = vpop.f32.mrf.mxu0
        %1355 = vdwg.mxu0
        %1356 = vmatprep.subr.mxu0 0.0
        %1357 = vmatpush1.msra.mxu0 0.0
        %1358 = vmatprep.subr.mxu0 0.0
        %1359 = vmatpush1.msra.mxu0 0.0
        %1360 = vmatprep.subr.mxu0 0.0
        %1361 = vmatpush1.msra.mxu0 0.0
        %1362 = vmatprep.subr.mxu0 0.0
        %1363 = vmatpush1.msra.mxu0 0.0
        %1364 = vmatprep.subr.mxu0 0.0
        %1365 = vmatpush1.msra.mxu0 0.0
        %1366 = vmatprep.subr.mxu0 0.0
        %1367 = vmatpush1.msra.mxu0 0.0
        %1368 = vmatprep.subr.mxu0 0.0
        %1369 = vmatpush1.msra.mxu0 0.0
        %1370 = vmatprep.subr.mxu0 0.0
        %1371 = vmatpush1.msra.mxu0 0.0
        %1372 = vmatprep.subr.mxu0 0.0
        %1373 = vmatpush1.msra.mxu0 0.0
        %1374 = vmatprep.subr.mxu0 0.0
        %1375 = vmatpush1.msra.mxu0 0.0
        %1376 = vmatprep.subr.mxu0 0.0
        %1377 = vmatpush1.msra.mxu0 0.0
        %1378 = vmatprep.subr.mxu0 0.0
        %1379 = vmatpush1.msra.mxu0 0.0
        %1380 = vmatprep.subr.mxu0 0.0
        %1381 = vmatpush1.msra.mxu0 0.0
        %1382 = vmatprep.subr.mxu0 0.0
        %1383 = vmatpush1.msra.mxu0 0.0
        %1384 = vmatprep.subr.mxu0 0.0
        %1385 = vmatpush1.msra.mxu0 0.0
        %1386 = vmatprep.subr.mxu0 0.0
        %v1387 = vand.u32 %v975, 4294901760
        %1388 = vmatpush1.msra.mxu0 %v1387
        %1389 = vmatprep.subr.mxu0 0.0
        %1390 = vmatpush2.msra.mxu0 0.0
        %1391 = vmatprep.subr.mxu0 0.0
        %1392 = vmatpush2.msra.mxu0 0.0
        %1393 = vmatprep.subr.mxu0 0.0
        %1394 = vmatpush2.msra.mxu0 0.0
        %1395 = vmatprep.subr.mxu0 0.0
        %1396 = vmatpush2.msra.mxu0 0.0
        %1397 = vmatprep.subr.mxu0 0.0
        %1398 = vmatpush2.msra.mxu0 0.0
        %1399 = vmatprep.subr.mxu0 0.0
        %1400 = vmatpush2.msra.mxu0 0.0
        %1401 = vmatprep.subr.mxu0 0.0
        %1402 = vmatpush2.msra.mxu0 0.0
        %1403 = vmatprep.subr.mxu0 0.0
        %1404 = vmatpush2.msra.mxu0 0.0
        %1405 = vmatprep.subr.mxu0 0.0
        %1406 = vmatpush2.msra.mxu0 0.0
        %1407 = vmatprep.subr.mxu0 0.0
        %1408 = vmatpush2.msra.mxu0 0.0
        %1409 = vmatprep.subr.mxu0 0.0
        %1410 = vmatpush2.msra.mxu0 0.0
        %1411 = vmatprep.subr.mxu0 0.0
        %1412 = vmatpush2.msra.mxu0 0.0
        %1413 = vmatprep.subr.mxu0 0.0
        %1414 = vmatpush2.msra.mxu0 0.0
        %1415 = vmatprep.subr.mxu0 0.0
        %1416 = vmatpush2.msra.mxu0 0.0
        %1417 = vmatprep.subr.mxu0 0.0
        %1418 = vmatpush2.msra.mxu0 0.0
        %1419 = vmatprep.subr.mxu0 0.0
        %1420 = vmatpush2.msra.mxu0 0.0
        %1421 = vmatprep.mubr.f32.mxu0 0.0
        %v1422 = vand.u32 %v980, 4294901760
        %1423 = vmatmul.mubr.f32.gmra.mxu0 %v1422
        %v1424 = vpop.f32.mrf.mxu0
        %v1425 = vadd.f32 %v1353, %v1424
        %v1426 = vpop.f32.mrf.mxu0
        %1427 = vdwg.mxu0
        %1429 = vrot.lane.b32.xlu0 %v975, 64
        %v1430 = vpop.permute.xlu0 %1429
        %v1433 = vsel %vm978, %v484, 0
        %1435 = vmatprep.subr.mxu0 0.0
        %1436 = vmatpush1.msra.mxu0 0.0
        %1437 = vmatprep.subr.mxu0 0.0
        %1438 = vmatpush1.msra.mxu0 0.0
        %1439 = vmatprep.subr.mxu0 0.0
        %1440 = vmatpush1.msra.mxu0 0.0
        %1441 = vmatprep.subr.mxu0 0.0
        %1442 = vmatpush1.msra.mxu0 0.0
        %1443 = vmatprep.subr.mxu0 0.0
        %1444 = vmatpush1.msra.mxu0 0.0
        %1445 = vmatprep.subr.mxu0 0.0
        %1446 = vmatpush1.msra.mxu0 0.0
        %1447 = vmatprep.subr.mxu0 0.0
        %1448 = vmatpush1.msra.mxu0 0.0
        %1449 = vmatprep.subr.mxu0 0.0
        %1450 = vmatpush1.msra.mxu0 0.0
        %1451 = vmatprep.subr.mxu0 0.0
        %1452 = vmatpush1.msra.mxu0 0.0
        %1453 = vmatprep.subr.mxu0 0.0
        %1454 = vmatpush1.msra.mxu0 0.0
        %1455 = vmatprep.subr.mxu0 0.0
        %1456 = vmatpush1.msra.mxu0 0.0
        %1457 = vmatprep.subr.mxu0 0.0
        %1458 = vmatpush1.msra.mxu0 0.0
        %1459 = vmatprep.subr.mxu0 0.0
        %1460 = vmatpush1.msra.mxu0 0.0
        %1461 = vmatprep.subr.mxu0 0.0
        %1462 = vmatpush1.msra.mxu0 0.0
        %1463 = vmatprep.subr.mxu0 0.0
        %1464 = vmatpush1.msra.mxu0 0.0
        %1465 = vmatprep.subr.mxu0 0.0
        %v1466 = vand.u32 %v1430, 4294901760
        %1467 = vmatpush1.msra.mxu0 %v1466
        %1468 = vmatprep.subr.mxu0 0.0
        %1469 = vmatpush2.msra.mxu0 0.0
        %1470 = vmatprep.subr.mxu0 0.0
        %1471 = vmatpush2.msra.mxu0 0.0
        %1472 = vmatprep.subr.mxu0 0.0
        %1473 = vmatpush2.msra.mxu0 0.0
        %1474 = vmatprep.subr.mxu0 0.0
        %1475 = vmatpush2.msra.mxu0 0.0
        %1476 = vmatprep.subr.mxu0 0.0
        %1477 = vmatpush2.msra.mxu0 0.0
        %1478 = vmatprep.subr.mxu0 0.0
        %1479 = vmatpush2.msra.mxu0 0.0
        %1480 = vmatprep.subr.mxu0 0.0
        %1481 = vmatpush2.msra.mxu0 0.0
        %1482 = vmatprep.subr.mxu0 0.0
        %1483 = vmatpush2.msra.mxu0 0.0
        %1484 = vmatprep.subr.mxu0 0.0
        %1485 = vmatpush2.msra.mxu0 0.0
        %1486 = vmatprep.subr.mxu0 0.0
        %1487 = vmatpush2.msra.mxu0 0.0
        %1488 = vmatprep.subr.mxu0 0.0
        %1489 = vmatpush2.msra.mxu0 0.0
        %1490 = vmatprep.subr.mxu0 0.0
        %1491 = vmatpush2.msra.mxu0 0.0
        %1492 = vmatprep.subr.mxu0 0.0
        %1493 = vmatpush2.msra.mxu0 0.0
        %1494 = vmatprep.subr.mxu0 0.0
        %1495 = vmatpush2.msra.mxu0 0.0
        %1496 = vmatprep.subr.mxu0 0.0
        %1497 = vmatpush2.msra.mxu0 0.0
        %1498 = vmatprep.subr.mxu0 0.0
        %1499 = vmatpush2.msra.mxu0 0.0
        %1500 = vmatprep.mubr.f32.mxu0 0.0
        %v1501 = vand.u32 %v1433, 4294901760
        %v1502 = vsub.f32 %v1433, %v1501
        %v1503 = vand.u32 %v1502, 4294901760
        %v1504 = vsub.f32 %v1502, %v1503
        %v1505 = vand.u32 %v1504, 4294901760
        %1506 = vmatmul.mubr.f32.gmra.mxu0 %v1505
        %v1507 = vpop.f32.mrf.mxu0
        %v1508 = vadd.f32 0.0, %v1507
        %v1509 = vpop.f32.mrf.mxu0
        %1510 = vdwg.mxu0
        %1511 = vmatprep.subr.mxu0 0.0
        %1512 = vmatpush1.msra.mxu0 0.0
        %1513 = vmatprep.subr.mxu0 0.0
        %1514 = vmatpush1.msra.mxu0 0.0
        %1515 = vmatprep.subr.mxu0 0.0
        %1516 = vmatpush1.msra.mxu0 0.0
        %1517 = vmatprep.subr.mxu0 0.0
        %1518 = vmatpush1.msra.mxu0 0.0
        %1519 = vmatprep.subr.mxu0 0.0
        %1520 = vmatpush1.msra.mxu0 0.0
        %1521 = vmatprep.subr.mxu0 0.0
        %1522 = vmatpush1.msra.mxu0 0.0
        %1523 = vmatprep.subr.mxu0 0.0
        %1524 = vmatpush1.msra.mxu0 0.0
        %1525 = vmatprep.subr.mxu0 0.0
        %1526 = vmatpush1.msra.mxu0 0.0
        %1527 = vmatprep.subr.mxu0 0.0
        %1528 = vmatpush1.msra.mxu0 0.0
        %1529 = vmatprep.subr.mxu0 0.0
        %1530 = vmatpush1.msra.mxu0 0.0
        %1531 = vmatprep.subr.mxu0 0.0
        %1532 = vmatpush1.msra.mxu0 0.0
        %1533 = vmatprep.subr.mxu0 0.0
        %1534 = vmatpush1.msra.mxu0 0.0
        %1535 = vmatprep.subr.mxu0 0.0
        %1536 = vmatpush1.msra.mxu0 0.0
        %1537 = vmatprep.subr.mxu0 0.0
        %1538 = vmatpush1.msra.mxu0 0.0
        %1539 = vmatprep.subr.mxu0 0.0
        %1540 = vmatpush1.msra.mxu0 0.0
        %1541 = vmatprep.subr.mxu0 0.0
        %v1542 = vand.u32 %v1430, 4294901760
        %v1543 = vsub.f32 %v1430, %v1542
        %v1544 = vand.u32 %v1543, 4294901760
        %v1545 = vsub.f32 %v1543, %v1544
        %v1546 = vand.u32 %v1545, 4294901760
        %1547 = vmatpush1.msra.mxu0 %v1546
        %1548 = vmatprep.subr.mxu0 0.0
        %1549 = vmatpush2.msra.mxu0 0.0
        %1550 = vmatprep.subr.mxu0 0.0
        %1551 = vmatpush2.msra.mxu0 0.0
        %1552 = vmatprep.subr.mxu0 0.0
        %1553 = vmatpush2.msra.mxu0 0.0
        %1554 = vmatprep.subr.mxu0 0.0
        %1555 = vmatpush2.msra.mxu0 0.0
        %1556 = vmatprep.subr.mxu0 0.0
        %1557 = vmatpush2.msra.mxu0 0.0
        %1558 = vmatprep.subr.mxu0 0.0
        %1559 = vmatpush2.msra.mxu0 0.0
        %1560 = vmatprep.subr.mxu0 0.0
        %1561 = vmatpush2.msra.mxu0 0.0
        %1562 = vmatprep.subr.mxu0 0.0
        %1563 = vmatpush2.msra.mxu0 0.0
        %1564 = vmatprep.subr.mxu0 0.0
        %1565 = vmatpush2.msra.mxu0 0.0
        %1566 = vmatprep.subr.mxu0 0.0
        %1567 = vmatpush2.msra.mxu0 0.0
        %1568 = vmatprep.subr.mxu0 0.0
        %1569 = vmatpush2.msra.mxu0 0.0
        %1570 = vmatprep.subr.mxu0 0.0
        %1571 = vmatpush2.msra.mxu0 0.0
        %1572 = vmatprep.subr.mxu0 0.0
        %1573 = vmatpush2.msra.mxu0 0.0
        %1574 = vmatprep.subr.mxu0 0.0
        %1575 = vmatpush2.msra.mxu0 0.0
        %1576 = vmatprep.subr.mxu0 0.0
        %1577 = vmatpush2.msra.mxu0 0.0
        %1578 = vmatprep.subr.mxu0 0.0
        %1579 = vmatpush2.msra.mxu0 0.0
        %1580 = vmatprep.mubr.f32.mxu0 0.0
        %v1581 = vand.u32 %v1433, 4294901760
        %1582 = vmatmul.mubr.f32.gmra.mxu0 %v1581
        %v1583 = vpop.f32.mrf.mxu0
        %v1584 = vadd.f32 %v1508, %v1583
        %v1585 = vpop.f32.mrf.mxu0
        %1586 = vdwg.mxu0
        %1587 = vmatprep.subr.mxu0 0.0
        %1588 = vmatpush1.msra.mxu0 0.0
        %1589 = vmatprep.subr.mxu0 0.0
        %1590 = vmatpush1.msra.mxu0 0.0
        %1591 = vmatprep.subr.mxu0 0.0
        %1592 = vmatpush1.msra.mxu0 0.0
        %1593 = vmatprep.subr.mxu0 0.0
        %1594 = vmatpush1.msra.mxu0 0.0
        %1595 = vmatprep.subr.mxu0 0.0
        %1596 = vmatpush1.msra.mxu0 0.0
        %1597 = vmatprep.subr.mxu0 0.0
        %1598 = vmatpush1.msra.mxu0 0.0
        %1599 = vmatprep.subr.mxu0 0.0
        %1600 = vmatpush1.msra.mxu0 0.0
        %1601 = vmatprep.subr.mxu0 0.0
        %1602 = vmatpush1.msra.mxu0 0.0
        %1603 = vmatprep.subr.mxu0 0.0
        %1604 = vmatpush1.msra.mxu0 0.0
        %1605 = vmatprep.subr.mxu0 0.0
        %1606 = vmatpush1.msra.mxu0 0.0
        %1607 = vmatprep.subr.mxu0 0.0
        %1608 = vmatpush1.msra.mxu0 0.0
        %1609 = vmatprep.subr.mxu0 0.0
        %1610 = vmatpush1.msra.mxu0 0.0
        %1611 = vmatprep.subr.mxu0 0.0
        %1612 = vmatpush1.msra.mxu0 0.0
        %1613 = vmatprep.subr.mxu0 0.0
        %1614 = vmatpush1.msra.mxu0 0.0
        %1615 = vmatprep.subr.mxu0 0.0
        %1616 = vmatpush1.msra.mxu0 0.0
        %1617 = vmatprep.subr.mxu0 0.0
        %v1618 = vand.u32 %v1430, 4294901760
        %v1619 = vsub.f32 %v1430, %v1618
        %1620 = vmatpush1.msra.mxu0 %v1619
        %1621 = vmatprep.subr.mxu0 0.0
        %1622 = vmatpush2.msra.mxu0 0.0
        %1623 = vmatprep.subr.mxu0 0.0
        %1624 = vmatpush2.msra.mxu0 0.0
        %1625 = vmatprep.subr.mxu0 0.0
        %1626 = vmatpush2.msra.mxu0 0.0
        %1627 = vmatprep.subr.mxu0 0.0
        %1628 = vmatpush2.msra.mxu0 0.0
        %1629 = vmatprep.subr.mxu0 0.0
        %1630 = vmatpush2.msra.mxu0 0.0
        %1631 = vmatprep.subr.mxu0 0.0
        %1632 = vmatpush2.msra.mxu0 0.0
        %1633 = vmatprep.subr.mxu0 0.0
        %1634 = vmatpush2.msra.mxu0 0.0
        %1635 = vmatprep.subr.mxu0 0.0
        %1636 = vmatpush2.msra.mxu0 0.0
        %1637 = vmatprep.subr.mxu0 0.0
        %1638 = vmatpush2.msra.mxu0 0.0
        %1639 = vmatprep.subr.mxu0 0.0
        %1640 = vmatpush2.msra.mxu0 0.0
        %1641 = vmatprep.subr.mxu0 0.0
        %1642 = vmatpush2.msra.mxu0 0.0
        %1643 = vmatprep.subr.mxu0 0.0
        %1644 = vmatpush2.msra.mxu0 0.0
        %1645 = vmatprep.subr.mxu0 0.0
        %1646 = vmatpush2.msra.mxu0 0.0
        %1647 = vmatprep.subr.mxu0 0.0
        %1648 = vmatpush2.msra.mxu0 0.0
        %1649 = vmatprep.subr.mxu0 0.0
        %1650 = vmatpush2.msra.mxu0 0.0
        %1651 = vmatprep.subr.mxu0 0.0
        %1652 = vmatpush2.msra.mxu0 0.0
        %1653 = vmatprep.mubr.f32.mxu0 0.0
        %v1654 = vand.u32 %v1433, 4294901760
        %v1655 = vsub.f32 %v1433, %v1654
        %1656 = vmatmul.mubr.f32.gmra.mxu0 %v1655
        %v1657 = vpop.f32.mrf.mxu0
        %v1658 = vadd.f32 %v1584, %v1657
        %v1659 = vpop.f32.mrf.mxu0
        %1660 = vdwg.mxu0
        %1661 = vmatprep.subr.mxu0 0.0
        %1662 = vmatpush1.msra.mxu0 0.0
        %1663 = vmatprep.subr.mxu0 0.0
        %1664 = vmatpush1.msra.mxu0 0.0
        %1665 = vmatprep.subr.mxu0 0.0
        %1666 = vmatpush1.msra.mxu0 0.0
        %1667 = vmatprep.subr.mxu0 0.0
        %1668 = vmatpush1.msra.mxu0 0.0
        %1669 = vmatprep.subr.mxu0 0.0
        %1670 = vmatpush1.msra.mxu0 0.0
        %1671 = vmatprep.subr.mxu0 0.0
        %1672 = vmatpush1.msra.mxu0 0.0
        %1673 = vmatprep.subr.mxu0 0.0
        %1674 = vmatpush1.msra.mxu0 0.0
        %1675 = vmatprep.subr.mxu0 0.0
        %1676 = vmatpush1.msra.mxu0 0.0
        %1677 = vmatprep.subr.mxu0 0.0
        %1678 = vmatpush1.msra.mxu0 0.0
        %1679 = vmatprep.subr.mxu0 0.0
        %1680 = vmatpush1.msra.mxu0 0.0
        %1681 = vmatprep.subr.mxu0 0.0
        %1682 = vmatpush1.msra.mxu0 0.0
        %1683 = vmatprep.subr.mxu0 0.0
        %1684 = vmatpush1.msra.mxu0 0.0
        %1685 = vmatprep.subr.mxu0 0.0
        %1686 = vmatpush1.msra.mxu0 0.0
        %1687 = vmatprep.subr.mxu0 0.0
        %1688 = vmatpush1.msra.mxu0 0.0
        %1689 = vmatprep.subr.mxu0 0.0
        %1690 = vmatpush1.msra.mxu0 0.0
        %1691 = vmatprep.subr.mxu0 0.0
        %v1692 = vand.u32 %v1430, 4294901760
        %1693 = vmatpush1.msra.mxu0 %v1692
        %1694 = vmatprep.subr.mxu0 0.0
        %1695 = vmatpush2.msra.mxu0 0.0
        %1696 = vmatprep.subr.mxu0 0.0
        %1697 = vmatpush2.msra.mxu0 0.0
        %1698 = vmatprep.subr.mxu0 0.0
        %1699 = vmatpush2.msra.mxu0 0.0
        %1700 = vmatprep.subr.mxu0 0.0
        %1701 = vmatpush2.msra.mxu0 0.0
        %1702 = vmatprep.subr.mxu0 0.0
        %1703 = vmatpush2.msra.mxu0 0.0
        %1704 = vmatprep.subr.mxu0 0.0
        %1705 = vmatpush2.msra.mxu0 0.0
        %1706 = vmatprep.subr.mxu0 0.0
        %1707 = vmatpush2.msra.mxu0 0.0
        %1708 = vmatprep.subr.mxu0 0.0
        %1709 = vmatpush2.msra.mxu0 0.0
        %1710 = vmatprep.subr.mxu0 0.0
        %1711 = vmatpush2.msra.mxu0 0.0
        %1712 = vmatprep.subr.mxu0 0.0
        %1713 = vmatpush2.msra.mxu0 0.0
        %1714 = vmatprep.subr.mxu0 0.0
        %1715 = vmatpush2.msra.mxu0 0.0
        %1716 = vmatprep.subr.mxu0 0.0
        %1717 = vmatpush2.msra.mxu0 0.0
        %1718 = vmatprep.subr.mxu0 0.0
        %1719 = vmatpush2.msra.mxu0 0.0
        %1720 = vmatprep.subr.mxu0 0.0
        %1721 = vmatpush2.msra.mxu0 0.0
        %1722 = vmatprep.subr.mxu0 0.0
        %1723 = vmatpush2.msra.mxu0 0.0
        %1724 = vmatprep.subr.mxu0 0.0
        %1725 = vmatpush2.msra.mxu0 0.0
        %1726 = vmatprep.mubr.f32.mxu0 0.0
        %v1727 = vand.u32 %v1433, 4294901760
        %v1728 = vsub.f32 %v1433, %v1727
        %v1729 = vand.u32 %v1728, 4294901760
        %1730 = vmatmul.mubr.f32.gmra.mxu0 %v1729
        %v1731 = vpop.f32.mrf.mxu0
        %v1732 = vadd.f32 %v1658, %v1731
        %v1733 = vpop.f32.mrf.mxu0
        %1734 = vdwg.mxu0
        %1735 = vmatprep.subr.mxu0 0.0
        %1736 = vmatpush1.msra.mxu0 0.0
        %1737 = vmatprep.subr.mxu0 0.0
        %1738 = vmatpush1.msra.mxu0 0.0
        %1739 = vmatprep.subr.mxu0 0.0
        %1740 = vmatpush1.msra.mxu0 0.0
        %1741 = vmatprep.subr.mxu0 0.0
        %1742 = vmatpush1.msra.mxu0 0.0
        %1743 = vmatprep.subr.mxu0 0.0
        %1744 = vmatpush1.msra.mxu0 0.0
        %1745 = vmatprep.subr.mxu0 0.0
        %1746 = vmatpush1.msra.mxu0 0.0
        %1747 = vmatprep.subr.mxu0 0.0
        %1748 = vmatpush1.msra.mxu0 0.0
        %1749 = vmatprep.subr.mxu0 0.0
        %1750 = vmatpush1.msra.mxu0 0.0
        %1751 = vmatprep.subr.mxu0 0.0
        %1752 = vmatpush1.msra.mxu0 0.0
        %1753 = vmatprep.subr.mxu0 0.0
        %1754 = vmatpush1.msra.mxu0 0.0
        %1755 = vmatprep.subr.mxu0 0.0
        %1756 = vmatpush1.msra.mxu0 0.0
        %1757 = vmatprep.subr.mxu0 0.0
        %1758 = vmatpush1.msra.mxu0 0.0
        %1759 = vmatprep.subr.mxu0 0.0
        %1760 = vmatpush1.msra.mxu0 0.0
        %1761 = vmatprep.subr.mxu0 0.0
        %1762 = vmatpush1.msra.mxu0 0.0
        %1763 = vmatprep.subr.mxu0 0.0
        %1764 = vmatpush1.msra.mxu0 0.0
        %1765 = vmatprep.subr.mxu0 0.0
        %v1766 = vand.u32 %v1430, 4294901760
        %v1767 = vsub.f32 %v1430, %v1766
        %v1768 = vand.u32 %v1767, 4294901760
        %1769 = vmatpush1.msra.mxu0 %v1768
        %1770 = vmatprep.subr.mxu0 0.0
        %1771 = vmatpush2.msra.mxu0 0.0
        %1772 = vmatprep.subr.mxu0 0.0
        %1773 = vmatpush2.msra.mxu0 0.0
        %1774 = vmatprep.subr.mxu0 0.0
        %1775 = vmatpush2.msra.mxu0 0.0
        %1776 = vmatprep.subr.mxu0 0.0
        %1777 = vmatpush2.msra.mxu0 0.0
        %1778 = vmatprep.subr.mxu0 0.0
        %1779 = vmatpush2.msra.mxu0 0.0
        %1780 = vmatprep.subr.mxu0 0.0
        %1781 = vmatpush2.msra.mxu0 0.0
        %1782 = vmatprep.subr.mxu0 0.0
        %1783 = vmatpush2.msra.mxu0 0.0
        %1784 = vmatprep.subr.mxu0 0.0
        %1785 = vmatpush2.msra.mxu0 0.0
        %1786 = vmatprep.subr.mxu0 0.0
        %1787 = vmatpush2.msra.mxu0 0.0
        %1788 = vmatprep.subr.mxu0 0.0
        %1789 = vmatpush2.msra.mxu0 0.0
        %1790 = vmatprep.subr.mxu0 0.0
        %1791 = vmatpush2.msra.mxu0 0.0
        %1792 = vmatprep.subr.mxu0 0.0
        %1793 = vmatpush2.msra.mxu0 0.0
        %1794 = vmatprep.subr.mxu0 0.0
        %1795 = vmatpush2.msra.mxu0 0.0
        %1796 = vmatprep.subr.mxu0 0.0
        %1797 = vmatpush2.msra.mxu0 0.0
        %1798 = vmatprep.subr.mxu0 0.0
        %1799 = vmatpush2.msra.mxu0 0.0
        %1800 = vmatprep.subr.mxu0 0.0
        %1801 = vmatpush2.msra.mxu0 0.0
        %1802 = vmatprep.mubr.f32.mxu0 0.0
        %v1803 = vand.u32 %v1433, 4294901760
        %1804 = vmatmul.mubr.f32.gmra.mxu0 %v1803
        %v1805 = vpop.f32.mrf.mxu0
        %v1806 = vadd.f32 %v1732, %v1805
        %v1807 = vpop.f32.mrf.mxu0
        %1808 = vdwg.mxu0
        %1809 = vmatprep.subr.mxu0 0.0
        %1810 = vmatpush1.msra.mxu0 0.0
        %1811 = vmatprep.subr.mxu0 0.0
        %1812 = vmatpush1.msra.mxu0 0.0
        %1813 = vmatprep.subr.mxu0 0.0
        %1814 = vmatpush1.msra.mxu0 0.0
        %1815 = vmatprep.subr.mxu0 0.0
        %1816 = vmatpush1.msra.mxu0 0.0
        %1817 = vmatprep.subr.mxu0 0.0
        %1818 = vmatpush1.msra.mxu0 0.0
        %1819 = vmatprep.subr.mxu0 0.0
        %1820 = vmatpush1.msra.mxu0 0.0
        %1821 = vmatprep.subr.mxu0 0.0
        %1822 = vmatpush1.msra.mxu0 0.0
        %1823 = vmatprep.subr.mxu0 0.0
        %1824 = vmatpush1.msra.mxu0 0.0
        %1825 = vmatprep.subr.mxu0 0.0
        %1826 = vmatpush1.msra.mxu0 0.0
        %1827 = vmatprep.subr.mxu0 0.0
        %1828 = vmatpush1.msra.mxu0 0.0
        %1829 = vmatprep.subr.mxu0 0.0
        %1830 = vmatpush1.msra.mxu0 0.0
        %1831 = vmatprep.subr.mxu0 0.0
        %1832 = vmatpush1.msra.mxu0 0.0
        %1833 = vmatprep.subr.mxu0 0.0
        %1834 = vmatpush1.msra.mxu0 0.0
        %1835 = vmatprep.subr.mxu0 0.0
        %1836 = vmatpush1.msra.mxu0 0.0
        %1837 = vmatprep.subr.mxu0 0.0
        %1838 = vmatpush1.msra.mxu0 0.0
        %1839 = vmatprep.subr.mxu0 0.0
        %v1840 = vand.u32 %v1430, 4294901760
        %1841 = vmatpush1.msra.mxu0 %v1840
        %1842 = vmatprep.subr.mxu0 0.0
        %1843 = vmatpush2.msra.mxu0 0.0
        %1844 = vmatprep.subr.mxu0 0.0
        %1845 = vmatpush2.msra.mxu0 0.0
        %1846 = vmatprep.subr.mxu0 0.0
        %1847 = vmatpush2.msra.mxu0 0.0
        %1848 = vmatprep.subr.mxu0 0.0
        %1849 = vmatpush2.msra.mxu0 0.0
        %1850 = vmatprep.subr.mxu0 0.0
        %1851 = vmatpush2.msra.mxu0 0.0
        %1852 = vmatprep.subr.mxu0 0.0
        %1853 = vmatpush2.msra.mxu0 0.0
        %1854 = vmatprep.subr.mxu0 0.0
        %1855 = vmatpush2.msra.mxu0 0.0
        %1856 = vmatprep.subr.mxu0 0.0
        %1857 = vmatpush2.msra.mxu0 0.0
        %1858 = vmatprep.subr.mxu0 0.0
        %1859 = vmatpush2.msra.mxu0 0.0
        %1860 = vmatprep.subr.mxu0 0.0
        %1861 = vmatpush2.msra.mxu0 0.0
        %1862 = vmatprep.subr.mxu0 0.0
        %1863 = vmatpush2.msra.mxu0 0.0
        %1864 = vmatprep.subr.mxu0 0.0
        %1865 = vmatpush2.msra.mxu0 0.0
        %1866 = vmatprep.subr.mxu0 0.0
        %1867 = vmatpush2.msra.mxu0 0.0
        %1868 = vmatprep.subr.mxu0 0.0
        %1869 = vmatpush2.msra.mxu0 0.0
        %1870 = vmatprep.subr.mxu0 0.0
        %1871 = vmatpush2.msra.mxu0 0.0
        %1872 = vmatprep.subr.mxu0 0.0
        %1873 = vmatpush2.msra.mxu0 0.0
        %1874 = vmatprep.mubr.f32.mxu0 0.0
        %v1875 = vand.u32 %v1433, 4294901760
        %1876 = vmatmul.mubr.f32.gmra.mxu0 %v1875
        %v1877 = vpop.f32.mrf.mxu0
        %v1878 = vadd.f32 %v1806, %v1877
        %v1879 = vpop.f32.mrf.mxu0
        %1880 = vdwg.mxu0
        %1882 = vrot.lane.b32.xlu0 %v1878, 64
        %v1883 = vpop.permute.xlu0 %1882
        %vm1885 = vcmask 523264
        %v1886 = vsel %vm1885, %v1425, %v1883
        %v1887 = vld [vmem:[%s4] sm:$0x1]
        %v1889 = vlaneseq
        %v1890 = vshrl.u32 %v1889, 7
        %v1891 = vsub.s32 0, %v1890
        %v1892 = vrot.slane %v1887, %v1891
        %v1894 = vadd.f32 %v1886, %v1892
        %v1895 = vmax.f32 %v1894, 0.0
        %v1896 = vld [vmem:[%s5] sm:$0xff]
        %v1897 = vld [vmem:[%s5 + $0x8] sm:$0xff]
        %v1898 = vld [vmem:[%s5 + $0x10] sm:$0xff]
        %v1899 = vld [vmem:[%s5 + $0x18] sm:$0xff]
        %v1900 = vld [vmem:[%s5 + $0x20] sm:$0xff]
        %v1901 = vld [vmem:[%s5 + $0x28] sm:$0xff]
        %v1902 = vld [vmem:[%s5 + $0x30] sm:$0xff]
        %v1903 = vld [vmem:[%s5 + $0x38] sm:$0xff]
        %v1904 = vld [vmem:[%s5 + $0x40] sm:$0xff]
        %v1905 = vld [vmem:[%s5 + $0x48] sm:$0xff]
        %v1906 = vld [vmem:[%s5 + $0x50] sm:$0xff]
        %v1907 = vld [vmem:[%s5 + $0x58] sm:$0xff]
        %v1908 = vld [vmem:[%s5 + $0x60] sm:$0xff]
        %v1909 = vld [vmem:[%s5 + $0x68] sm:$0xff]
        %v1910 = vld [vmem:[%s5 + $0x70] sm:$0xff]
        %v1911 = vld [vmem:[%s5 + $0x78] sm:$0xff]
        %1912 = vmatprep.subr.mxu0 0.0
        %v1913 = vand.u32 %v1911, 4294901760
        %1914 = vmatpush1.msra.mxu0 %v1913
        %1915 = vmatprep.subr.mxu0 0.0
        %v1916 = vand.u32 %v1910, 4294901760
        %1917 = vmatpush1.msra.mxu0 %v1916
        %1918 = vmatprep.subr.mxu0 0.0
        %v1919 = vand.u32 %v1909, 4294901760
        %1920 = vmatpush1.msra.mxu0 %v1919
        %1921 = vmatprep.subr.mxu0 0.0
        %v1922 = vand.u32 %v1908, 4294901760
        %1923 = vmatpush1.msra.mxu0 %v1922
        %1924 = vmatprep.subr.mxu0 0.0
        %v1925 = vand.u32 %v1907, 4294901760
        %1926 = vmatpush1.msra.mxu0 %v1925
        %1927 = vmatprep.subr.mxu0 0.0
        %v1928 = vand.u32 %v1906, 4294901760
        %1929 = vmatpush1.msra.mxu0 %v1928
        %1930 = vmatprep.subr.mxu0 0.0
        %v1931 = vand.u32 %v1905, 4294901760
        %1932 = vmatpush1.msra.mxu0 %v1931
        %1933 = vmatprep.subr.mxu0 0.0
        %v1934 = vand.u32 %v1904, 4294901760
        %1935 = vmatpush1.msra.mxu0 %v1934
        %1936 = vmatprep.subr.mxu0 0.0
        %v1937 = vand.u32 %v1903, 4294901760
        %1938 = vmatpush1.msra.mxu0 %v1937
        %1939 = vmatprep.subr.mxu0 0.0
        %v1940 = vand.u32 %v1902, 4294901760
        %1941 = vmatpush1.msra.mxu0 %v1940
        %1942 = vmatprep.subr.mxu0 0.0
        %v1943 = vand.u32 %v1901, 4294901760
        %1944 = vmatpush1.msra.mxu0 %v1943
        %1945 = vmatprep.subr.mxu0 0.0
        %v1946 = vand.u32 %v1900, 4294901760
        %1947 = vmatpush1.msra.mxu0 %v1946
        %1948 = vmatprep.subr.mxu0 0.0
        %v1949 = vand.u32 %v1899, 4294901760
        %1950 = vmatpush1.msra.mxu0 %v1949
        %1951 = vmatprep.subr.mxu0 0.0
        %v1952 = vand.u32 %v1898, 4294901760
        %1953 = vmatpush1.msra.mxu0 %v1952
        %1954 = vmatprep.subr.mxu0 0.0
        %v1955 = vand.u32 %v1897, 4294901760
        %1956 = vmatpush1.msra.mxu0 %v1955
        %1957 = vmatprep.subr.mxu0 0.0
        %v1958 = vand.u32 %v1896, 4294901760
        %1959 = vmatpush1.msra.mxu0 %v1958
        %1960 = vmatprep.subr.mxu0 0.0
        %1961 = vmatpush2.msra.mxu0 0.0
        %1962 = vmatprep.subr.mxu0 0.0
        %1963 = vmatpush2.msra.mxu0 0.0
        %1964 = vmatprep.subr.mxu0 0.0
        %1965 = vmatpush2.msra.mxu0 0.0
        %1966 = vmatprep.subr.mxu0 0.0
        %1967 = vmatpush2.msra.mxu0 0.0
        %1968 = vmatprep.subr.mxu0 0.0
        %1969 = vmatpush2.msra.mxu0 0.0
        %1970 = vmatprep.subr.mxu0 0.0
        %1971 = vmatpush2.msra.mxu0 0.0
        %1972 = vmatprep.subr.mxu0 0.0
        %1973 = vmatpush2.msra.mxu0 0.0
        %1974 = vmatprep.subr.mxu0 0.0
        %1975 = vmatpush2.msra.mxu0 0.0
        %1976 = vmatprep.subr.mxu0 0.0
        %1977 = vmatpush2.msra.mxu0 0.0
        %1978 = vmatprep.subr.mxu0 0.0
        %1979 = vmatpush2.msra.mxu0 0.0
        %1980 = vmatprep.subr.mxu0 0.0
        %1981 = vmatpush2.msra.mxu0 0.0
        %1982 = vmatprep.subr.mxu0 0.0
        %1983 = vmatpush2.msra.mxu0 0.0
        %1984 = vmatprep.subr.mxu0 0.0
        %1985 = vmatpush2.msra.mxu0 0.0
        %1986 = vmatprep.subr.mxu0 0.0
        %1987 = vmatpush2.msra.mxu0 0.0
        %1988 = vmatprep.subr.mxu0 0.0
        %1989 = vmatpush2.msra.mxu0 0.0
        %1990 = vmatprep.subr.mxu0 0.0
        %1991 = vmatpush2.msra.mxu0 0.0
        %1992 = vmatprep.mubr.f32.mxu0 0.0
        %v1993 = vand.u32 %v1895, 4294901760
        %v1994 = vsub.f32 %v1895, %v1993
        %v1995 = vand.u32 %v1994, 4294901760
        %v1996 = vsub.f32 %v1994, %v1995
        %v1997 = vand.u32 %v1996, 4294901760
        %1998 = vmatmul.mubr.f32.gmra.mxu0 %v1997
        %v1999 = vpop.f32.mrf.mxu0
        %v2000 = vadd.f32 0.0, %v1999
        %v2001 = vpop.f32.mrf.mxu0
        %2002 = vdwg.mxu0
        %2003 = vmatprep.subr.mxu0 0.0
        %v2004 = vand.u32 %v1911, 4294901760
        %v2005 = vsub.f32 %v1911, %v2004
        %v2006 = vand.u32 %v2005, 4294901760
        %v2007 = vsub.f32 %v2005, %v2006
        %v2008 = vand.u32 %v2007, 4294901760
        %2009 = vmatpush1.msra.mxu0 %v2008
        %2010 = vmatprep.subr.mxu0 0.0
        %v2011 = vand.u32 %v1910, 4294901760
        %v2012 = vsub.f32 %v1910, %v2011
        %v2013 = vand.u32 %v2012, 4294901760
        %v2014 = vsub.f32 %v2012, %v2013
        %v2015 = vand.u32 %v2014, 4294901760
        %2016 = vmatpush1.msra.mxu0 %v2015
        %2017 = vmatprep.subr.mxu0 0.0
        %v2018 = vand.u32 %v1909, 4294901760
        %v2019 = vsub.f32 %v1909, %v2018
        %v2020 = vand.u32 %v2019, 4294901760
        %v2021 = vsub.f32 %v2019, %v2020
        %v2022 = vand.u32 %v2021, 4294901760
        %2023 = vmatpush1.msra.mxu0 %v2022
        %2024 = vmatprep.subr.mxu0 0.0
        %v2025 = vand.u32 %v1908, 4294901760
        %v2026 = vsub.f32 %v1908, %v2025
        %v2027 = vand.u32 %v2026, 4294901760
        %v2028 = vsub.f32 %v2026, %v2027
        %v2029 = vand.u32 %v2028, 4294901760
        %2030 = vmatpush1.msra.mxu0 %v2029
        %2031 = vmatprep.subr.mxu0 0.0
        %v2032 = vand.u32 %v1907, 4294901760
        %v2033 = vsub.f32 %v1907, %v2032
        %v2034 = vand.u32 %v2033, 4294901760
        %v2035 = vsub.f32 %v2033, %v2034
        %v2036 = vand.u32 %v2035, 4294901760
        %2037 = vmatpush1.msra.mxu0 %v2036
        %2038 = vmatprep.subr.mxu0 0.0
        %v2039 = vand.u32 %v1906, 4294901760
        %v2040 = vsub.f32 %v1906, %v2039
        %v2041 = vand.u32 %v2040, 4294901760
        %v2042 = vsub.f32 %v2040, %v2041
        %v2043 = vand.u32 %v2042, 4294901760
        %2044 = vmatpush1.msra.mxu0 %v2043
        %2045 = vmatprep.subr.mxu0 0.0
        %v2046 = vand.u32 %v1905, 4294901760
        %v2047 = vsub.f32 %v1905, %v2046
        %v2048 = vand.u32 %v2047, 4294901760
        %v2049 = vsub.f32 %v2047, %v2048
        %v2050 = vand.u32 %v2049, 4294901760
        %2051 = vmatpush1.msra.mxu0 %v2050
        %2052 = vmatprep.subr.mxu0 0.0
        %v2053 = vand.u32 %v1904, 4294901760
        %v2054 = vsub.f32 %v1904, %v2053
        %v2055 = vand.u32 %v2054, 4294901760
        %v2056 = vsub.f32 %v2054, %v2055
        %v2057 = vand.u32 %v2056, 4294901760
        %2058 = vmatpush1.msra.mxu0 %v2057
        %2059 = vmatprep.subr.mxu0 0.0
        %v2060 = vand.u32 %v1903, 4294901760
        %v2061 = vsub.f32 %v1903, %v2060
        %v2062 = vand.u32 %v2061, 4294901760
        %v2063 = vsub.f32 %v2061, %v2062
        %v2064 = vand.u32 %v2063, 4294901760
        %2065 = vmatpush1.msra.mxu0 %v2064
        %2066 = vmatprep.subr.mxu0 0.0
        %v2067 = vand.u32 %v1902, 4294901760
        %v2068 = vsub.f32 %v1902, %v2067
        %v2069 = vand.u32 %v2068, 4294901760
        %v2070 = vsub.f32 %v2068, %v2069
        %v2071 = vand.u32 %v2070, 4294901760
        %2072 = vmatpush1.msra.mxu0 %v2071
        %2073 = vmatprep.subr.mxu0 0.0
        %v2074 = vand.u32 %v1901, 4294901760
        %v2075 = vsub.f32 %v1901, %v2074
        %v2076 = vand.u32 %v2075, 4294901760
        %v2077 = vsub.f32 %v2075, %v2076
        %v2078 = vand.u32 %v2077, 4294901760
        %2079 = vmatpush1.msra.mxu0 %v2078
        %2080 = vmatprep.subr.mxu0 0.0
        %v2081 = vand.u32 %v1900, 4294901760
        %v2082 = vsub.f32 %v1900, %v2081
        %v2083 = vand.u32 %v2082, 4294901760
        %v2084 = vsub.f32 %v2082, %v2083
        %v2085 = vand.u32 %v2084, 4294901760
        %2086 = vmatpush1.msra.mxu0 %v2085
        %2087 = vmatprep.subr.mxu0 0.0
        %v2088 = vand.u32 %v1899, 4294901760
        %v2089 = vsub.f32 %v1899, %v2088
        %v2090 = vand.u32 %v2089, 4294901760
        %v2091 = vsub.f32 %v2089, %v2090
        %v2092 = vand.u32 %v2091, 4294901760
        %2093 = vmatpush1.msra.mxu0 %v2092
        %2094 = vmatprep.subr.mxu0 0.0
        %v2095 = vand.u32 %v1898, 4294901760
        %v2096 = vsub.f32 %v1898, %v2095
        %v2097 = vand.u32 %v2096, 4294901760
        %v2098 = vsub.f32 %v2096, %v2097
        %v2099 = vand.u32 %v2098, 4294901760
        %2100 = vmatpush1.msra.mxu0 %v2099
        %2101 = vmatprep.subr.mxu0 0.0
        %v2102 = vand.u32 %v1897, 4294901760
        %v2103 = vsub.f32 %v1897, %v2102
        %v2104 = vand.u32 %v2103, 4294901760
        %v2105 = vsub.f32 %v2103, %v2104
        %v2106 = vand.u32 %v2105, 4294901760
        %2107 = vmatpush1.msra.mxu0 %v2106
        %2108 = vmatprep.subr.mxu0 0.0
        %v2109 = vand.u32 %v1896, 4294901760
        %v2110 = vsub.f32 %v1896, %v2109
        %v2111 = vand.u32 %v2110, 4294901760
        %v2112 = vsub.f32 %v2110, %v2111
        %v2113 = vand.u32 %v2112, 4294901760
        %2114 = vmatpush1.msra.mxu0 %v2113
        %2115 = vmatprep.subr.mxu0 0.0
        %2116 = vmatpush2.msra.mxu0 0.0
        %2117 = vmatprep.subr.mxu0 0.0
        %2118 = vmatpush2.msra.mxu0 0.0
        %2119 = vmatprep.subr.mxu0 0.0
        %2120 = vmatpush2.msra.mxu0 0.0
        %2121 = vmatprep.subr.mxu0 0.0
        %2122 = vmatpush2.msra.mxu0 0.0
        %2123 = vmatprep.subr.mxu0 0.0
        %2124 = vmatpush2.msra.mxu0 0.0
        %2125 = vmatprep.subr.mxu0 0.0
        %2126 = vmatpush2.msra.mxu0 0.0
        %2127 = vmatprep.subr.mxu0 0.0
        %2128 = vmatpush2.msra.mxu0 0.0
        %2129 = vmatprep.subr.mxu0 0.0
        %2130 = vmatpush2.msra.mxu0 0.0
        %2131 = vmatprep.subr.mxu0 0.0
        %2132 = vmatpush2.msra.mxu0 0.0
        %2133 = vmatprep.subr.mxu0 0.0
        %2134 = vmatpush2.msra.mxu0 0.0
        %2135 = vmatprep.subr.mxu0 0.0
        %2136 = vmatpush2.msra.mxu0 0.0
        %2137 = vmatprep.subr.mxu0 0.0
        %2138 = vmatpush2.msra.mxu0 0.0
        %2139 = vmatprep.subr.mxu0 0.0
        %2140 = vmatpush2.msra.mxu0 0.0
        %2141 = vmatprep.subr.mxu0 0.0
        %2142 = vmatpush2.msra.mxu0 0.0
        %2143 = vmatprep.subr.mxu0 0.0
        %2144 = vmatpush2.msra.mxu0 0.0
        %2145 = vmatprep.subr.mxu0 0.0
        %2146 = vmatpush2.msra.mxu0 0.0
        %2147 = vmatprep.mubr.f32.mxu0 0.0
        %v2148 = vand.u32 %v1895, 4294901760
        %2149 = vmatmul.mubr.f32.gmra.mxu0 %v2148
        %v2150 = vpop.f32.mrf.mxu0
        %v2151 = vadd.f32 %v2000, %v2150
        %v2152 = vpop.f32.mrf.mxu0
        %2153 = vdwg.mxu0
        %2154 = vmatprep.subr.mxu0 0.0
        %v2155 = vand.u32 %v1911, 4294901760
        %v2156 = vsub.f32 %v1911, %v2155
        %2157 = vmatpush1.msra.mxu0 %v2156
        %2158 = vmatprep.subr.mxu0 0.0
        %v2159 = vand.u32 %v1910, 4294901760
        %v2160 = vsub.f32 %v1910, %v2159
        %2161 = vmatpush1.msra.mxu0 %v2160
        %2162 = vmatprep.subr.mxu0 0.0
        %v2163 = vand.u32 %v1909, 4294901760
        %v2164 = vsub.f32 %v1909, %v2163
        %2165 = vmatpush1.msra.mxu0 %v2164
        %2166 = vmatprep.subr.mxu0 0.0
        %v2167 = vand.u32 %v1908, 4294901760
        %v2168 = vsub.f32 %v1908, %v2167
        %2169 = vmatpush1.msra.mxu0 %v2168
        %2170 = vmatprep.subr.mxu0 0.0
        %v2171 = vand.u32 %v1907, 4294901760
        %v2172 = vsub.f32 %v1907, %v2171
        %2173 = vmatpush1.msra.mxu0 %v2172
        %2174 = vmatprep.subr.mxu0 0.0
        %v2175 = vand.u32 %v1906, 4294901760
        %v2176 = vsub.f32 %v1906, %v2175
        %2177 = vmatpush1.msra.mxu0 %v2176
        %2178 = vmatprep.subr.mxu0 0.0
        %v2179 = vand.u32 %v1905, 4294901760
        %v2180 = vsub.f32 %v1905, %v2179
        %2181 = vmatpush1.msra.mxu0 %v2180
        %2182 = vmatprep.subr.mxu0 0.0
        %v2183 = vand.u32 %v1904, 4294901760
        %v2184 = vsub.f32 %v1904, %v2183
        %2185 = vmatpush1.msra.mxu0 %v2184
        %2186 = vmatprep.subr.mxu0 0.0
        %v2187 = vand.u32 %v1903, 4294901760
        %v2188 = vsub.f32 %v1903, %v2187
        %2189 = vmatpush1.msra.mxu0 %v2188
        %2190 = vmatprep.subr.mxu0 0.0
        %v2191 = vand.u32 %v1902, 4294901760
        %v2192 = vsub.f32 %v1902, %v2191
        %2193 = vmatpush1.msra.mxu0 %v2192
        %2194 = vmatprep.subr.mxu0 0.0
        %v2195 = vand.u32 %v1901, 4294901760
        %v2196 = vsub.f32 %v1901, %v2195
        %2197 = vmatpush1.msra.mxu0 %v2196
        %2198 = vmatprep.subr.mxu0 0.0
        %v2199 = vand.u32 %v1900, 4294901760
        %v2200 = vsub.f32 %v1900, %v2199
        %2201 = vmatpush1.msra.mxu0 %v2200
        %2202 = vmatprep.subr.mxu0 0.0
        %v2203 = vand.u32 %v1899, 4294901760
        %v2204 = vsub.f32 %v1899, %v2203
        %2205 = vmatpush1.msra.mxu0 %v2204
        %2206 = vmatprep.subr.mxu0 0.0
        %v2207 = vand.u32 %v1898, 4294901760
        %v2208 = vsub.f32 %v1898, %v2207
        %2209 = vmatpush1.msra.mxu0 %v2208
        %2210 = vmatprep.subr.mxu0 0.0
        %v2211 = vand.u32 %v1897, 4294901760
        %v2212 = vsub.f32 %v1897, %v2211
        %2213 = vmatpush1.msra.mxu0 %v2212
        %2214 = vmatprep.subr.mxu0 0.0
        %v2215 = vand.u32 %v1896, 4294901760
        %v2216 = vsub.f32 %v1896, %v2215
        %2217 = vmatpush1.msra.mxu0 %v2216
        %2218 = vmatprep.subr.mxu0 0.0
        %2219 = vmatpush2.msra.mxu0 0.0
        %2220 = vmatprep.subr.mxu0 0.0
        %2221 = vmatpush2.msra.mxu0 0.0
        %2222 = vmatprep.subr.mxu0 0.0
        %2223 = vmatpush2.msra.mxu0 0.0
        %2224 = vmatprep.subr.mxu0 0.0
        %2225 = vmatpush2.msra.mxu0 0.0
        %2226 = vmatprep.subr.mxu0 0.0
        %2227 = vmatpush2.msra.mxu0 0.0
        %2228 = vmatprep.subr.mxu0 0.0
        %2229 = vmatpush2.msra.mxu0 0.0
        %2230 = vmatprep.subr.mxu0 0.0
        %2231 = vmatpush2.msra.mxu0 0.0
        %2232 = vmatprep.subr.mxu0 0.0
        %2233 = vmatpush2.msra.mxu0 0.0
        %2234 = vmatprep.subr.mxu0 0.0
        %2235 = vmatpush2.msra.mxu0 0.0
        %2236 = vmatprep.subr.mxu0 0.0
        %2237 = vmatpush2.msra.mxu0 0.0
        %2238 = vmatprep.subr.mxu0 0.0
        %2239 = vmatpush2.msra.mxu0 0.0
        %2240 = vmatprep.subr.mxu0 0.0
        %2241 = vmatpush2.msra.mxu0 0.0
        %2242 = vmatprep.subr.mxu0 0.0
        %2243 = vmatpush2.msra.mxu0 0.0
        %2244 = vmatprep.subr.mxu0 0.0
        %2245 = vmatpush2.msra.mxu0 0.0
        %2246 = vmatprep.subr.mxu0 0.0
        %2247 = vmatpush2.msra.mxu0 0.0
        %2248 = vmatprep.subr.mxu0 0.0
        %2249 = vmatpush2.msra.mxu0 0.0
        %2250 = vmatprep.mubr.f32.mxu0 0.0
        %v2251 = vand.u32 %v1895, 4294901760
        %v2252 = vsub.f32 %v1895, %v2251
        %2253 = vmatmul.mubr.f32.gmra.mxu0 %v2252
        %v2254 = vpop.f32.mrf.mxu0
        %v2255 = vadd.f32 %v2151, %v2254
        %v2256 = vpop.f32.mrf.mxu0
        %2257 = vdwg.mxu0
        %2258 = vmatprep.subr.mxu0 0.0
        %v2259 = vand.u32 %v1911, 4294901760
        %2260 = vmatpush1.msra.mxu0 %v2259
        %2261 = vmatprep.subr.mxu0 0.0
        %v2262 = vand.u32 %v1910, 4294901760
        %2263 = vmatpush1.msra.mxu0 %v2262
        %2264 = vmatprep.subr.mxu0 0.0
        %v2265 = vand.u32 %v1909, 4294901760
        %2266 = vmatpush1.msra.mxu0 %v2265
        %2267 = vmatprep.subr.mxu0 0.0
        %v2268 = vand.u32 %v1908, 4294901760
        %2269 = vmatpush1.msra.mxu0 %v2268
        %2270 = vmatprep.subr.mxu0 0.0
        %v2271 = vand.u32 %v1907, 4294901760
        %2272 = vmatpush1.msra.mxu0 %v2271
        %2273 = vmatprep.subr.mxu0 0.0
        %v2274 = vand.u32 %v1906, 4294901760
        %2275 = vmatpush1.msra.mxu0 %v2274
        %2276 = vmatprep.subr.mxu0 0.0
        %v2277 = vand.u32 %v1905, 4294901760
        %2278 = vmatpush1.msra.mxu0 %v2277
        %2279 = vmatprep.subr.mxu0 0.0
        %v2280 = vand.u32 %v1904, 4294901760
        %2281 = vmatpush1.msra.mxu0 %v2280
        %2282 = vmatprep.subr.mxu0 0.0
        %v2283 = vand.u32 %v1903, 4294901760
        %2284 = vmatpush1.msra.mxu0 %v2283
        %2285 = vmatprep.subr.mxu0 0.0
        %v2286 = vand.u32 %v1902, 4294901760
        %2287 = vmatpush1.msra.mxu0 %v2286
        %2288 = vmatprep.subr.mxu0 0.0
        %v2289 = vand.u32 %v1901, 4294901760
        %2290 = vmatpush1.msra.mxu0 %v2289
        %2291 = vmatprep.subr.mxu0 0.0
        %v2292 = vand.u32 %v1900, 4294901760
        %2293 = vmatpush1.msra.mxu0 %v2292
        %2294 = vmatprep.subr.mxu0 0.0
        %v2295 = vand.u32 %v1899, 4294901760
        %2296 = vmatpush1.msra.mxu0 %v2295
        %2297 = vmatprep.subr.mxu0 0.0
        %v2298 = vand.u32 %v1898, 4294901760
        %2299 = vmatpush1.msra.mxu0 %v2298
        %2300 = vmatprep.subr.mxu0 0.0
        %v2301 = vand.u32 %v1897, 4294901760
        %2302 = vmatpush1.msra.mxu0 %v2301
        %2303 = vmatprep.subr.mxu0 0.0
        %v2304 = vand.u32 %v1896, 4294901760
        %2305 = vmatpush1.msra.mxu0 %v2304
        %2306 = vmatprep.subr.mxu0 0.0
        %2307 = vmatpush2.msra.mxu0 0.0
        %2308 = vmatprep.subr.mxu0 0.0
        %2309 = vmatpush2.msra.mxu0 0.0
        %2310 = vmatprep.subr.mxu0 0.0
        %2311 = vmatpush2.msra.mxu0 0.0
        %2312 = vmatprep.subr.mxu0 0.0
        %2313 = vmatpush2.msra.mxu0 0.0
        %2314 = vmatprep.subr.mxu0 0.0
        %2315 = vmatpush2.msra.mxu0 0.0
        %2316 = vmatprep.subr.mxu0 0.0
        %2317 = vmatpush2.msra.mxu0 0.0
        %2318 = vmatprep.subr.mxu0 0.0
        %2319 = vmatpush2.msra.mxu0 0.0
        %2320 = vmatprep.subr.mxu0 0.0
        %2321 = vmatpush2.msra.mxu0 0.0
        %2322 = vmatprep.subr.mxu0 0.0
        %2323 = vmatpush2.msra.mxu0 0.0
        %2324 = vmatprep.subr.mxu0 0.0
        %2325 = vmatpush2.msra.mxu0 0.0
        %2326 = vmatprep.subr.mxu0 0.0
        %2327 = vmatpush2.msra.mxu0 0.0
        %2328 = vmatprep.subr.mxu0 0.0
        %2329 = vmatpush2.msra.mxu0 0.0
        %2330 = vmatprep.subr.mxu0 0.0
        %2331 = vmatpush2.msra.mxu0 0.0
        %2332 = vmatprep.subr.mxu0 0.0
        %2333 = vmatpush2.msra.mxu0 0.0
        %2334 = vmatprep.subr.mxu0 0.0
        %2335 = vmatpush2.msra.mxu0 0.0
        %2336 = vmatprep.subr.mxu0 0.0
        %2337 = vmatpush2.msra.mxu0 0.0
        %2338 = vmatprep.mubr.f32.mxu0 0.0
        %v2339 = vand.u32 %v1895, 4294901760
        %v2340 = vsub.f32 %v1895, %v2339
        %v2341 = vand.u32 %v2340, 4294901760
        %2342 = vmatmul.mubr.f32.gmra.mxu0 %v2341
        %v2343 = vpop.f32.mrf.mxu0
        %v2344 = vadd.f32 %v2255, %v2343
        %v2345 = vpop.f32.mrf.mxu0
        %2346 = vdwg.mxu0
        %2347 = vmatprep.subr.mxu0 0.0
        %v2348 = vand.u32 %v1911, 4294901760
        %v2349 = vsub.f32 %v1911, %v2348
        %v2350 = vand.u32 %v2349, 4294901760
        %2351 = vmatpush1.msra.mxu0 %v2350
        %2352 = vmatprep.subr.mxu0 0.0
        %v2353 = vand.u32 %v1910, 4294901760
        %v2354 = vsub.f32 %v1910, %v2353
        %v2355 = vand.u32 %v2354, 4294901760
        %2356 = vmatpush1.msra.mxu0 %v2355
        %2357 = vmatprep.subr.mxu0 0.0
        %v2358 = vand.u32 %v1909, 4294901760
        %v2359 = vsub.f32 %v1909, %v2358
        %v2360 = vand.u32 %v2359, 4294901760
        %2361 = vmatpush1.msra.mxu0 %v2360
        %2362 = vmatprep.subr.mxu0 0.0
        %v2363 = vand.u32 %v1908, 4294901760
        %v2364 = vsub.f32 %v1908, %v2363
        %v2365 = vand.u32 %v2364, 4294901760
        %2366 = vmatpush1.msra.mxu0 %v2365
        %2367 = vmatprep.subr.mxu0 0.0
        %v2368 = vand.u32 %v1907, 4294901760
        %v2369 = vsub.f32 %v1907, %v2368
        %v2370 = vand.u32 %v2369, 4294901760
        %2371 = vmatpush1.msra.mxu0 %v2370
        %2372 = vmatprep.subr.mxu0 0.0
        %v2373 = vand.u32 %v1906, 4294901760
        %v2374 = vsub.f32 %v1906, %v2373
        %v2375 = vand.u32 %v2374, 4294901760
        %2376 = vmatpush1.msra.mxu0 %v2375
        %2377 = vmatprep.subr.mxu0 0.0
        %v2378 = vand.u32 %v1905, 4294901760
        %v2379 = vsub.f32 %v1905, %v2378
        %v2380 = vand.u32 %v2379, 4294901760
        %2381 = vmatpush1.msra.mxu0 %v2380
        %2382 = vmatprep.subr.mxu0 0.0
        %v2383 = vand.u32 %v1904, 4294901760
        %v2384 = vsub.f32 %v1904, %v2383
        %v2385 = vand.u32 %v2384, 4294901760
        %2386 = vmatpush1.msra.mxu0 %v2385
        %2387 = vmatprep.subr.mxu0 0.0
        %v2388 = vand.u32 %v1903, 4294901760
        %v2389 = vsub.f32 %v1903, %v2388
        %v2390 = vand.u32 %v2389, 4294901760
        %2391 = vmatpush1.msra.mxu0 %v2390
        %2392 = vmatprep.subr.mxu0 0.0
        %v2393 = vand.u32 %v1902, 4294901760
        %v2394 = vsub.f32 %v1902, %v2393
        %v2395 = vand.u32 %v2394, 4294901760
        %2396 = vmatpush1.msra.mxu0 %v2395
        %2397 = vmatprep.subr.mxu0 0.0
        %v2398 = vand.u32 %v1901, 4294901760
        %v2399 = vsub.f32 %v1901, %v2398
        %v2400 = vand.u32 %v2399, 4294901760
        %2401 = vmatpush1.msra.mxu0 %v2400
        %2402 = vmatprep.subr.mxu0 0.0
        %v2403 = vand.u32 %v1900, 4294901760
        %v2404 = vsub.f32 %v1900, %v2403
        %v2405 = vand.u32 %v2404, 4294901760
        %2406 = vmatpush1.msra.mxu0 %v2405
        %2407 = vmatprep.subr.mxu0 0.0
        %v2408 = vand.u32 %v1899, 4294901760
        %v2409 = vsub.f32 %v1899, %v2408
        %v2410 = vand.u32 %v2409, 4294901760
        %2411 = vmatpush1.msra.mxu0 %v2410
        %2412 = vmatprep.subr.mxu0 0.0
        %v2413 = vand.u32 %v1898, 4294901760
        %v2414 = vsub.f32 %v1898, %v2413
        %v2415 = vand.u32 %v2414, 4294901760
        %2416 = vmatpush1.msra.mxu0 %v2415
        %2417 = vmatprep.subr.mxu0 0.0
        %v2418 = vand.u32 %v1897, 4294901760
        %v2419 = vsub.f32 %v1897, %v2418
        %v2420 = vand.u32 %v2419, 4294901760
        %2421 = vmatpush1.msra.mxu0 %v2420
        %2422 = vmatprep.subr.mxu0 0.0
        %v2423 = vand.u32 %v1896, 4294901760
        %v2424 = vsub.f32 %v1896, %v2423
        %v2425 = vand.u32 %v2424, 4294901760
        %2426 = vmatpush1.msra.mxu0 %v2425
        %2427 = vmatprep.subr.mxu0 0.0
        %2428 = vmatpush2.msra.mxu0 0.0
        %2429 = vmatprep.subr.mxu0 0.0
        %2430 = vmatpush2.msra.mxu0 0.0
        %2431 = vmatprep.subr.mxu0 0.0
        %2432 = vmatpush2.msra.mxu0 0.0
        %2433 = vmatprep.subr.mxu0 0.0
        %2434 = vmatpush2.msra.mxu0 0.0
        %2435 = vmatprep.subr.mxu0 0.0
        %2436 = vmatpush2.msra.mxu0 0.0
        %2437 = vmatprep.subr.mxu0 0.0
        %2438 = vmatpush2.msra.mxu0 0.0
        %2439 = vmatprep.subr.mxu0 0.0
        %2440 = vmatpush2.msra.mxu0 0.0
        %2441 = vmatprep.subr.mxu0 0.0
        %2442 = vmatpush2.msra.mxu0 0.0
        %2443 = vmatprep.subr.mxu0 0.0
        %2444 = vmatpush2.msra.mxu0 0.0
        %2445 = vmatprep.subr.mxu0 0.0
        %2446 = vmatpush2.msra.mxu0 0.0
        %2447 = vmatprep.subr.mxu0 0.0
        %2448 = vmatpush2.msra.mxu0 0.0
        %2449 = vmatprep.subr.mxu0 0.0
        %2450 = vmatpush2.msra.mxu0 0.0
        %2451 = vmatprep.subr.mxu0 0.0
        %2452 = vmatpush2.msra.mxu0 0.0
        %2453 = vmatprep.subr.mxu0 0.0
        %2454 = vmatpush2.msra.mxu0 0.0
        %2455 = vmatprep.subr.mxu0 0.0
        %2456 = vmatpush2.msra.mxu0 0.0
        %2457 = vmatprep.subr.mxu0 0.0
        %2458 = vmatpush2.msra.mxu0 0.0
        %2459 = vmatprep.mubr.f32.mxu0 0.0
        %v2460 = vand.u32 %v1895, 4294901760
        %2461 = vmatmul.mubr.f32.gmra.mxu0 %v2460
        %v2462 = vpop.f32.mrf.mxu0
        %v2463 = vadd.f32 %v2344, %v2462
        %v2464 = vpop.f32.mrf.mxu0
        %2465 = vdwg.mxu0
        %2466 = vmatprep.subr.mxu0 0.0
        %v2467 = vand.u32 %v1911, 4294901760
        %2468 = vmatpush1.msra.mxu0 %v2467
        %2469 = vmatprep.subr.mxu0 0.0
        %v2470 = vand.u32 %v1910, 4294901760
        %2471 = vmatpush1.msra.mxu0 %v2470
        %2472 = vmatprep.subr.mxu0 0.0
        %v2473 = vand.u32 %v1909, 4294901760
        %2474 = vmatpush1.msra.mxu0 %v2473
        %2475 = vmatprep.subr.mxu0 0.0
        %v2476 = vand.u32 %v1908, 4294901760
        %2477 = vmatpush1.msra.mxu0 %v2476
        %2478 = vmatprep.subr.mxu0 0.0
        %v2479 = vand.u32 %v1907, 4294901760
        %2480 = vmatpush1.msra.mxu0 %v2479
        %2481 = vmatprep.subr.mxu0 0.0
        %v2482 = vand.u32 %v1906, 4294901760
        %2483 = vmatpush1.msra.mxu0 %v2482
        %2484 = vmatprep.subr.mxu0 0.0
        %v2485 = vand.u32 %v1905, 4294901760
        %2486 = vmatpush1.msra.mxu0 %v2485
        %2487 = vmatprep.subr.mxu0 0.0
        %v2488 = vand.u32 %v1904, 4294901760
        %2489 = vmatpush1.msra.mxu0 %v2488
        %2490 = vmatprep.subr.mxu0 0.0
        %v2491 = vand.u32 %v1903, 4294901760
        %2492 = vmatpush1.msra.mxu0 %v2491
        %2493 = vmatprep.subr.mxu0 0.0
        %v2494 = vand.u32 %v1902, 4294901760
        %2495 = vmatpush1.msra.mxu0 %v2494
        %2496 = vmatprep.subr.mxu0 0.0
        %v2497 = vand.u32 %v1901, 4294901760
        %2498 = vmatpush1.msra.mxu0 %v2497
        %2499 = vmatprep.subr.mxu0 0.0
        %v2500 = vand.u32 %v1900, 4294901760
        %2501 = vmatpush1.msra.mxu0 %v2500
        %2502 = vmatprep.subr.mxu0 0.0
        %v2503 = vand.u32 %v1899, 4294901760
        %2504 = vmatpush1.msra.mxu0 %v2503
        %2505 = vmatprep.subr.mxu0 0.0
        %v2506 = vand.u32 %v1898, 4294901760
        %2507 = vmatpush1.msra.mxu0 %v2506
        %2508 = vmatprep.subr.mxu0 0.0
        %v2509 = vand.u32 %v1897, 4294901760
        %2510 = vmatpush1.msra.mxu0 %v2509
        %2511 = vmatprep.subr.mxu0 0.0
        %v2512 = vand.u32 %v1896, 4294901760
        %2513 = vmatpush1.msra.mxu0 %v2512
        %2514 = vmatprep.subr.mxu0 0.0
        %2515 = vmatpush2.msra.mxu0 0.0
        %2516 = vmatprep.subr.mxu0 0.0
        %2517 = vmatpush2.msra.mxu0 0.0
        %2518 = vmatprep.subr.mxu0 0.0
        %2519 = vmatpush2.msra.mxu0 0.0
        %2520 = vmatprep.subr.mxu0 0.0
        %2521 = vmatpush2.msra.mxu0 0.0
        %2522 = vmatprep.subr.mxu0 0.0
        %2523 = vmatpush2.msra.mxu0 0.0
        %2524 = vmatprep.subr.mxu0 0.0
        %2525 = vmatpush2.msra.mxu0 0.0
        %2526 = vmatprep.subr.mxu0 0.0
        %2527 = vmatpush2.msra.mxu0 0.0
        %2528 = vmatprep.subr.mxu0 0.0
        %2529 = vmatpush2.msra.mxu0 0.0
        %2530 = vmatprep.subr.mxu0 0.0
        %2531 = vmatpush2.msra.mxu0 0.0
        %2532 = vmatprep.subr.mxu0 0.0
        %2533 = vmatpush2.msra.mxu0 0.0
        %2534 = vmatprep.subr.mxu0 0.0
        %2535 = vmatpush2.msra.mxu0 0.0
        %2536 = vmatprep.subr.mxu0 0.0
        %2537 = vmatpush2.msra.mxu0 0.0
        %2538 = vmatprep.subr.mxu0 0.0
        %2539 = vmatpush2.msra.mxu0 0.0
        %2540 = vmatprep.subr.mxu0 0.0
        %2541 = vmatpush2.msra.mxu0 0.0
        %2542 = vmatprep.subr.mxu0 0.0
        %2543 = vmatpush2.msra.mxu0 0.0
        %2544 = vmatprep.subr.mxu0 0.0
        %2545 = vmatpush2.msra.mxu0 0.0
        %2546 = vmatprep.mubr.f32.mxu0 0.0
        %v2547 = vand.u32 %v1895, 4294901760
        %2548 = vmatmul.mubr.f32.gmra.mxu0 %v2547
        %v2549 = vpop.f32.mrf.mxu0
        %v2550 = vadd.f32 %v2463, %v2549
        %v2551 = vpop.f32.mrf.mxu0
        %2552 = vdwg.mxu0
        %2553 = vmatprep.subr.mxu0 0.0
        %2554 = vmatpush1.msra.mxu0 0.0
        %2555 = vmatprep.subr.mxu0 0.0
        %2556 = vmatpush1.msra.mxu0 0.0
        %2557 = vmatprep.subr.mxu0 0.0
        %2558 = vmatpush1.msra.mxu0 0.0
        %2559 = vmatprep.subr.mxu0 0.0
        %2560 = vmatpush1.msra.mxu0 0.0
        %2561 = vmatprep.subr.mxu0 0.0
        %2562 = vmatpush1.msra.mxu0 0.0
        %2563 = vmatprep.subr.mxu0 0.0
        %2564 = vmatpush1.msra.mxu0 0.0
        %2565 = vmatprep.subr.mxu0 0.0
        %2566 = vmatpush1.msra.mxu0 0.0
        %2567 = vmatprep.subr.mxu0 0.0
        %2568 = vmatpush1.msra.mxu0 0.0
        %2569 = vmatprep.subr.mxu0 0.0
        %2570 = vmatpush1.msra.mxu0 0.0
        %2571 = vmatprep.subr.mxu0 0.0
        %2572 = vmatpush1.msra.mxu0 0.0
        %2573 = vmatprep.subr.mxu0 0.0
        %2574 = vmatpush1.msra.mxu0 0.0
        %2575 = vmatprep.subr.mxu0 0.0
        %2576 = vmatpush1.msra.mxu0 0.0
        %2577 = vmatprep.subr.mxu0 0.0
        %2578 = vmatpush1.msra.mxu0 0.0
        %2579 = vmatprep.subr.mxu0 0.0
        %2580 = vmatpush1.msra.mxu0 0.0
        %2581 = vmatprep.subr.mxu0 0.0
        %2582 = vmatpush1.msra.mxu0 0.0
        %2583 = vmatprep.subr.mxu0 0.0
        %v2584 = vand.u32 %v2550, 4294901760
        %2585 = vmatpush1.msra.mxu0 %v2584
        %2586 = vmatprep.subr.mxu0 0.0
        %2587 = vmatpush2.msra.mxu0 0.0
        %2588 = vmatprep.subr.mxu0 0.0
        %2589 = vmatpush2.msra.mxu0 0.0
        %2590 = vmatprep.subr.mxu0 0.0
        %2591 = vmatpush2.msra.mxu0 0.0
        %2592 = vmatprep.subr.mxu0 0.0
        %2593 = vmatpush2.msra.mxu0 0.0
        %2594 = vmatprep.subr.mxu0 0.0
        %2595 = vmatpush2.msra.mxu0 0.0
        %2596 = vmatprep.subr.mxu0 0.0
        %2597 = vmatpush2.msra.mxu0 0.0
        %2598 = vmatprep.subr.mxu0 0.0
        %2599 = vmatpush2.msra.mxu0 0.0
        %2600 = vmatprep.subr.mxu0 0.0
        %2601 = vmatpush2.msra.mxu0 0.0
        %2602 = vmatprep.subr.mxu0 0.0
        %2603 = vmatpush2.msra.mxu0 0.0
        %2604 = vmatprep.subr.mxu0 0.0
        %2605 = vmatpush2.msra.mxu0 0.0
        %2606 = vmatprep.subr.mxu0 0.0
        %2607 = vmatpush2.msra.mxu0 0.0
        %2608 = vmatprep.subr.mxu0 0.0
        %2609 = vmatpush2.msra.mxu0 0.0
        %2610 = vmatprep.subr.mxu0 0.0
        %2611 = vmatpush2.msra.mxu0 0.0
        %2612 = vmatprep.subr.mxu0 0.0
        %2613 = vmatpush2.msra.mxu0 0.0
        %2614 = vmatprep.subr.mxu0 0.0
        %2615 = vmatpush2.msra.mxu0 0.0
        %2616 = vmatprep.subr.mxu0 0.0
        %2617 = vmatpush2.msra.mxu0 0.0
        %2618 = vmatprep.mubr.f32.mxu0 0.0
        %v2619 = vand.u32 %v980, 4294901760
        %v2620 = vsub.f32 %v980, %v2619
        %v2621 = vand.u32 %v2620, 4294901760
        %v2622 = vsub.f32 %v2620, %v2621
        %v2623 = vand.u32 %v2622, 4294901760
        %2624 = vmatmul.mubr.f32.gmra.mxu0 %v2623
        %v2625 = vpop.f32.mrf.mxu0
        %v2626 = vadd.f32 0.0, %v2625
        %v2627 = vpop.f32.mrf.mxu0
        %2628 = vdwg.mxu0
        %2629 = vmatprep.subr.mxu0 0.0
        %2630 = vmatpush1.msra.mxu0 0.0
        %2631 = vmatprep.subr.mxu0 0.0
        %2632 = vmatpush1.msra.mxu0 0.0
        %2633 = vmatprep.subr.mxu0 0.0
        %2634 = vmatpush1.msra.mxu0 0.0
        %2635 = vmatprep.subr.mxu0 0.0
        %2636 = vmatpush1.msra.mxu0 0.0
        %2637 = vmatprep.subr.mxu0 0.0
        %2638 = vmatpush1.msra.mxu0 0.0
        %2639 = vmatprep.subr.mxu0 0.0
        %2640 = vmatpush1.msra.mxu0 0.0
        %2641 = vmatprep.subr.mxu0 0.0
        %2642 = vmatpush1.msra.mxu0 0.0
        %2643 = vmatprep.subr.mxu0 0.0
        %2644 = vmatpush1.msra.mxu0 0.0
        %2645 = vmatprep.subr.mxu0 0.0
        %2646 = vmatpush1.msra.mxu0 0.0
        %2647 = vmatprep.subr.mxu0 0.0
        %2648 = vmatpush1.msra.mxu0 0.0
        %2649 = vmatprep.subr.mxu0 0.0
        %2650 = vmatpush1.msra.mxu0 0.0
        %2651 = vmatprep.subr.mxu0 0.0
        %2652 = vmatpush1.msra.mxu0 0.0
        %2653 = vmatprep.subr.mxu0 0.0
        %2654 = vmatpush1.msra.mxu0 0.0
        %2655 = vmatprep.subr.mxu0 0.0
        %2656 = vmatpush1.msra.mxu0 0.0
        %2657 = vmatprep.subr.mxu0 0.0
        %2658 = vmatpush1.msra.mxu0 0.0
        %2659 = vmatprep.subr.mxu0 0.0
        %v2660 = vand.u32 %v2550, 4294901760
        %v2661 = vsub.f32 %v2550, %v2660
        %v2662 = vand.u32 %v2661, 4294901760
        %v2663 = vsub.f32 %v2661, %v2662
        %v2664 = vand.u32 %v2663, 4294901760
        %2665 = vmatpush1.msra.mxu0 %v2664
        %2666 = vmatprep.subr.mxu0 0.0
        %2667 = vmatpush2.msra.mxu0 0.0
        %2668 = vmatprep.subr.mxu0 0.0
        %2669 = vmatpush2.msra.mxu0 0.0
        %2670 = vmatprep.subr.mxu0 0.0
        %2671 = vmatpush2.msra.mxu0 0.0
        %2672 = vmatprep.subr.mxu0 0.0
        %2673 = vmatpush2.msra.mxu0 0.0
        %2674 = vmatprep.subr.mxu0 0.0
        %2675 = vmatpush2.msra.mxu0 0.0
        %2676 = vmatprep.subr.mxu0 0.0
        %2677 = vmatpush2.msra.mxu0 0.0
        %2678 = vmatprep.subr.mxu0 0.0
        %2679 = vmatpush2.msra.mxu0 0.0
        %2680 = vmatprep.subr.mxu0 0.0
        %2681 = vmatpush2.msra.mxu0 0.0
        %2682 = vmatprep.subr.mxu0 0.0
        %2683 = vmatpush2.msra.mxu0 0.0
        %2684 = vmatprep.subr.mxu0 0.0
        %2685 = vmatpush2.msra.mxu0 0.0
        %2686 = vmatprep.subr.mxu0 0.0
        %2687 = vmatpush2.msra.mxu0 0.0
        %2688 = vmatprep.subr.mxu0 0.0
        %2689 = vmatpush2.msra.mxu0 0.0
        %2690 = vmatprep.subr.mxu0 0.0
        %2691 = vmatpush2.msra.mxu0 0.0
        %2692 = vmatprep.subr.mxu0 0.0
        %2693 = vmatpush2.msra.mxu0 0.0
        %2694 = vmatprep.subr.mxu0 0.0
        %2695 = vmatpush2.msra.mxu0 0.0
        %2696 = vmatprep.subr.mxu0 0.0
        %2697 = vmatpush2.msra.mxu0 0.0
        %2698 = vmatprep.mubr.f32.mxu0 0.0
        %v2699 = vand.u32 %v980, 4294901760
        %2700 = vmatmul.mubr.f32.gmra.mxu0 %v2699
        %v2701 = vpop.f32.mrf.mxu0
        %v2702 = vadd.f32 %v2626, %v2701
        %v2703 = vpop.f32.mrf.mxu0
        %2704 = vdwg.mxu0
        %2705 = vmatprep.subr.mxu0 0.0
        %2706 = vmatpush1.msra.mxu0 0.0
        %2707 = vmatprep.subr.mxu0 0.0
        %2708 = vmatpush1.msra.mxu0 0.0
        %2709 = vmatprep.subr.mxu0 0.0
        %2710 = vmatpush1.msra.mxu0 0.0
        %2711 = vmatprep.subr.mxu0 0.0
        %2712 = vmatpush1.msra.mxu0 0.0
        %2713 = vmatprep.subr.mxu0 0.0
        %2714 = vmatpush1.msra.mxu0 0.0
        %2715 = vmatprep.subr.mxu0 0.0
        %2716 = vmatpush1.msra.mxu0 0.0
        %2717 = vmatprep.subr.mxu0 0.0
        %2718 = vmatpush1.msra.mxu0 0.0
        %2719 = vmatprep.subr.mxu0 0.0
        %2720 = vmatpush1.msra.mxu0 0.0
        %2721 = vmatprep.subr.mxu0 0.0
        %2722 = vmatpush1.msra.mxu0 0.0
        %2723 = vmatprep.subr.mxu0 0.0
        %2724 = vmatpush1.msra.mxu0 0.0
        %2725 = vmatprep.subr.mxu0 0.0
        %2726 = vmatpush1.msra.mxu0 0.0
        %2727 = vmatprep.subr.mxu0 0.0
        %2728 = vmatpush1.msra.mxu0 0.0
        %2729 = vmatprep.subr.mxu0 0.0
        %2730 = vmatpush1.msra.mxu0 0.0
        %2731 = vmatprep.subr.mxu0 0.0
        %2732 = vmatpush1.msra.mxu0 0.0
        %2733 = vmatprep.subr.mxu0 0.0
        %2734 = vmatpush1.msra.mxu0 0.0
        %2735 = vmatprep.subr.mxu0 0.0
        %v2736 = vand.u32 %v2550, 4294901760
        %v2737 = vsub.f32 %v2550, %v2736
        %2738 = vmatpush1.msra.mxu0 %v2737
        %2739 = vmatprep.subr.mxu0 0.0
        %2740 = vmatpush2.msra.mxu0 0.0
        %2741 = vmatprep.subr.mxu0 0.0
        %2742 = vmatpush2.msra.mxu0 0.0
        %2743 = vmatprep.subr.mxu0 0.0
        %2744 = vmatpush2.msra.mxu0 0.0
        %2745 = vmatprep.subr.mxu0 0.0
        %2746 = vmatpush2.msra.mxu0 0.0
        %2747 = vmatprep.subr.mxu0 0.0
        %2748 = vmatpush2.msra.mxu0 0.0
        %2749 = vmatprep.subr.mxu0 0.0
        %2750 = vmatpush2.msra.mxu0 0.0
        %2751 = vmatprep.subr.mxu0 0.0
        %2752 = vmatpush2.msra.mxu0 0.0
        %2753 = vmatprep.subr.mxu0 0.0
        %2754 = vmatpush2.msra.mxu0 0.0
        %2755 = vmatprep.subr.mxu0 0.0
        %2756 = vmatpush2.msra.mxu0 0.0
        %2757 = vmatprep.subr.mxu0 0.0
        %2758 = vmatpush2.msra.mxu0 0.0
        %2759 = vmatprep.subr.mxu0 0.0
        %2760 = vmatpush2.msra.mxu0 0.0
        %2761 = vmatprep.subr.mxu0 0.0
        %2762 = vmatpush2.msra.mxu0 0.0
        %2763 = vmatprep.subr.mxu0 0.0
        %2764 = vmatpush2.msra.mxu0 0.0
        %2765 = vmatprep.subr.mxu0 0.0
        %2766 = vmatpush2.msra.mxu0 0.0
        %2767 = vmatprep.subr.mxu0 0.0
        %2768 = vmatpush2.msra.mxu0 0.0
        %2769 = vmatprep.subr.mxu0 0.0
        %2770 = vmatpush2.msra.mxu0 0.0
        %2771 = vmatprep.mubr.f32.mxu0 0.0
        %v2772 = vand.u32 %v980, 4294901760
        %v2773 = vsub.f32 %v980, %v2772
        %2774 = vmatmul.mubr.f32.gmra.mxu0 %v2773
        %v2775 = vpop.f32.mrf.mxu0
        %v2776 = vadd.f32 %v2702, %v2775
        %v2777 = vpop.f32.mrf.mxu0
        %2778 = vdwg.mxu0
        %2779 = vmatprep.subr.mxu0 0.0
        %2780 = vmatpush1.msra.mxu0 0.0
        %2781 = vmatprep.subr.mxu0 0.0
        %2782 = vmatpush1.msra.mxu0 0.0
        %2783 = vmatprep.subr.mxu0 0.0
        %2784 = vmatpush1.msra.mxu0 0.0
        %2785 = vmatprep.subr.mxu0 0.0
        %2786 = vmatpush1.msra.mxu0 0.0
        %2787 = vmatprep.subr.mxu0 0.0
        %2788 = vmatpush1.msra.mxu0 0.0
        %2789 = vmatprep.subr.mxu0 0.0
        %2790 = vmatpush1.msra.mxu0 0.0
        %2791 = vmatprep.subr.mxu0 0.0
        %2792 = vmatpush1.msra.mxu0 0.0
        %2793 = vmatprep.subr.mxu0 0.0
        %2794 = vmatpush1.msra.mxu0 0.0
        %2795 = vmatprep.subr.mxu0 0.0
        %2796 = vmatpush1.msra.mxu0 0.0
        %2797 = vmatprep.subr.mxu0 0.0
        %2798 = vmatpush1.msra.mxu0 0.0
        %2799 = vmatprep.subr.mxu0 0.0
        %2800 = vmatpush1.msra.mxu0 0.0
        %2801 = vmatprep.subr.mxu0 0.0
        %2802 = vmatpush1.msra.mxu0 0.0
        %2803 = vmatprep.subr.mxu0 0.0
        %2804 = vmatpush1.msra.mxu0 0.0
        %2805 = vmatprep.subr.mxu0 0.0
        %2806 = vmatpush1.msra.mxu0 0.0
        %2807 = vmatprep.subr.mxu0 0.0
        %2808 = vmatpush1.msra.mxu0 0.0
        %2809 = vmatprep.subr.mxu0 0.0
        %v2810 = vand.u32 %v2550, 4294901760
        %2811 = vmatpush1.msra.mxu0 %v2810
        %2812 = vmatprep.subr.mxu0 0.0
        %2813 = vmatpush2.msra.mxu0 0.0
        %2814 = vmatprep.subr.mxu0 0.0
        %2815 = vmatpush2.msra.mxu0 0.0
        %2816 = vmatprep.subr.mxu0 0.0
        %2817 = vmatpush2.msra.mxu0 0.0
        %2818 = vmatprep.subr.mxu0 0.0
        %2819 = vmatpush2.msra.mxu0 0.0
        %2820 = vmatprep.subr.mxu0 0.0
        %2821 = vmatpush2.msra.mxu0 0.0
        %2822 = vmatprep.subr.mxu0 0.0
        %2823 = vmatpush2.msra.mxu0 0.0
        %2824 = vmatprep.subr.mxu0 0.0
        %2825 = vmatpush2.msra.mxu0 0.0
        %2826 = vmatprep.subr.mxu0 0.0
        %2827 = vmatpush2.msra.mxu0 0.0
        %2828 = vmatprep.subr.mxu0 0.0
        %2829 = vmatpush2.msra.mxu0 0.0
        %2830 = vmatprep.subr.mxu0 0.0
        %2831 = vmatpush2.msra.mxu0 0.0
        %2832 = vmatprep.subr.mxu0 0.0
        %2833 = vmatpush2.msra.mxu0 0.0
        %2834 = vmatprep.subr.mxu0 0.0
        %2835 = vmatpush2.msra.mxu0 0.0
        %2836 = vmatprep.subr.mxu0 0.0
        %2837 = vmatpush2.msra.mxu0 0.0
        %2838 = vmatprep.subr.mxu0 0.0
        %2839 = vmatpush2.msra.mxu0 0.0
        %2840 = vmatprep.subr.mxu0 0.0
        %2841 = vmatpush2.msra.mxu0 0.0
        %2842 = vmatprep.subr.mxu0 0.0
        %2843 = vmatpush2.msra.mxu0 0.0
        %2844 = vmatprep.mubr.f32.mxu0 0.0
        %v2845 = vand.u32 %v980, 4294901760
        %v2846 = vsub.f32 %v980, %v2845
        %v2847 = vand.u32 %v2846, 4294901760
        %2848 = vmatmul.mubr.f32.gmra.mxu0 %v2847
        %v2849 = vpop.f32.mrf.mxu0
        %v2850 = vadd.f32 %v2776, %v2849
        %v2851 = vpop.f32.mrf.mxu0
        %2852 = vdwg.mxu0
        %2853 = vmatprep.subr.mxu0 0.0
        %2854 = vmatpush1.msra.mxu0 0.0
        %2855 = vmatprep.subr.mxu0 0.0
        %2856 = vmatpush1.msra.mxu0 0.0
        %2857 = vmatprep.subr.mxu0 0.0
        %2858 = vmatpush1.msra.mxu0 0.0
        %2859 = vmatprep.subr.mxu0 0.0
        %2860 = vmatpush1.msra.mxu0 0.0
        %2861 = vmatprep.subr.mxu0 0.0
        %2862 = vmatpush1.msra.mxu0 0.0
        %2863 = vmatprep.subr.mxu0 0.0
        %2864 = vmatpush1.msra.mxu0 0.0
        %2865 = vmatprep.subr.mxu0 0.0
        %2866 = vmatpush1.msra.mxu0 0.0
        %2867 = vmatprep.subr.mxu0 0.0
        %2868 = vmatpush1.msra.mxu0 0.0
        %2869 = vmatprep.subr.mxu0 0.0
        %2870 = vmatpush1.msra.mxu0 0.0
        %2871 = vmatprep.subr.mxu0 0.0
        %2872 = vmatpush1.msra.mxu0 0.0
        %2873 = vmatprep.subr.mxu0 0.0
        %2874 = vmatpush1.msra.mxu0 0.0
        %2875 = vmatprep.subr.mxu0 0.0
        %2876 = vmatpush1.msra.mxu0 0.0
        %2877 = vmatprep.subr.mxu0 0.0
        %2878 = vmatpush1.msra.mxu0 0.0
        %2879 = vmatprep.subr.mxu0 0.0
        %2880 = vmatpush1.msra.mxu0 0.0
        %2881 = vmatprep.subr.mxu0 0.0
        %2882 = vmatpush1.msra.mxu0 0.0
        %2883 = vmatprep.subr.mxu0 0.0
        %v2884 = vand.u32 %v2550, 4294901760
        %v2885 = vsub.f32 %v2550, %v2884
        %v2886 = vand.u32 %v2885, 4294901760
        %2887 = vmatpush1.msra.mxu0 %v2886
        %2888 = vmatprep.subr.mxu0 0.0
        %2889 = vmatpush2.msra.mxu0 0.0
        %2890 = vmatprep.subr.mxu0 0.0
        %2891 = vmatpush2.msra.mxu0 0.0
        %2892 = vmatprep.subr.mxu0 0.0
        %2893 = vmatpush2.msra.mxu0 0.0
        %2894 = vmatprep.subr.mxu0 0.0
        %2895 = vmatpush2.msra.mxu0 0.0
        %2896 = vmatprep.subr.mxu0 0.0
        %2897 = vmatpush2.msra.mxu0 0.0
        %2898 = vmatprep.subr.mxu0 0.0
        %2899 = vmatpush2.msra.mxu0 0.0
        %2900 = vmatprep.subr.mxu0 0.0
        %2901 = vmatpush2.msra.mxu0 0.0
        %2902 = vmatprep.subr.mxu0 0.0
        %2903 = vmatpush2.msra.mxu0 0.0
        %2904 = vmatprep.subr.mxu0 0.0
        %2905 = vmatpush2.msra.mxu0 0.0
        %2906 = vmatprep.subr.mxu0 0.0
        %2907 = vmatpush2.msra.mxu0 0.0
        %2908 = vmatprep.subr.mxu0 0.0
        %2909 = vmatpush2.msra.mxu0 0.0
        %2910 = vmatprep.subr.mxu0 0.0
        %2911 = vmatpush2.msra.mxu0 0.0
        %2912 = vmatprep.subr.mxu0 0.0
        %2913 = vmatpush2.msra.mxu0 0.0
        %2914 = vmatprep.subr.mxu0 0.0
        %2915 = vmatpush2.msra.mxu0 0.0
        %2916 = vmatprep.subr.mxu0 0.0
        %2917 = vmatpush2.msra.mxu0 0.0
        %2918 = vmatprep.subr.mxu0 0.0
        %2919 = vmatpush2.msra.mxu0 0.0
        %2920 = vmatprep.mubr.f32.mxu0 0.0
        %v2921 = vand.u32 %v980, 4294901760
        %2922 = vmatmul.mubr.f32.gmra.mxu0 %v2921
        %v2923 = vpop.f32.mrf.mxu0
        %v2924 = vadd.f32 %v2850, %v2923
        %v2925 = vpop.f32.mrf.mxu0
        %2926 = vdwg.mxu0
        %2927 = vmatprep.subr.mxu0 0.0
        %2928 = vmatpush1.msra.mxu0 0.0
        %2929 = vmatprep.subr.mxu0 0.0
        %2930 = vmatpush1.msra.mxu0 0.0
        %2931 = vmatprep.subr.mxu0 0.0
        %2932 = vmatpush1.msra.mxu0 0.0
        %2933 = vmatprep.subr.mxu0 0.0
        %2934 = vmatpush1.msra.mxu0 0.0
        %2935 = vmatprep.subr.mxu0 0.0
        %2936 = vmatpush1.msra.mxu0 0.0
        %2937 = vmatprep.subr.mxu0 0.0
        %2938 = vmatpush1.msra.mxu0 0.0
        %2939 = vmatprep.subr.mxu0 0.0
        %2940 = vmatpush1.msra.mxu0 0.0
        %2941 = vmatprep.subr.mxu0 0.0
        %2942 = vmatpush1.msra.mxu0 0.0
        %2943 = vmatprep.subr.mxu0 0.0
        %2944 = vmatpush1.msra.mxu0 0.0
        %2945 = vmatprep.subr.mxu0 0.0
        %2946 = vmatpush1.msra.mxu0 0.0
        %2947 = vmatprep.subr.mxu0 0.0
        %2948 = vmatpush1.msra.mxu0 0.0
        %2949 = vmatprep.subr.mxu0 0.0
        %2950 = vmatpush1.msra.mxu0 0.0
        %2951 = vmatprep.subr.mxu0 0.0
        %2952 = vmatpush1.msra.mxu0 0.0
        %2953 = vmatprep.subr.mxu0 0.0
        %2954 = vmatpush1.msra.mxu0 0.0
        %2955 = vmatprep.subr.mxu0 0.0
        %2956 = vmatpush1.msra.mxu0 0.0
        %2957 = vmatprep.subr.mxu0 0.0
        %v2958 = vand.u32 %v2550, 4294901760
        %2959 = vmatpush1.msra.mxu0 %v2958
        %2960 = vmatprep.subr.mxu0 0.0
        %2961 = vmatpush2.msra.mxu0 0.0
        %2962 = vmatprep.subr.mxu0 0.0
        %2963 = vmatpush2.msra.mxu0 0.0
        %2964 = vmatprep.subr.mxu0 0.0
        %2965 = vmatpush2.msra.mxu0 0.0
        %2966 = vmatprep.subr.mxu0 0.0
        %2967 = vmatpush2.msra.mxu0 0.0
        %2968 = vmatprep.subr.mxu0 0.0
        %2969 = vmatpush2.msra.mxu0 0.0
        %2970 = vmatprep.subr.mxu0 0.0
        %2971 = vmatpush2.msra.mxu0 0.0
        %2972 = vmatprep.subr.mxu0 0.0
        %2973 = vmatpush2.msra.mxu0 0.0
        %2974 = vmatprep.subr.mxu0 0.0
        %2975 = vmatpush2.msra.mxu0 0.0
        %2976 = vmatprep.subr.mxu0 0.0
        %2977 = vmatpush2.msra.mxu0 0.0
        %2978 = vmatprep.subr.mxu0 0.0
        %2979 = vmatpush2.msra.mxu0 0.0
        %2980 = vmatprep.subr.mxu0 0.0
        %2981 = vmatpush2.msra.mxu0 0.0
        %2982 = vmatprep.subr.mxu0 0.0
        %2983 = vmatpush2.msra.mxu0 0.0
        %2984 = vmatprep.subr.mxu0 0.0
        %2985 = vmatpush2.msra.mxu0 0.0
        %2986 = vmatprep.subr.mxu0 0.0
        %2987 = vmatpush2.msra.mxu0 0.0
        %2988 = vmatprep.subr.mxu0 0.0
        %2989 = vmatpush2.msra.mxu0 0.0
        %2990 = vmatprep.subr.mxu0 0.0
        %2991 = vmatpush2.msra.mxu0 0.0
        %2992 = vmatprep.mubr.f32.mxu0 0.0
        %v2993 = vand.u32 %v980, 4294901760
        %2994 = vmatmul.mubr.f32.gmra.mxu0 %v2993
        %v2995 = vpop.f32.mrf.mxu0
        %v2996 = vadd.f32 %v2924, %v2995
        %v2997 = vpop.f32.mrf.mxu0
        %2998 = vdwg.mxu0
        %3000 = vrot.lane.b32.xlu0 %v2550, 112
        %v3001 = vpop.permute.xlu0 %3000
        %3003 = vmatprep.subr.mxu0 0.0
        %3004 = vmatpush1.msra.mxu0 0.0
        %3005 = vmatprep.subr.mxu0 0.0
        %3006 = vmatpush1.msra.mxu0 0.0
        %3007 = vmatprep.subr.mxu0 0.0
        %3008 = vmatpush1.msra.mxu0 0.0
        %3009 = vmatprep.subr.mxu0 0.0
        %3010 = vmatpush1.msra.mxu0 0.0
        %3011 = vmatprep.subr.mxu0 0.0
        %3012 = vmatpush1.msra.mxu0 0.0
        %3013 = vmatprep.subr.mxu0 0.0
        %3014 = vmatpush1.msra.mxu0 0.0
        %3015 = vmatprep.subr.mxu0 0.0
        %3016 = vmatpush1.msra.mxu0 0.0
        %3017 = vmatprep.subr.mxu0 0.0
        %3018 = vmatpush1.msra.mxu0 0.0
        %3019 = vmatprep.subr.mxu0 0.0
        %3020 = vmatpush1.msra.mxu0 0.0
        %3021 = vmatprep.subr.mxu0 0.0
        %3022 = vmatpush1.msra.mxu0 0.0
        %3023 = vmatprep.subr.mxu0 0.0
        %3024 = vmatpush1.msra.mxu0 0.0
        %3025 = vmatprep.subr.mxu0 0.0
        %3026 = vmatpush1.msra.mxu0 0.0
        %3027 = vmatprep.subr.mxu0 0.0
        %3028 = vmatpush1.msra.mxu0 0.0
        %3029 = vmatprep.subr.mxu0 0.0
        %3030 = vmatpush1.msra.mxu0 0.0
        %3031 = vmatprep.subr.mxu0 0.0
        %3032 = vmatpush1.msra.mxu0 0.0
        %3033 = vmatprep.subr.mxu0 0.0
        %v3034 = vand.u32 %v3001, 4294901760
        %3035 = vmatpush1.msra.mxu0 %v3034
        %3036 = vmatprep.subr.mxu0 0.0
        %3037 = vmatpush2.msra.mxu0 0.0
        %3038 = vmatprep.subr.mxu0 0.0
        %3039 = vmatpush2.msra.mxu0 0.0
        %3040 = vmatprep.subr.mxu0 0.0
        %3041 = vmatpush2.msra.mxu0 0.0
        %3042 = vmatprep.subr.mxu0 0.0
        %3043 = vmatpush2.msra.mxu0 0.0
        %3044 = vmatprep.subr.mxu0 0.0
        %3045 = vmatpush2.msra.mxu0 0.0
        %3046 = vmatprep.subr.mxu0 0.0
        %3047 = vmatpush2.msra.mxu0 0.0
        %3048 = vmatprep.subr.mxu0 0.0
        %3049 = vmatpush2.msra.mxu0 0.0
        %3050 = vmatprep.subr.mxu0 0.0
        %3051 = vmatpush2.msra.mxu0 0.0
        %3052 = vmatprep.subr.mxu0 0.0
        %3053 = vmatpush2.msra.mxu0 0.0
        %3054 = vmatprep.subr.mxu0 0.0
        %3055 = vmatpush2.msra.mxu0 0.0
        %3056 = vmatprep.subr.mxu0 0.0
        %3057 = vmatpush2.msra.mxu0 0.0
        %3058 = vmatprep.subr.mxu0 0.0
        %3059 = vmatpush2.msra.mxu0 0.0
        %3060 = vmatprep.subr.mxu0 0.0
        %3061 = vmatpush2.msra.mxu0 0.0
        %3062 = vmatprep.subr.mxu0 0.0
        %3063 = vmatpush2.msra.mxu0 0.0
        %3064 = vmatprep.subr.mxu0 0.0
        %3065 = vmatpush2.msra.mxu0 0.0
        %3066 = vmatprep.subr.mxu0 0.0
        %3067 = vmatpush2.msra.mxu0 0.0
        %3068 = vmatprep.mubr.f32.mxu0 0.0
        %v3069 = vand.u32 %v1433, 4294901760
        %v3070 = vsub.f32 %v1433, %v3069
        %v3071 = vand.u32 %v3070, 4294901760
        %v3072 = vsub.f32 %v3070, %v3071
        %v3073 = vand.u32 %v3072, 4294901760
        %3074 = vmatmul.mubr.f32.gmra.mxu0 %v3073
        %v3075 = vpop.f32.mrf.mxu0
        %v3076 = vadd.f32 0.0, %v3075
        %v3077 = vpop.f32.mrf.mxu0
        %3078 = vdwg.mxu0
        %3079 = vmatprep.subr.mxu0 0.0
        %3080 = vmatpush1.msra.mxu0 0.0
        %3081 = vmatprep.subr.mxu0 0.0
        %3082 = vmatpush1.msra.mxu0 0.0
        %3083 = vmatprep.subr.mxu0 0.0
        %3084 = vmatpush1.msra.mxu0 0.0
        %3085 = vmatprep.subr.mxu0 0.0
        %3086 = vmatpush1.msra.mxu0 0.0
        %3087 = vmatprep.subr.mxu0 0.0
        %3088 = vmatpush1.msra.mxu0 0.0
        %3089 = vmatprep.subr.mxu0 0.0
        %3090 = vmatpush1.msra.mxu0 0.0
        %3091 = vmatprep.subr.mxu0 0.0
        %3092 = vmatpush1.msra.mxu0 0.0
        %3093 = vmatprep.subr.mxu0 0.0
        %3094 = vmatpush1.msra.mxu0 0.0
        %3095 = vmatprep.subr.mxu0 0.0
        %3096 = vmatpush1.msra.mxu0 0.0
        %3097 = vmatprep.subr.mxu0 0.0
        %3098 = vmatpush1.msra.mxu0 0.0
        %3099 = vmatprep.subr.mxu0 0.0
        %3100 = vmatpush1.msra.mxu0 0.0
        %3101 = vmatprep.subr.mxu0 0.0
        %3102 = vmatpush1.msra.mxu0 0.0
        %3103 = vmatprep.subr.mxu0 0.0
        %3104 = vmatpush1.msra.mxu0 0.0
        %3105 = vmatprep.subr.mxu0 0.0
        %3106 = vmatpush1.msra.mxu0 0.0
        %3107 = vmatprep.subr.mxu0 0.0
        %3108 = vmatpush1.msra.mxu0 0.0
        %3109 = vmatprep.subr.mxu0 0.0
        %v3110 = vand.u32 %v3001, 4294901760
        %v3111 = vsub.f32 %v3001, %v3110
        %v3112 = vand.u32 %v3111, 4294901760
        %v3113 = vsub.f32 %v3111, %v3112
        %v3114 = vand.u32 %v3113, 4294901760
        %3115 = vmatpush1.msra.mxu0 %v3114
        %3116 = vmatprep.subr.mxu0 0.0
        %3117 = vmatpush2.msra.mxu0 0.0
        %3118 = vmatprep.subr.mxu0 0.0
        %3119 = vmatpush2.msra.mxu0 0.0
        %3120 = vmatprep.subr.mxu0 0.0
        %3121 = vmatpush2.msra.mxu0 0.0
        %3122 = vmatprep.subr.mxu0 0.0
        %3123 = vmatpush2.msra.mxu0 0.0
        %3124 = vmatprep.subr.mxu0 0.0
        %3125 = vmatpush2.msra.mxu0 0.0
        %3126 = vmatprep.subr.mxu0 0.0
        %3127 = vmatpush2.msra.mxu0 0.0
        %3128 = vmatprep.subr.mxu0 0.0
        %3129 = vmatpush2.msra.mxu0 0.0
        %3130 = vmatprep.subr.mxu0 0.0
        %3131 = vmatpush2.msra.mxu0 0.0
        %3132 = vmatprep.subr.mxu0 0.0
        %3133 = vmatpush2.msra.mxu0 0.0
        %3134 = vmatprep.subr.mxu0 0.0
        %3135 = vmatpush2.msra.mxu0 0.0
        %3136 = vmatprep.subr.mxu0 0.0
        %3137 = vmatpush2.msra.mxu0 0.0
        %3138 = vmatprep.subr.mxu0 0.0
        %3139 = vmatpush2.msra.mxu0 0.0
        %3140 = vmatprep.subr.mxu0 0.0
        %3141 = vmatpush2.msra.mxu0 0.0
        %3142 = vmatprep.subr.mxu0 0.0
        %3143 = vmatpush2.msra.mxu0 0.0
        %3144 = vmatprep.subr.mxu0 0.0
        %3145 = vmatpush2.msra.mxu0 0.0
        %3146 = vmatprep.subr.mxu0 0.0
        %3147 = vmatpush2.msra.mxu0 0.0
        %3148 = vmatprep.mubr.f32.mxu0 0.0
        %v3149 = vand.u32 %v1433, 4294901760
        %3150 = vmatmul.mubr.f32.gmra.mxu0 %v3149
        %v3151 = vpop.f32.mrf.mxu0
        %v3152 = vadd.f32 %v3076, %v3151
        %v3153 = vpop.f32.mrf.mxu0
        %3154 = vdwg.mxu0
        %3155 = vmatprep.subr.mxu0 0.0
        %3156 = vmatpush1.msra.mxu0 0.0
        %3157 = vmatprep.subr.mxu0 0.0
        %3158 = vmatpush1.msra.mxu0 0.0
        %3159 = vmatprep.subr.mxu0 0.0
        %3160 = vmatpush1.msra.mxu0 0.0
        %3161 = vmatprep.subr.mxu0 0.0
        %3162 = vmatpush1.msra.mxu0 0.0
        %3163 = vmatprep.subr.mxu0 0.0
        %3164 = vmatpush1.msra.mxu0 0.0
        %3165 = vmatprep.subr.mxu0 0.0
        %3166 = vmatpush1.msra.mxu0 0.0
        %3167 = vmatprep.subr.mxu0 0.0
        %3168 = vmatpush1.msra.mxu0 0.0
        %3169 = vmatprep.subr.mxu0 0.0
        %3170 = vmatpush1.msra.mxu0 0.0
        %3171 = vmatprep.subr.mxu0 0.0
        %3172 = vmatpush1.msra.mxu0 0.0
        %3173 = vmatprep.subr.mxu0 0.0
        %3174 = vmatpush1.msra.mxu0 0.0
        %3175 = vmatprep.subr.mxu0 0.0
        %3176 = vmatpush1.msra.mxu0 0.0
        %3177 = vmatprep.subr.mxu0 0.0
        %3178 = vmatpush1.msra.mxu0 0.0
        %3179 = vmatprep.subr.mxu0 0.0
        %3180 = vmatpush1.msra.mxu0 0.0
        %3181 = vmatprep.subr.mxu0 0.0
        %3182 = vmatpush1.msra.mxu0 0.0
        %3183 = vmatprep.subr.mxu0 0.0
        %3184 = vmatpush1.msra.mxu0 0.0
        %3185 = vmatprep.subr.mxu0 0.0
        %v3186 = vand.u32 %v3001, 4294901760
        %v3187 = vsub.f32 %v3001, %v3186
        %3188 = vmatpush1.msra.mxu0 %v3187
        %3189 = vmatprep.subr.mxu0 0.0
        %3190 = vmatpush2.msra.mxu0 0.0
        %3191 = vmatprep.subr.mxu0 0.0
        %3192 = vmatpush2.msra.mxu0 0.0
        %3193 = vmatprep.subr.mxu0 0.0
        %3194 = vmatpush2.msra.mxu0 0.0
        %3195 = vmatprep.subr.mxu0 0.0
        %3196 = vmatpush2.msra.mxu0 0.0
        %3197 = vmatprep.subr.mxu0 0.0
        %3198 = vmatpush2.msra.mxu0 0.0
        %3199 = vmatprep.subr.mxu0 0.0
        %3200 = vmatpush2.msra.mxu0 0.0
        %3201 = vmatprep.subr.mxu0 0.0
        %3202 = vmatpush2.msra.mxu0 0.0
        %3203 = vmatprep.subr.mxu0 0.0
        %3204 = vmatpush2.msra.mxu0 0.0
        %3205 = vmatprep.subr.mxu0 0.0
        %3206 = vmatpush2.msra.mxu0 0.0
        %3207 = vmatprep.subr.mxu0 0.0
        %3208 = vmatpush2.msra.mxu0 0.0
        %3209 = vmatprep.subr.mxu0 0.0
        %3210 = vmatpush2.msra.mxu0 0.0
        %3211 = vmatprep.subr.mxu0 0.0
        %3212 = vmatpush2.msra.mxu0 0.0
        %3213 = vmatprep.subr.mxu0 0.0
        %3214 = vmatpush2.msra.mxu0 0.0
        %3215 = vmatprep.subr.mxu0 0.0
        %3216 = vmatpush2.msra.mxu0 0.0
        %3217 = vmatprep.subr.mxu0 0.0
        %3218 = vmatpush2.msra.mxu0 0.0
        %3219 = vmatprep.subr.mxu0 0.0
        %3220 = vmatpush2.msra.mxu0 0.0
        %3221 = vmatprep.mubr.f32.mxu0 0.0
        %v3222 = vand.u32 %v1433, 4294901760
        %v3223 = vsub.f32 %v1433, %v3222
        %3224 = vmatmul.mubr.f32.gmra.mxu0 %v3223
        %v3225 = vpop.f32.mrf.mxu0
        %v3226 = vadd.f32 %v3152, %v3225
        %v3227 = vpop.f32.mrf.mxu0
        %3228 = vdwg.mxu0
        %3229 = vmatprep.subr.mxu0 0.0
        %3230 = vmatpush1.msra.mxu0 0.0
        %3231 = vmatprep.subr.mxu0 0.0
        %3232 = vmatpush1.msra.mxu0 0.0
        %3233 = vmatprep.subr.mxu0 0.0
        %3234 = vmatpush1.msra.mxu0 0.0
        %3235 = vmatprep.subr.mxu0 0.0
        %3236 = vmatpush1.msra.mxu0 0.0
        %3237 = vmatprep.subr.mxu0 0.0
        %3238 = vmatpush1.msra.mxu0 0.0
        %3239 = vmatprep.subr.mxu0 0.0
        %3240 = vmatpush1.msra.mxu0 0.0
        %3241 = vmatprep.subr.mxu0 0.0
        %3242 = vmatpush1.msra.mxu0 0.0
        %3243 = vmatprep.subr.mxu0 0.0
        %3244 = vmatpush1.msra.mxu0 0.0
        %3245 = vmatprep.subr.mxu0 0.0
        %3246 = vmatpush1.msra.mxu0 0.0
        %3247 = vmatprep.subr.mxu0 0.0
        %3248 = vmatpush1.msra.mxu0 0.0
        %3249 = vmatprep.subr.mxu0 0.0
        %3250 = vmatpush1.msra.mxu0 0.0
        %3251 = vmatprep.subr.mxu0 0.0
        %3252 = vmatpush1.msra.mxu0 0.0
        %3253 = vmatprep.subr.mxu0 0.0
        %3254 = vmatpush1.msra.mxu0 0.0
        %3255 = vmatprep.subr.mxu0 0.0
        %3256 = vmatpush1.msra.mxu0 0.0
        %3257 = vmatprep.subr.mxu0 0.0
        %3258 = vmatpush1.msra.mxu0 0.0
        %3259 = vmatprep.subr.mxu0 0.0
        %v3260 = vand.u32 %v3001, 4294901760
        %3261 = vmatpush1.msra.mxu0 %v3260
        %3262 = vmatprep.subr.mxu0 0.0
        %3263 = vmatpush2.msra.mxu0 0.0
        %3264 = vmatprep.subr.mxu0 0.0
        %3265 = vmatpush2.msra.mxu0 0.0
        %3266 = vmatprep.subr.mxu0 0.0
        %3267 = vmatpush2.msra.mxu0 0.0
        %3268 = vmatprep.subr.mxu0 0.0
        %3269 = vmatpush2.msra.mxu0 0.0
        %3270 = vmatprep.subr.mxu0 0.0
        %3271 = vmatpush2.msra.mxu0 0.0
        %3272 = vmatprep.subr.mxu0 0.0
        %3273 = vmatpush2.msra.mxu0 0.0
        %3274 = vmatprep.subr.mxu0 0.0
        %3275 = vmatpush2.msra.mxu0 0.0
        %3276 = vmatprep.subr.mxu0 0.0
        %3277 = vmatpush2.msra.mxu0 0.0
        %3278 = vmatprep.subr.mxu0 0.0
        %3279 = vmatpush2.msra.mxu0 0.0
        %3280 = vmatprep.subr.mxu0 0.0
        %3281 = vmatpush2.msra.mxu0 0.0
        %3282 = vmatprep.subr.mxu0 0.0
        %3283 = vmatpush2.msra.mxu0 0.0
        %3284 = vmatprep.subr.mxu0 0.0
        %3285 = vmatpush2.msra.mxu0 0.0
        %3286 = vmatprep.subr.mxu0 0.0
        %3287 = vmatpush2.msra.mxu0 0.0
        %3288 = vmatprep.subr.mxu0 0.0
        %3289 = vmatpush2.msra.mxu0 0.0
        %3290 = vmatprep.subr.mxu0 0.0
        %3291 = vmatpush2.msra.mxu0 0.0
        %3292 = vmatprep.subr.mxu0 0.0
        %3293 = vmatpush2.msra.mxu0 0.0
        %3294 = vmatprep.mubr.f32.mxu0 0.0
        %v3295 = vand.u32 %v1433, 4294901760
        %v3296 = vsub.f32 %v1433, %v3295
        %v3297 = vand.u32 %v3296, 4294901760
        %3298 = vmatmul.mubr.f32.gmra.mxu0 %v3297
        %v3299 = vpop.f32.mrf.mxu0
        %v3300 = vadd.f32 %v3226, %v3299
        %v3301 = vpop.f32.mrf.mxu0
        %3302 = vdwg.mxu0
        %3303 = vmatprep.subr.mxu0 0.0
        %3304 = vmatpush1.msra.mxu0 0.0
        %3305 = vmatprep.subr.mxu0 0.0
        %3306 = vmatpush1.msra.mxu0 0.0
        %3307 = vmatprep.subr.mxu0 0.0
        %3308 = vmatpush1.msra.mxu0 0.0
        %3309 = vmatprep.subr.mxu0 0.0
        %3310 = vmatpush1.msra.mxu0 0.0
        %3311 = vmatprep.subr.mxu0 0.0
        %3312 = vmatpush1.msra.mxu0 0.0
        %3313 = vmatprep.subr.mxu0 0.0
        %3314 = vmatpush1.msra.mxu0 0.0
        %3315 = vmatprep.subr.mxu0 0.0
        %3316 = vmatpush1.msra.mxu0 0.0
        %3317 = vmatprep.subr.mxu0 0.0
        %3318 = vmatpush1.msra.mxu0 0.0
        %3319 = vmatprep.subr.mxu0 0.0
        %3320 = vmatpush1.msra.mxu0 0.0
        %3321 = vmatprep.subr.mxu0 0.0
        %3322 = vmatpush1.msra.mxu0 0.0
        %3323 = vmatprep.subr.mxu0 0.0
        %3324 = vmatpush1.msra.mxu0 0.0
        %3325 = vmatprep.subr.mxu0 0.0
        %3326 = vmatpush1.msra.mxu0 0.0
        %3327 = vmatprep.subr.mxu0 0.0
        %3328 = vmatpush1.msra.mxu0 0.0
        %3329 = vmatprep.subr.mxu0 0.0
        %3330 = vmatpush1.msra.mxu0 0.0
        %3331 = vmatprep.subr.mxu0 0.0
        %3332 = vmatpush1.msra.mxu0 0.0
        %3333 = vmatprep.subr.mxu0 0.0
        %v3334 = vand.u32 %v3001, 4294901760
        %v3335 = vsub.f32 %v3001, %v3334
        %v3336 = vand.u32 %v3335, 4294901760
        %3337 = vmatpush1.msra.mxu0 %v3336
        %3338 = vmatprep.subr.mxu0 0.0
        %3339 = vmatpush2.msra.mxu0 0.0
        %3340 = vmatprep.subr.mxu0 0.0
        %3341 = vmatpush2.msra.mxu0 0.0
        %3342 = vmatprep.subr.mxu0 0.0
        %3343 = vmatpush2.msra.mxu0 0.0
        %3344 = vmatprep.subr.mxu0 0.0
        %3345 = vmatpush2.msra.mxu0 0.0
        %3346 = vmatprep.subr.mxu0 0.0
        %3347 = vmatpush2.msra.mxu0 0.0
        %3348 = vmatprep.subr.mxu0 0.0
        %3349 = vmatpush2.msra.mxu0 0.0
        %3350 = vmatprep.subr.mxu0 0.0
        %3351 = vmatpush2.msra.mxu0 0.0
        %3352 = vmatprep.subr.mxu0 0.0
        %3353 = vmatpush2.msra.mxu0 0.0
        %3354 = vmatprep.subr.mxu0 0.0
        %3355 = vmatpush2.msra.mxu0 0.0
        %3356 = vmatprep.subr.mxu0 0.0
        %3357 = vmatpush2.msra.mxu0 0.0
        %3358 = vmatprep.subr.mxu0 0.0
        %3359 = vmatpush2.msra.mxu0 0.0
        %3360 = vmatprep.subr.mxu0 0.0
        %3361 = vmatpush2.msra.mxu0 0.0
        %3362 = vmatprep.subr.mxu0 0.0
        %3363 = vmatpush2.msra.mxu0 0.0
        %3364 = vmatprep.subr.mxu0 0.0
        %3365 = vmatpush2.msra.mxu0 0.0
        %3366 = vmatprep.subr.mxu0 0.0
        %3367 = vmatpush2.msra.mxu0 0.0
        %3368 = vmatprep.subr.mxu0 0.0
        %3369 = vmatpush2.msra.mxu0 0.0
        %3370 = vmatprep.mubr.f32.mxu0 0.0
        %v3371 = vand.u32 %v1433, 4294901760
        %3372 = vmatmul.mubr.f32.gmra.mxu0 %v3371
        %v3373 = vpop.f32.mrf.mxu0
        %v3374 = vadd.f32 %v3300, %v3373
        %v3375 = vpop.f32.mrf.mxu0
        %3376 = vdwg.mxu0
        %3377 = vmatprep.subr.mxu0 0.0
        %3378 = vmatpush1.msra.mxu0 0.0
        %3379 = vmatprep.subr.mxu0 0.0
        %3380 = vmatpush1.msra.mxu0 0.0
        %3381 = vmatprep.subr.mxu0 0.0
        %3382 = vmatpush1.msra.mxu0 0.0
        %3383 = vmatprep.subr.mxu0 0.0
        %3384 = vmatpush1.msra.mxu0 0.0
        %3385 = vmatprep.subr.mxu0 0.0
        %3386 = vmatpush1.msra.mxu0 0.0
        %3387 = vmatprep.subr.mxu0 0.0
        %3388 = vmatpush1.msra.mxu0 0.0
        %3389 = vmatprep.subr.mxu0 0.0
        %3390 = vmatpush1.msra.mxu0 0.0
        %3391 = vmatprep.subr.mxu0 0.0
        %3392 = vmatpush1.msra.mxu0 0.0
        %3393 = vmatprep.subr.mxu0 0.0
        %3394 = vmatpush1.msra.mxu0 0.0
        %3395 = vmatprep.subr.mxu0 0.0
        %3396 = vmatpush1.msra.mxu0 0.0
        %3397 = vmatprep.subr.mxu0 0.0
        %3398 = vmatpush1.msra.mxu0 0.0
        %3399 = vmatprep.subr.mxu0 0.0
        %3400 = vmatpush1.msra.mxu0 0.0
        %3401 = vmatprep.subr.mxu0 0.0
        %3402 = vmatpush1.msra.mxu0 0.0
        %3403 = vmatprep.subr.mxu0 0.0
        %3404 = vmatpush1.msra.mxu0 0.0
        %3405 = vmatprep.subr.mxu0 0.0
        %3406 = vmatpush1.msra.mxu0 0.0
        %3407 = vmatprep.subr.mxu0 0.0
        %v3408 = vand.u32 %v3001, 4294901760
        %3409 = vmatpush1.msra.mxu0 %v3408
        %3410 = vmatprep.subr.mxu0 0.0
        %3411 = vmatpush2.msra.mxu0 0.0
        %3412 = vmatprep.subr.mxu0 0.0
        %3413 = vmatpush2.msra.mxu0 0.0
        %3414 = vmatprep.subr.mxu0 0.0
        %3415 = vmatpush2.msra.mxu0 0.0
        %3416 = vmatprep.subr.mxu0 0.0
        %3417 = vmatpush2.msra.mxu0 0.0
        %3418 = vmatprep.subr.mxu0 0.0
        %3419 = vmatpush2.msra.mxu0 0.0
        %3420 = vmatprep.subr.mxu0 0.0
        %3421 = vmatpush2.msra.mxu0 0.0
        %3422 = vmatprep.subr.mxu0 0.0
        %3423 = vmatpush2.msra.mxu0 0.0
        %3424 = vmatprep.subr.mxu0 0.0
        %3425 = vmatpush2.msra.mxu0 0.0
        %3426 = vmatprep.subr.mxu0 0.0
        %3427 = vmatpush2.msra.mxu0 0.0
        %3428 = vmatprep.subr.mxu0 0.0
        %3429 = vmatpush2.msra.mxu0 0.0
        %3430 = vmatprep.subr.mxu0 0.0
        %3431 = vmatpush2.msra.mxu0 0.0
        %3432 = vmatprep.subr.mxu0 0.0
        %3433 = vmatpush2.msra.mxu0 0.0
        %3434 = vmatprep.subr.mxu0 0.0
        %3435 = vmatpush2.msra.mxu0 0.0
        %3436 = vmatprep.subr.mxu0 0.0
        %3437 = vmatpush2.msra.mxu0 0.0
        %3438 = vmatprep.subr.mxu0 0.0
        %3439 = vmatpush2.msra.mxu0 0.0
        %3440 = vmatprep.subr.mxu0 0.0
        %3441 = vmatpush2.msra.mxu0 0.0
        %3442 = vmatprep.mubr.f32.mxu0 0.0
        %v3443 = vand.u32 %v1433, 4294901760
        %3444 = vmatmul.mubr.f32.gmra.mxu0 %v3443
        %v3445 = vpop.f32.mrf.mxu0
        %v3446 = vadd.f32 %v3374, %v3445
        %v3447 = vpop.f32.mrf.mxu0
        %3448 = vdwg.mxu0
        %3450 = vrot.lane.b32.xlu0 %v3446, 16
        %v3451 = vpop.permute.xlu0 %3450
        %vm3453 = vcmask 130048
        %v3454 = vsel %vm3453, %v2996, %v3451
        %v3455 = vld [vmem:[%s6] sm:$0x1]
        %v3457 = vlaneseq
        %v3458 = vshrl.u32 %v3457, 7
        %v3459 = vsub.s32 0, %v3458
        %v3460 = vrot.slane %v3455, %v3459
        %v3462 = vadd.f32 %v3454, %v3460
        %v3463 = vsel %vm489, %v3462, 0.0
        %3464 = vadd.xlane.f32.xlu0 %v3463
        %v3465 = vpop.xlane.xlu0 %3464
        %v3466 = vrcp.pop 32.0
        %v3467 = vmul.f32 %v3465, %v3466
        %v3468 = vsub.f32 %v3462, %v3467
        %v3469 = vmul.f32 %v3468, %v3468
        %v3470 = vsel %vm489, %v3469, 0.0
        %3471 = vadd.xlane.f32.xlu0 %v3470
        %v3472 = vpop.xlane.xlu0 %3471
        %v3473 = vrcp.pop 31.0
        %v3474 = vmul.f32 %v3472, %v3473
        %v3475 = vrsqrt.pop %v3474
        %v3476 = vmul.f32 %v3474, %v3475
        %vm3477 = vcmp.eq.f32.partialorder %v3474, inf
        %v3478 = vsel %vm3477, %v3474, %v3476
        %vm3479 = vcmp.eq.f32.partialorder %v3474, 0.0
        %v3480 = vand.u32 %v3474, 2147483648
        %v3481 = vsel %vm3479, %v3480, %v3478
        %v3482 = vadd.f32 %v3481, 1e-06
        %v3483 = vrcp.pop %v3482
        %v3484 = vld [vmem:[%s7] sm:$0x1]
        %v3485 = vmul.f32 %v3468, %v3483
        %v3487 = vlaneseq
        %v3488 = vshrl.u32 %v3487, 7
        %v3489 = vsub.s32 0, %v3488
        %v3490 = vrot.slane %v3484, %v3489
        %v3492 = vmul.f32 %v3490, %v3485
        %v3493 = vld [vmem:[%s8] sm:$0x1]
        %v3495 = vlaneseq
        %v3496 = vshrl.u32 %v3495, 7
        %v3497 = vsub.s32 0, %v3496
        %v3498 = vrot.slane %v3493, %v3497
        %v3500 = vadd.f32 %v3492, %v3498
        %v3501 = vadd.f32 %v3500, %v482
        %v3502 = vld [vmem:[%s9] sm:$0xff]
        %v3503 = vld [vmem:[%s9 + $0x8] sm:$0xff]
        %v3504 = vld [vmem:[%s9 + $0x10] sm:$0xff]
        %v3505 = vld [vmem:[%s9 + $0x18] sm:$0xff]
        %v3506 = vld [vmem:[%s10] sm:$0x1]
        %v3508 = vlaneseq
        %v3509 = vshrl.u32 %v3508, 7
        %v3510 = vsub.s32 0, %v3509
        %v3511 = vrot.slane %v3506, %v3510
        %v3514 = vsel %vm489, %v3501, 0
        %3516 = vmatprep.subr.mxu0 0.0
        %3517 = vmatpush1.msra.mxu0 0.0
        %3518 = vmatprep.subr.mxu0 0.0
        %3519 = vmatpush1.msra.mxu0 0.0
        %3520 = vmatprep.subr.mxu0 0.0
        %3521 = vmatpush1.msra.mxu0 0.0
        %3522 = vmatprep.subr.mxu0 0.0
        %3523 = vmatpush1.msra.mxu0 0.0
        %3524 = vmatprep.subr.mxu0 0.0
        %3525 = vmatpush1.msra.mxu0 0.0
        %3526 = vmatprep.subr.mxu0 0.0
        %3527 = vmatpush1.msra.mxu0 0.0
        %3528 = vmatprep.subr.mxu0 0.0
        %3529 = vmatpush1.msra.mxu0 0.0
        %3530 = vmatprep.subr.mxu0 0.0
        %3531 = vmatpush1.msra.mxu0 0.0
        %3532 = vmatprep.subr.mxu0 0.0
        %3533 = vmatpush1.msra.mxu0 0.0
        %3534 = vmatprep.subr.mxu0 0.0
        %3535 = vmatpush1.msra.mxu0 0.0
        %3536 = vmatprep.subr.mxu0 0.0
        %3537 = vmatpush1.msra.mxu0 0.0
        %3538 = vmatprep.subr.mxu0 0.0
        %3539 = vmatpush1.msra.mxu0 0.0
        %3540 = vmatprep.subr.mxu0 0.0
        %v3541 = vand.u32 %v3505, 4294901760
        %3542 = vmatpush1.msra.mxu0 %v3541
        %3543 = vmatprep.subr.mxu0 0.0
        %v3544 = vand.u32 %v3504, 4294901760
        %3545 = vmatpush1.msra.mxu0 %v3544
        %3546 = vmatprep.subr.mxu0 0.0
        %v3547 = vand.u32 %v3503, 4294901760
        %3548 = vmatpush1.msra.mxu0 %v3547
        %3549 = vmatprep.subr.mxu0 0.0
        %v3550 = vand.u32 %v3502, 4294901760
        %3551 = vmatpush1.msra.mxu0 %v3550
        %3552 = vmatprep.subr.mxu0 0.0
        %3553 = vmatpush2.msra.mxu0 0.0
        %3554 = vmatprep.subr.mxu0 0.0
        %3555 = vmatpush2.msra.mxu0 0.0
        %3556 = vmatprep.subr.mxu0 0.0
        %3557 = vmatpush2.msra.mxu0 0.0
        %3558 = vmatprep.subr.mxu0 0.0
        %3559 = vmatpush2.msra.mxu0 0.0
        %3560 = vmatprep.subr.mxu0 0.0
        %3561 = vmatpush2.msra.mxu0 0.0
        %3562 = vmatprep.subr.mxu0 0.0
        %3563 = vmatpush2.msra.mxu0 0.0
        %3564 = vmatprep.subr.mxu0 0.0
        %3565 = vmatpush2.msra.mxu0 0.0
        %3566 = vmatprep.subr.mxu0 0.0
        %3567 = vmatpush2.msra.mxu0 0.0
        %3568 = vmatprep.subr.mxu0 0.0
        %3569 = vmatpush2.msra.mxu0 0.0
        %3570 = vmatprep.subr.mxu0 0.0
        %3571 = vmatpush2.msra.mxu0 0.0
        %3572 = vmatprep.subr.mxu0 0.0
        %3573 = vmatpush2.msra.mxu0 0.0
        %3574 = vmatprep.subr.mxu0 0.0
        %3575 = vmatpush2.msra.mxu0 0.0
        %3576 = vmatprep.subr.mxu0 0.0
        %3577 = vmatpush2.msra.mxu0 0.0
        %3578 = vmatprep.subr.mxu0 0.0
        %3579 = vmatpush2.msra.mxu0 0.0
        %3580 = vmatprep.subr.mxu0 0.0
        %3581 = vmatpush2.msra.mxu0 0.0
        %3582 = vmatprep.subr.mxu0 0.0
        %3583 = vmatpush2.msra.mxu0 0.0
        %3584 = vmatprep.mubr.f32.mxu0 0.0
        %v3585 = vand.u32 %v3514, 4294901760
        %v3586 = vsub.f32 %v3514, %v3585
        %v3587 = vand.u32 %v3586, 4294901760
        %v3588 = vsub.f32 %v3586, %v3587
        %v3589 = vand.u32 %v3588, 4294901760
        %3590 = vmatmul.mubr.f32.gmra.mxu0 %v3589
        %v3591 = vpop.f32.mrf.mxu0
        %v3592 = vadd.f32 %v3511, %v3591
        %v3593 = vpop.f32.mrf.mxu0
        %3594 = vdwg.mxu0
        %3595 = vmatprep.subr.mxu0 0.0
        %3596 = vmatpush1.msra.mxu0 0.0
        %3597 = vmatprep.subr.mxu0 0.0
        %3598 = vmatpush1.msra.mxu0 0.0
        %3599 = vmatprep.subr.mxu0 0.0
        %3600 = vmatpush1.msra.mxu0 0.0
        %3601 = vmatprep.subr.mxu0 0.0
        %3602 = vmatpush1.msra.mxu0 0.0
        %3603 = vmatprep.subr.mxu0 0.0
        %3604 = vmatpush1.msra.mxu0 0.0
        %3605 = vmatprep.subr.mxu0 0.0
        %3606 = vmatpush1.msra.mxu0 0.0
        %3607 = vmatprep.subr.mxu0 0.0
        %3608 = vmatpush1.msra.mxu0 0.0
        %3609 = vmatprep.subr.mxu0 0.0
        %3610 = vmatpush1.msra.mxu0 0.0
        %3611 = vmatprep.subr.mxu0 0.0
        %3612 = vmatpush1.msra.mxu0 0.0
        %3613 = vmatprep.subr.mxu0 0.0
        %3614 = vmatpush1.msra.mxu0 0.0
        %3615 = vmatprep.subr.mxu0 0.0
        %3616 = vmatpush1.msra.mxu0 0.0
        %3617 = vmatprep.subr.mxu0 0.0
        %3618 = vmatpush1.msra.mxu0 0.0
        %3619 = vmatprep.subr.mxu0 0.0
        %v3620 = vand.u32 %v3505, 4294901760
        %v3621 = vsub.f32 %v3505, %v3620
        %v3622 = vand.u32 %v3621, 4294901760
        %v3623 = vsub.f32 %v3621, %v3622
        %v3624 = vand.u32 %v3623, 4294901760
        %3625 = vmatpush1.msra.mxu0 %v3624
        %3626 = vmatprep.subr.mxu0 0.0
        %v3627 = vand.u32 %v3504, 4294901760
        %v3628 = vsub.f32 %v3504, %v3627
        %v3629 = vand.u32 %v3628, 4294901760
        %v3630 = vsub.f32 %v3628, %v3629
        %v3631 = vand.u32 %v3630, 4294901760
        %3632 = vmatpush1.msra.mxu0 %v3631
        %3633 = vmatprep.subr.mxu0 0.0
        %v3634 = vand.u32 %v3503, 4294901760
        %v3635 = vsub.f32 %v3503, %v3634
        %v3636 = vand.u32 %v3635, 4294901760
        %v3637 = vsub.f32 %v3635, %v3636
        %v3638 = vand.u32 %v3637, 4294901760
        %3639 = vmatpush1.msra.mxu0 %v3638
        %3640 = vmatprep.subr.mxu0 0.0
        %v3641 = vand.u32 %v3502, 4294901760
        %v3642 = vsub.f32 %v3502, %v3641
        %v3643 = vand.u32 %v3642, 4294901760
        %v3644 = vsub.f32 %v3642, %v3643
        %v3645 = vand.u32 %v3644, 4294901760
        %3646 = vmatpush1.msra.mxu0 %v3645
        %3647 = vmatprep.subr.mxu0 0.0
        %3648 = vmatpush2.msra.mxu0 0.0
        %3649 = vmatprep.subr.mxu0 0.0
        %3650 = vmatpush2.msra.mxu0 0.0
        %3651 = vmatprep.subr.mxu0 0.0
        %3652 = vmatpush2.msra.mxu0 0.0
        %3653 = vmatprep.subr.mxu0 0.0
        %3654 = vmatpush2.msra.mxu0 0.0
        %3655 = vmatprep.subr.mxu0 0.0
        %3656 = vmatpush2.msra.mxu0 0.0
        %3657 = vmatprep.subr.mxu0 0.0
        %3658 = vmatpush2.msra.mxu0 0.0
        %3659 = vmatprep.subr.mxu0 0.0
        %3660 = vmatpush2.msra.mxu0 0.0
        %3661 = vmatprep.subr.mxu0 0.0
        %3662 = vmatpush2.msra.mxu0 0.0
        %3663 = vmatprep.subr.mxu0 0.0
        %3664 = vmatpush2.msra.mxu0 0.0
        %3665 = vmatprep.subr.mxu0 0.0
        %3666 = vmatpush2.msra.mxu0 0.0
        %3667 = vmatprep.subr.mxu0 0.0
        %3668 = vmatpush2.msra.mxu0 0.0
        %3669 = vmatprep.subr.mxu0 0.0
        %3670 = vmatpush2.msra.mxu0 0.0
        %3671 = vmatprep.subr.mxu0 0.0
        %3672 = vmatpush2.msra.mxu0 0.0
        %3673 = vmatprep.subr.mxu0 0.0
        %3674 = vmatpush2.msra.mxu0 0.0
        %3675 = vmatprep.subr.mxu0 0.0
        %3676 = vmatpush2.msra.mxu0 0.0
        %3677 = vmatprep.subr.mxu0 0.0
        %3678 = vmatpush2.msra.mxu0 0.0
        %3679 = vmatprep.mubr.f32.mxu0 0.0
        %v3680 = vand.u32 %v3514, 4294901760
        %3681 = vmatmul.mubr.f32.gmra.mxu0 %v3680
        %v3682 = vpop.f32.mrf.mxu0
        %v3683 = vadd.f32 %v3592, %v3682
        %v3684 = vpop.f32.mrf.mxu0
        %3685 = vdwg.mxu0
        %3686 = vmatprep.subr.mxu0 0.0
        %3687 = vmatpush1.msra.mxu0 0.0
        %3688 = vmatprep.subr.mxu0 0.0
        %3689 = vmatpush1.msra.mxu0 0.0
        %3690 = vmatprep.subr.mxu0 0.0
        %3691 = vmatpush1.msra.mxu0 0.0
        %3692 = vmatprep.subr.mxu0 0.0
        %3693 = vmatpush1.msra.mxu0 0.0
        %3694 = vmatprep.subr.mxu0 0.0
        %3695 = vmatpush1.msra.mxu0 0.0
        %3696 = vmatprep.subr.mxu0 0.0
        %3697 = vmatpush1.msra.mxu0 0.0
        %3698 = vmatprep.subr.mxu0 0.0
        %3699 = vmatpush1.msra.mxu0 0.0
        %3700 = vmatprep.subr.mxu0 0.0
        %3701 = vmatpush1.msra.mxu0 0.0
        %3702 = vmatprep.subr.mxu0 0.0
        %3703 = vmatpush1.msra.mxu0 0.0
        %3704 = vmatprep.subr.mxu0 0.0
        %3705 = vmatpush1.msra.mxu0 0.0
        %3706 = vmatprep.subr.mxu0 0.0
        %3707 = vmatpush1.msra.mxu0 0.0
        %3708 = vmatprep.subr.mxu0 0.0
        %3709 = vmatpush1.msra.mxu0 0.0
        %3710 = vmatprep.subr.mxu0 0.0
        %v3711 = vand.u32 %v3505, 4294901760
        %v3712 = vsub.f32 %v3505, %v3711
        %3713 = vmatpush1.msra.mxu0 %v3712
        %3714 = vmatprep.subr.mxu0 0.0
        %v3715 = vand.u32 %v3504, 4294901760
        %v3716 = vsub.f32 %v3504, %v3715
        %3717 = vmatpush1.msra.mxu0 %v3716
        %3718 = vmatprep.subr.mxu0 0.0
        %v3719 = vand.u32 %v3503, 4294901760
        %v3720 = vsub.f32 %v3503, %v3719
        %3721 = vmatpush1.msra.mxu0 %v3720
        %3722 = vmatprep.subr.mxu0 0.0
        %v3723 = vand.u32 %v3502, 4294901760
        %v3724 = vsub.f32 %v3502, %v3723
        %3725 = vmatpush1.msra.mxu0 %v3724
        %3726 = vmatprep.subr.mxu0 0.0
        %3727 = vmatpush2.msra.mxu0 0.0
        %3728 = vmatprep.subr.mxu0 0.0
        %3729 = vmatpush2.msra.mxu0 0.0
        %3730 = vmatprep.subr.mxu0 0.0
        %3731 = vmatpush2.msra.mxu0 0.0
        %3732 = vmatprep.subr.mxu0 0.0
        %3733 = vmatpush2.msra.mxu0 0.0
        %3734 = vmatprep.subr.mxu0 0.0
        %3735 = vmatpush2.msra.mxu0 0.0
        %3736 = vmatprep.subr.mxu0 0.0
        %3737 = vmatpush2.msra.mxu0 0.0
        %3738 = vmatprep.subr.mxu0 0.0
        %3739 = vmatpush2.msra.mxu0 0.0
        %3740 = vmatprep.subr.mxu0 0.0
        %3741 = vmatpush2.msra.mxu0 0.0
        %3742 = vmatprep.subr.mxu0 0.0
        %3743 = vmatpush2.msra.mxu0 0.0
        %3744 = vmatprep.subr.mxu0 0.0
        %3745 = vmatpush2.msra.mxu0 0.0
        %3746 = vmatprep.subr.mxu0 0.0
        %3747 = vmatpush2.msra.mxu0 0.0
        %3748 = vmatprep.subr.mxu0 0.0
        %3749 = vmatpush2.msra.mxu0 0.0
        %3750 = vmatprep.subr.mxu0 0.0
        %3751 = vmatpush2.msra.mxu0 0.0
        %3752 = vmatprep.subr.mxu0 0.0
        %3753 = vmatpush2.msra.mxu0 0.0
        %3754 = vmatprep.subr.mxu0 0.0
        %3755 = vmatpush2.msra.mxu0 0.0
        %3756 = vmatprep.subr.mxu0 0.0
        %3757 = vmatpush2.msra.mxu0 0.0
        %3758 = vmatprep.mubr.f32.mxu0 0.0
        %v3759 = vand.u32 %v3514, 4294901760
        %v3760 = vsub.f32 %v3514, %v3759
        %3761 = vmatmul.mubr.f32.gmra.mxu0 %v3760
        %v3762 = vpop.f32.mrf.mxu0
        %v3763 = vadd.f32 %v3683, %v3762
        %v3764 = vpop.f32.mrf.mxu0
        %3765 = vdwg.mxu0
        %3766 = vmatprep.subr.mxu0 0.0
        %3767 = vmatpush1.msra.mxu0 0.0
        %3768 = vmatprep.subr.mxu0 0.0
        %3769 = vmatpush1.msra.mxu0 0.0
        %3770 = vmatprep.subr.mxu0 0.0
        %3771 = vmatpush1.msra.mxu0 0.0
        %3772 = vmatprep.subr.mxu0 0.0
        %3773 = vmatpush1.msra.mxu0 0.0
        %3774 = vmatprep.subr.mxu0 0.0
        %3775 = vmatpush1.msra.mxu0 0.0
        %3776 = vmatprep.subr.mxu0 0.0
        %3777 = vmatpush1.msra.mxu0 0.0
        %3778 = vmatprep.subr.mxu0 0.0
        %3779 = vmatpush1.msra.mxu0 0.0
        %3780 = vmatprep.subr.mxu0 0.0
        %3781 = vmatpush1.msra.mxu0 0.0
        %3782 = vmatprep.subr.mxu0 0.0
        %3783 = vmatpush1.msra.mxu0 0.0
        %3784 = vmatprep.subr.mxu0 0.0
        %3785 = vmatpush1.msra.mxu0 0.0
        %3786 = vmatprep.subr.mxu0 0.0
        %3787 = vmatpush1.msra.mxu0 0.0
        %3788 = vmatprep.subr.mxu0 0.0
        %3789 = vmatpush1.msra.mxu0 0.0
        %3790 = vmatprep.subr.mxu0 0.0
        %v3791 = vand.u32 %v3505, 4294901760
        %3792 = vmatpush1.msra.mxu0 %v3791
        %3793 = vmatprep.subr.mxu0 0.0
        %v3794 = vand.u32 %v3504, 4294901760
        %3795 = vmatpush1.msra.mxu0 %v3794
        %3796 = vmatprep.subr.mxu0 0.0
        %v3797 = vand.u32 %v3503, 4294901760
        %3798 = vmatpush1.msra.mxu0 %v3797
        %3799 = vmatprep.subr.mxu0 0.0
        %v3800 = vand.u32 %v3502, 4294901760
        %3801 = vmatpush1.msra.mxu0 %v3800
        %3802 = vmatprep.subr.mxu0 0.0
        %3803 = vmatpush2.msra.mxu0 0.0
        %3804 = vmatprep.subr.mxu0 0.0
        %3805 = vmatpush2.msra.mxu0 0.0
        %3806 = vmatprep.subr.mxu0 0.0
        %3807 = vmatpush2.msra.mxu0 0.0
        %3808 = vmatprep.subr.mxu0 0.0
        %3809 = vmatpush2.msra.mxu0 0.0
        %3810 = vmatprep.subr.mxu0 0.0
        %3811 = vmatpush2.msra.mxu0 0.0
        %3812 = vmatprep.subr.mxu0 0.0
        %3813 = vmatpush2.msra.mxu0 0.0
        %3814 = vmatprep.subr.mxu0 0.0
        %3815 = vmatpush2.msra.mxu0 0.0
        %3816 = vmatprep.subr.mxu0 0.0
        %3817 = vmatpush2.msra.mxu0 0.0
        %3818 = vmatprep.subr.mxu0 0.0
        %3819 = vmatpush2.msra.mxu0 0.0
        %3820 = vmatprep.subr.mxu0 0.0
        %3821 = vmatpush2.msra.mxu0 0.0
        %3822 = vmatprep.subr.mxu0 0.0
        %3823 = vmatpush2.msra.mxu0 0.0
        %3824 = vmatprep.subr.mxu0 0.0
        %3825 = vmatpush2.msra.mxu0 0.0
        %3826 = vmatprep.subr.mxu0 0.0
        %3827 = vmatpush2.msra.mxu0 0.0
        %3828 = vmatprep.subr.mxu0 0.0
        %3829 = vmatpush2.msra.mxu0 0.0
        %3830 = vmatprep.subr.mxu0 0.0
        %3831 = vmatpush2.msra.mxu0 0.0
        %3832 = vmatprep.subr.mxu0 0.0
        %3833 = vmatpush2.msra.mxu0 0.0
        %3834 = vmatprep.mubr.f32.mxu0 0.0
        %v3835 = vand.u32 %v3514, 4294901760
        %v3836 = vsub.f32 %v3514, %v3835
        %v3837 = vand.u32 %v3836, 4294901760
        %3838 = vmatmul.mubr.f32.gmra.mxu0 %v3837
        %v3839 = vpop.f32.mrf.mxu0
        %v3840 = vadd.f32 %v3763, %v3839
        %v3841 = vpop.f32.mrf.mxu0
        %3842 = vdwg.mxu0
        %3843 = vmatprep.subr.mxu0 0.0
        %3844 = vmatpush1.msra.mxu0 0.0
        %3845 = vmatprep.subr.mxu0 0.0
        %3846 = vmatpush1.msra.mxu0 0.0
        %3847 = vmatprep.subr.mxu0 0.0
        %3848 = vmatpush1.msra.mxu0 0.0
        %3849 = vmatprep.subr.mxu0 0.0
        %3850 = vmatpush1.msra.mxu0 0.0
        %3851 = vmatprep.subr.mxu0 0.0
        %3852 = vmatpush1.msra.mxu0 0.0
        %3853 = vmatprep.subr.mxu0 0.0
        %3854 = vmatpush1.msra.mxu0 0.0
        %3855 = vmatprep.subr.mxu0 0.0
        %3856 = vmatpush1.msra.mxu0 0.0
        %3857 = vmatprep.subr.mxu0 0.0
        %3858 = vmatpush1.msra.mxu0 0.0
        %3859 = vmatprep.subr.mxu0 0.0
        %3860 = vmatpush1.msra.mxu0 0.0
        %3861 = vmatprep.subr.mxu0 0.0
        %3862 = vmatpush1.msra.mxu0 0.0
        %3863 = vmatprep.subr.mxu0 0.0
        %3864 = vmatpush1.msra.mxu0 0.0
        %3865 = vmatprep.subr.mxu0 0.0
        %3866 = vmatpush1.msra.mxu0 0.0
        %3867 = vmatprep.subr.mxu0 0.0
        %v3868 = vand.u32 %v3505, 4294901760
        %v3869 = vsub.f32 %v3505, %v3868
        %v3870 = vand.u32 %v3869, 4294901760
        %3871 = vmatpush1.msra.mxu0 %v3870
        %3872 = vmatprep.subr.mxu0 0.0
        %v3873 = vand.u32 %v3504, 4294901760
        %v3874 = vsub.f32 %v3504, %v3873
        %v3875 = vand.u32 %v3874, 4294901760
        %3876 = vmatpush1.msra.mxu0 %v3875
        %3877 = vmatprep.subr.mxu0 0.0
        %v3878 = vand.u32 %v3503, 4294901760
        %v3879 = vsub.f32 %v3503, %v3878
        %v3880 = vand.u32 %v3879, 4294901760
        %3881 = vmatpush1.msra.mxu0 %v3880
        %3882 = vmatprep.subr.mxu0 0.0
        %v3883 = vand.u32 %v3502, 4294901760
        %v3884 = vsub.f32 %v3502, %v3883
        %v3885 = vand.u32 %v3884, 4294901760
        %3886 = vmatpush1.msra.mxu0 %v3885
        %3887 = vmatprep.subr.mxu0 0.0
        %3888 = vmatpush2.msra.mxu0 0.0
        %3889 = vmatprep.subr.mxu0 0.0
        %3890 = vmatpush2.msra.mxu0 0.0
        %3891 = vmatprep.subr.mxu0 0.0
        %3892 = vmatpush2.msra.mxu0 0.0
        %3893 = vmatprep.subr.mxu0 0.0
        %3894 = vmatpush2.msra.mxu0 0.0
        %3895 = vmatprep.subr.mxu0 0.0
        %3896 = vmatpush2.msra.mxu0 0.0
        %3897 = vmatprep.subr.mxu0 0.0
        %3898 = vmatpush2.msra.mxu0 0.0
        %3899 = vmatprep.subr.mxu0 0.0
        %3900 = vmatpush2.msra.mxu0 0.0
        %3901 = vmatprep.subr.mxu0 0.0
        %3902 = vmatpush2.msra.mxu0 0.0
        %3903 = vmatprep.subr.mxu0 0.0
        %3904 = vmatpush2.msra.mxu0 0.0
        %3905 = vmatprep.subr.mxu0 0.0
        %3906 = vmatpush2.msra.mxu0 0.0
        %3907 = vmatprep.subr.mxu0 0.0
        %3908 = vmatpush2.msra.mxu0 0.0
        %3909 = vmatprep.subr.mxu0 0.0
        %3910 = vmatpush2.msra.mxu0 0.0
        %3911 = vmatprep.subr.mxu0 0.0
        %3912 = vmatpush2.msra.mxu0 0.0
        %3913 = vmatprep.subr.mxu0 0.0
        %3914 = vmatpush2.msra.mxu0 0.0
        %3915 = vmatprep.subr.mxu0 0.0
        %3916 = vmatpush2.msra.mxu0 0.0
        %3917 = vmatprep.subr.mxu0 0.0
        %3918 = vmatpush2.msra.mxu0 0.0
        %3919 = vmatprep.mubr.f32.mxu0 0.0
        %v3920 = vand.u32 %v3514, 4294901760
        %3921 = vmatmul.mubr.f32.gmra.mxu0 %v3920
        %v3922 = vpop.f32.mrf.mxu0
        %v3923 = vadd.f32 %v3840, %v3922
        %v3924 = vpop.f32.mrf.mxu0
        %3925 = vdwg.mxu0
        %3926 = vmatprep.subr.mxu0 0.0
        %3927 = vmatpush1.msra.mxu0 0.0
        %3928 = vmatprep.subr.mxu0 0.0
        %3929 = vmatpush1.msra.mxu0 0.0
        %3930 = vmatprep.subr.mxu0 0.0
        %3931 = vmatpush1.msra.mxu0 0.0
        %3932 = vmatprep.subr.mxu0 0.0
        %3933 = vmatpush1.msra.mxu0 0.0
        %3934 = vmatprep.subr.mxu0 0.0
        %3935 = vmatpush1.msra.mxu0 0.0
        %3936 = vmatprep.subr.mxu0 0.0
        %3937 = vmatpush1.msra.mxu0 0.0
        %3938 = vmatprep.subr.mxu0 0.0
        %3939 = vmatpush1.msra.mxu0 0.0
        %3940 = vmatprep.subr.mxu0 0.0
        %3941 = vmatpush1.msra.mxu0 0.0
        %3942 = vmatprep.subr.mxu0 0.0
        %3943 = vmatpush1.msra.mxu0 0.0
        %3944 = vmatprep.subr.mxu0 0.0
        %3945 = vmatpush1.msra.mxu0 0.0
        %3946 = vmatprep.subr.mxu0 0.0
        %3947 = vmatpush1.msra.mxu0 0.0
        %3948 = vmatprep.subr.mxu0 0.0
        %3949 = vmatpush1.msra.mxu0 0.0
        %3950 = vmatprep.subr.mxu0 0.0
        %v3951 = vand.u32 %v3505, 4294901760
        %3952 = vmatpush1.msra.mxu0 %v3951
        %3953 = vmatprep.subr.mxu0 0.0
        %v3954 = vand.u32 %v3504, 4294901760
        %3955 = vmatpush1.msra.mxu0 %v3954
        %3956 = vmatprep.subr.mxu0 0.0
        %v3957 = vand.u32 %v3503, 4294901760
        %3958 = vmatpush1.msra.mxu0 %v3957
        %3959 = vmatprep.subr.mxu0 0.0
        %v3960 = vand.u32 %v3502, 4294901760
        %3961 = vmatpush1.msra.mxu0 %v3960
        %3962 = vmatprep.subr.mxu0 0.0
        %3963 = vmatpush2.msra.mxu0 0.0
        %3964 = vmatprep.subr.mxu0 0.0
        %3965 = vmatpush2.msra.mxu0 0.0
        %3966 = vmatprep.subr.mxu0 0.0
        %3967 = vmatpush2.msra.mxu0 0.0
        %3968 = vmatprep.subr.mxu0 0.0
        %3969 = vmatpush2.msra.mxu0 0.0
        %3970 = vmatprep.subr.mxu0 0.0
        %3971 = vmatpush2.msra.mxu0 0.0
        %3972 = vmatprep.subr.mxu0 0.0
        %3973 = vmatpush2.msra.mxu0 0.0
        %3974 = vmatprep.subr.mxu0 0.0
        %3975 = vmatpush2.msra.mxu0 0.0
        %3976 = vmatprep.subr.mxu0 0.0
        %3977 = vmatpush2.msra.mxu0 0.0
        %3978 = vmatprep.subr.mxu0 0.0
        %3979 = vmatpush2.msra.mxu0 0.0
        %3980 = vmatprep.subr.mxu0 0.0
        %3981 = vmatpush2.msra.mxu0 0.0
        %3982 = vmatprep.subr.mxu0 0.0
        %3983 = vmatpush2.msra.mxu0 0.0
        %3984 = vmatprep.subr.mxu0 0.0
        %3985 = vmatpush2.msra.mxu0 0.0
        %3986 = vmatprep.subr.mxu0 0.0
        %3987 = vmatpush2.msra.mxu0 0.0
        %3988 = vmatprep.subr.mxu0 0.0
        %3989 = vmatpush2.msra.mxu0 0.0
        %3990 = vmatprep.subr.mxu0 0.0
        %3991 = vmatpush2.msra.mxu0 0.0
        %3992 = vmatprep.subr.mxu0 0.0
        %3993 = vmatpush2.msra.mxu0 0.0
        %3994 = vmatprep.mubr.f32.mxu0 0.0
        %v3995 = vand.u32 %v3514, 4294901760
        %3996 = vmatmul.mubr.f32.gmra.mxu0 %v3995
        %v3997 = vpop.f32.mrf.mxu0
        %v3998 = vadd.f32 %v3923, %v3997
        %v3999 = vpop.f32.mrf.mxu0
        %4000 = vdwg.mxu0
        %v4001 = vmax.f32 %v3998, 0.0
        %v4002 = vld [vmem:[%s11] sm:$0xff]
        %v4003 = vld [vmem:[%s11 + $0x8] sm:$0xff]
        %v4004 = vld [vmem:[%s11 + $0x10] sm:$0xff]
        %v4005 = vld [vmem:[%s11 + $0x18] sm:$0xff]
        %v4006 = vld [vmem:[%s12] sm:$0x1]
        %v4008 = vlaneseq
        %v4009 = vshrl.u32 %v4008, 7
        %v4010 = vsub.s32 0, %v4009
        %v4011 = vrot.slane %v4006, %v4010
        %v4014 = vsel %vm489, %v4001, 0
        %4016 = vmatprep.subr.mxu0 0.0
        %4017 = vmatpush1.msra.mxu0 0.0
        %4018 = vmatprep.subr.mxu0 0.0
        %4019 = vmatpush1.msra.mxu0 0.0
        %4020 = vmatprep.subr.mxu0 0.0
        %4021 = vmatpush1.msra.mxu0 0.0
        %4022 = vmatprep.subr.mxu0 0.0
        %4023 = vmatpush1.msra.mxu0 0.0
        %4024 = vmatprep.subr.mxu0 0.0
        %4025 = vmatpush1.msra.mxu0 0.0
        %4026 = vmatprep.subr.mxu0 0.0
        %4027 = vmatpush1.msra.mxu0 0.0
        %4028 = vmatprep.subr.mxu0 0.0
        %4029 = vmatpush1.msra.mxu0 0.0
        %4030 = vmatprep.subr.mxu0 0.0
        %4031 = vmatpush1.msra.mxu0 0.0
        %4032 = vmatprep.subr.mxu0 0.0
        %4033 = vmatpush1.msra.mxu0 0.0
        %4034 = vmatprep.subr.mxu0 0.0
        %4035 = vmatpush1.msra.mxu0 0.0
        %4036 = vmatprep.subr.mxu0 0.0
        %4037 = vmatpush1.msra.mxu0 0.0
        %4038 = vmatprep.subr.mxu0 0.0
        %4039 = vmatpush1.msra.mxu0 0.0
        %4040 = vmatprep.subr.mxu0 0.0
        %v4041 = vand.u32 %v4005, 4294901760
        %4042 = vmatpush1.msra.mxu0 %v4041
        %4043 = vmatprep.subr.mxu0 0.0
        %v4044 = vand.u32 %v4004, 4294901760
        %4045 = vmatpush1.msra.mxu0 %v4044
        %4046 = vmatprep.subr.mxu0 0.0
        %v4047 = vand.u32 %v4003, 4294901760
        %4048 = vmatpush1.msra.mxu0 %v4047
        %4049 = vmatprep.subr.mxu0 0.0
        %v4050 = vand.u32 %v4002, 4294901760
        %4051 = vmatpush1.msra.mxu0 %v4050
        %4052 = vmatprep.subr.mxu0 0.0
        %4053 = vmatpush2.msra.mxu0 0.0
        %4054 = vmatprep.subr.mxu0 0.0
        %4055 = vmatpush2.msra.mxu0 0.0
        %4056 = vmatprep.subr.mxu0 0.0
        %4057 = vmatpush2.msra.mxu0 0.0
        %4058 = vmatprep.subr.mxu0 0.0
        %4059 = vmatpush2.msra.mxu0 0.0
        %4060 = vmatprep.subr.mxu0 0.0
        %4061 = vmatpush2.msra.mxu0 0.0
        %4062 = vmatprep.subr.mxu0 0.0
        %4063 = vmatpush2.msra.mxu0 0.0
        %4064 = vmatprep.subr.mxu0 0.0
        %4065 = vmatpush2.msra.mxu0 0.0
        %4066 = vmatprep.subr.mxu0 0.0
        %4067 = vmatpush2.msra.mxu0 0.0
        %4068 = vmatprep.subr.mxu0 0.0
        %4069 = vmatpush2.msra.mxu0 0.0
        %4070 = vmatprep.subr.mxu0 0.0
        %4071 = vmatpush2.msra.mxu0 0.0
        %4072 = vmatprep.subr.mxu0 0.0
        %4073 = vmatpush2.msra.mxu0 0.0
        %4074 = vmatprep.subr.mxu0 0.0
        %4075 = vmatpush2.msra.mxu0 0.0
        %4076 = vmatprep.subr.mxu0 0.0
        %4077 = vmatpush2.msra.mxu0 0.0
        %4078 = vmatprep.subr.mxu0 0.0
        %4079 = vmatpush2.msra.mxu0 0.0
        %4080 = vmatprep.subr.mxu0 0.0
        %4081 = vmatpush2.msra.mxu0 0.0
        %4082 = vmatprep.subr.mxu0 0.0
        %4083 = vmatpush2.msra.mxu0 0.0
        %4084 = vmatprep.mubr.f32.mxu0 0.0
        %v4085 = vand.u32 %v4014, 4294901760
        %v4086 = vsub.f32 %v4014, %v4085
        %v4087 = vand.u32 %v4086, 4294901760
        %v4088 = vsub.f32 %v4086, %v4087
        %v4089 = vand.u32 %v4088, 4294901760
        %4090 = vmatmul.mubr.f32.gmra.mxu0 %v4089
        %v4091 = vpop.f32.mrf.mxu0
        %v4092 = vadd.f32 %v4011, %v4091
        %v4093 = vpop.f32.mrf.mxu0
        %4094 = vdwg.mxu0
        %4095 = vmatprep.subr.mxu0 0.0
        %4096 = vmatpush1.msra.mxu0 0.0
        %4097 = vmatprep.subr.mxu0 0.0
        %4098 = vmatpush1.msra.mxu0 0.0
        %4099 = vmatprep.subr.mxu0 0.0
        %4100 = vmatpush1.msra.mxu0 0.0
        %4101 = vmatprep.subr.mxu0 0.0
        %4102 = vmatpush1.msra.mxu0 0.0
        %4103 = vmatprep.subr.mxu0 0.0
        %4104 = vmatpush1.msra.mxu0 0.0
        %4105 = vmatprep.subr.mxu0 0.0
        %4106 = vmatpush1.msra.mxu0 0.0
        %4107 = vmatprep.subr.mxu0 0.0
        %4108 = vmatpush1.msra.mxu0 0.0
        %4109 = vmatprep.subr.mxu0 0.0
        %4110 = vmatpush1.msra.mxu0 0.0
        %4111 = vmatprep.subr.mxu0 0.0
        %4112 = vmatpush1.msra.mxu0 0.0
        %4113 = vmatprep.subr.mxu0 0.0
        %4114 = vmatpush1.msra.mxu0 0.0
        %4115 = vmatprep.subr.mxu0 0.0
        %4116 = vmatpush1.msra.mxu0 0.0
        %4117 = vmatprep.subr.mxu0 0.0
        %4118 = vmatpush1.msra.mxu0 0.0
        %4119 = vmatprep.subr.mxu0 0.0
        %v4120 = vand.u32 %v4005, 4294901760
        %v4121 = vsub.f32 %v4005, %v4120
        %v4122 = vand.u32 %v4121, 4294901760
        %v4123 = vsub.f32 %v4121, %v4122
        %v4124 = vand.u32 %v4123, 4294901760
        %4125 = vmatpush1.msra.mxu0 %v4124
        %4126 = vmatprep.subr.mxu0 0.0
        %v4127 = vand.u32 %v4004, 4294901760
        %v4128 = vsub.f32 %v4004, %v4127
        %v4129 = vand.u32 %v4128, 4294901760
        %v4130 = vsub.f32 %v4128, %v4129
        %v4131 = vand.u32 %v4130, 4294901760
        %4132 = vmatpush1.msra.mxu0 %v4131
        %4133 = vmatprep.subr.mxu0 0.0
        %v4134 = vand.u32 %v4003, 4294901760
        %v4135 = vsub.f32 %v4003, %v4134
        %v4136 = vand.u32 %v4135, 4294901760
        %v4137 = vsub.f32 %v4135, %v4136
        %v4138 = vand.u32 %v4137, 4294901760
        %4139 = vmatpush1.msra.mxu0 %v4138
        %4140 = vmatprep.subr.mxu0 0.0
        %v4141 = vand.u32 %v4002, 4294901760
        %v4142 = vsub.f32 %v4002, %v4141
        %v4143 = vand.u32 %v4142, 4294901760
        %v4144 = vsub.f32 %v4142, %v4143
        %v4145 = vand.u32 %v4144, 4294901760
        %4146 = vmatpush1.msra.mxu0 %v4145
        %4147 = vmatprep.subr.mxu0 0.0
        %4148 = vmatpush2.msra.mxu0 0.0
        %4149 = vmatprep.subr.mxu0 0.0
        %4150 = vmatpush2.msra.mxu0 0.0
        %4151 = vmatprep.subr.mxu0 0.0
        %4152 = vmatpush2.msra.mxu0 0.0
        %4153 = vmatprep.subr.mxu0 0.0
        %4154 = vmatpush2.msra.mxu0 0.0
        %4155 = vmatprep.subr.mxu0 0.0
        %4156 = vmatpush2.msra.mxu0 0.0
        %4157 = vmatprep.subr.mxu0 0.0
        %4158 = vmatpush2.msra.mxu0 0.0
        %4159 = vmatprep.subr.mxu0 0.0
        %4160 = vmatpush2.msra.mxu0 0.0
        %4161 = vmatprep.subr.mxu0 0.0
        %4162 = vmatpush2.msra.mxu0 0.0
        %4163 = vmatprep.subr.mxu0 0.0
        %4164 = vmatpush2.msra.mxu0 0.0
        %4165 = vmatprep.subr.mxu0 0.0
        %4166 = vmatpush2.msra.mxu0 0.0
        %4167 = vmatprep.subr.mxu0 0.0
        %4168 = vmatpush2.msra.mxu0 0.0
        %4169 = vmatprep.subr.mxu0 0.0
        %4170 = vmatpush2.msra.mxu0 0.0
        %4171 = vmatprep.subr.mxu0 0.0
        %4172 = vmatpush2.msra.mxu0 0.0
        %4173 = vmatprep.subr.mxu0 0.0
        %4174 = vmatpush2.msra.mxu0 0.0
        %4175 = vmatprep.subr.mxu0 0.0
        %4176 = vmatpush2.msra.mxu0 0.0
        %4177 = vmatprep.subr.mxu0 0.0
        %4178 = vmatpush2.msra.mxu0 0.0
        %4179 = vmatprep.mubr.f32.mxu0 0.0
        %v4180 = vand.u32 %v4014, 4294901760
        %4181 = vmatmul.mubr.f32.gmra.mxu0 %v4180
        %v4182 = vpop.f32.mrf.mxu0
        %v4183 = vadd.f32 %v4092, %v4182
        %v4184 = vpop.f32.mrf.mxu0
        %4185 = vdwg.mxu0
        %4186 = vmatprep.subr.mxu0 0.0
        %4187 = vmatpush1.msra.mxu0 0.0
        %4188 = vmatprep.subr.mxu0 0.0
        %4189 = vmatpush1.msra.mxu0 0.0
        %4190 = vmatprep.subr.mxu0 0.0
        %4191 = vmatpush1.msra.mxu0 0.0
        %4192 = vmatprep.subr.mxu0 0.0
        %4193 = vmatpush1.msra.mxu0 0.0
        %4194 = vmatprep.subr.mxu0 0.0
        %4195 = vmatpush1.msra.mxu0 0.0
        %4196 = vmatprep.subr.mxu0 0.0
        %4197 = vmatpush1.msra.mxu0 0.0
        %4198 = vmatprep.subr.mxu0 0.0
        %4199 = vmatpush1.msra.mxu0 0.0
        %4200 = vmatprep.subr.mxu0 0.0
        %4201 = vmatpush1.msra.mxu0 0.0
        %4202 = vmatprep.subr.mxu0 0.0
        %4203 = vmatpush1.msra.mxu0 0.0
        %4204 = vmatprep.subr.mxu0 0.0
        %4205 = vmatpush1.msra.mxu0 0.0
        %4206 = vmatprep.subr.mxu0 0.0
        %4207 = vmatpush1.msra.mxu0 0.0
        %4208 = vmatprep.subr.mxu0 0.0
        %4209 = vmatpush1.msra.mxu0 0.0
        %4210 = vmatprep.subr.mxu0 0.0
        %v4211 = vand.u32 %v4005, 4294901760
        %v4212 = vsub.f32 %v4005, %v4211
        %4213 = vmatpush1.msra.mxu0 %v4212
        %4214 = vmatprep.subr.mxu0 0.0
        %v4215 = vand.u32 %v4004, 4294901760
        %v4216 = vsub.f32 %v4004, %v4215
        %4217 = vmatpush1.msra.mxu0 %v4216
        %4218 = vmatprep.subr.mxu0 0.0
        %v4219 = vand.u32 %v4003, 4294901760
        %v4220 = vsub.f32 %v4003, %v4219
        %4221 = vmatpush1.msra.mxu0 %v4220
        %4222 = vmatprep.subr.mxu0 0.0
        %v4223 = vand.u32 %v4002, 4294901760
        %v4224 = vsub.f32 %v4002, %v4223
        %4225 = vmatpush1.msra.mxu0 %v4224
        %4226 = vmatprep.subr.mxu0 0.0
        %4227 = vmatpush2.msra.mxu0 0.0
        %4228 = vmatprep.subr.mxu0 0.0
        %4229 = vmatpush2.msra.mxu0 0.0
        %4230 = vmatprep.subr.mxu0 0.0
        %4231 = vmatpush2.msra.mxu0 0.0
        %4232 = vmatprep.subr.mxu0 0.0
        %4233 = vmatpush2.msra.mxu0 0.0
        %4234 = vmatprep.subr.mxu0 0.0
        %4235 = vmatpush2.msra.mxu0 0.0
        %4236 = vmatprep.subr.mxu0 0.0
        %4237 = vmatpush2.msra.mxu0 0.0
        %4238 = vmatprep.subr.mxu0 0.0
        %4239 = vmatpush2.msra.mxu0 0.0
        %4240 = vmatprep.subr.mxu0 0.0
        %4241 = vmatpush2.msra.mxu0 0.0
        %4242 = vmatprep.subr.mxu0 0.0
        %4243 = vmatpush2.msra.mxu0 0.0
        %4244 = vmatprep.subr.mxu0 0.0
        %4245 = vmatpush2.msra.mxu0 0.0
        %4246 = vmatprep.subr.mxu0 0.0
        %4247 = vmatpush2.msra.mxu0 0.0
        %4248 = vmatprep.subr.mxu0 0.0
        %4249 = vmatpush2.msra.mxu0 0.0
        %4250 = vmatprep.subr.mxu0 0.0
        %4251 = vmatpush2.msra.mxu0 0.0
        %4252 = vmatprep.subr.mxu0 0.0
        %4253 = vmatpush2.msra.mxu0 0.0
        %4254 = vmatprep.subr.mxu0 0.0
        %4255 = vmatpush2.msra.mxu0 0.0
        %4256 = vmatprep.subr.mxu0 0.0
        %4257 = vmatpush2.msra.mxu0 0.0
        %4258 = vmatprep.mubr.f32.mxu0 0.0
        %v4259 = vand.u32 %v4014, 4294901760
        %v4260 = vsub.f32 %v4014, %v4259
        %4261 = vmatmul.mubr.f32.gmra.mxu0 %v4260
        %v4262 = vpop.f32.mrf.mxu0
        %v4263 = vadd.f32 %v4183, %v4262
        %v4264 = vpop.f32.mrf.mxu0
        %4265 = vdwg.mxu0
        %4266 = vmatprep.subr.mxu0 0.0
        %4267 = vmatpush1.msra.mxu0 0.0
        %4268 = vmatprep.subr.mxu0 0.0
        %4269 = vmatpush1.msra.mxu0 0.0
        %4270 = vmatprep.subr.mxu0 0.0
        %4271 = vmatpush1.msra.mxu0 0.0
        %4272 = vmatprep.subr.mxu0 0.0
        %4273 = vmatpush1.msra.mxu0 0.0
        %4274 = vmatprep.subr.mxu0 0.0
        %4275 = vmatpush1.msra.mxu0 0.0
        %4276 = vmatprep.subr.mxu0 0.0
        %4277 = vmatpush1.msra.mxu0 0.0
        %4278 = vmatprep.subr.mxu0 0.0
        %4279 = vmatpush1.msra.mxu0 0.0
        %4280 = vmatprep.subr.mxu0 0.0
        %4281 = vmatpush1.msra.mxu0 0.0
        %4282 = vmatprep.subr.mxu0 0.0
        %4283 = vmatpush1.msra.mxu0 0.0
        %4284 = vmatprep.subr.mxu0 0.0
        %4285 = vmatpush1.msra.mxu0 0.0
        %4286 = vmatprep.subr.mxu0 0.0
        %4287 = vmatpush1.msra.mxu0 0.0
        %4288 = vmatprep.subr.mxu0 0.0
        %4289 = vmatpush1.msra.mxu0 0.0
        %4290 = vmatprep.subr.mxu0 0.0
        %v4291 = vand.u32 %v4005, 4294901760
        %4292 = vmatpush1.msra.mxu0 %v4291
        %4293 = vmatprep.subr.mxu0 0.0
        %v4294 = vand.u32 %v4004, 4294901760
        %4295 = vmatpush1.msra.mxu0 %v4294
        %4296 = vmatprep.subr.mxu0 0.0
        %v4297 = vand.u32 %v4003, 4294901760
        %4298 = vmatpush1.msra.mxu0 %v4297
        %4299 = vmatprep.subr.mxu0 0.0
        %v4300 = vand.u32 %v4002, 4294901760
        %4301 = vmatpush1.msra.mxu0 %v4300
        %4302 = vmatprep.subr.mxu0 0.0
        %4303 = vmatpush2.msra.mxu0 0.0
        %4304 = vmatprep.subr.mxu0 0.0
        %4305 = vmatpush2.msra.mxu0 0.0
        %4306 = vmatprep.subr.mxu0 0.0
        %4307 = vmatpush2.msra.mxu0 0.0
        %4308 = vmatprep.subr.mxu0 0.0
        %4309 = vmatpush2.msra.mxu0 0.0
        %4310 = vmatprep.subr.mxu0 0.0
        %4311 = vmatpush2.msra.mxu0 0.0
        %4312 = vmatprep.subr.mxu0 0.0
        %4313 = vmatpush2.msra.mxu0 0.0
        %4314 = vmatprep.subr.mxu0 0.0
        %4315 = vmatpush2.msra.mxu0 0.0
        %4316 = vmatprep.subr.mxu0 0.0
        %4317 = vmatpush2.msra.mxu0 0.0
        %4318 = vmatprep.subr.mxu0 0.0
        %4319 = vmatpush2.msra.mxu0 0.0
        %4320 = vmatprep.subr.mxu0 0.0
        %4321 = vmatpush2.msra.mxu0 0.0
        %4322 = vmatprep.subr.mxu0 0.0
        %4323 = vmatpush2.msra.mxu0 0.0
        %4324 = vmatprep.subr.mxu0 0.0
        %4325 = vmatpush2.msra.mxu0 0.0
        %4326 = vmatprep.subr.mxu0 0.0
        %4327 = vmatpush2.msra.mxu0 0.0
        %4328 = vmatprep.subr.mxu0 0.0
        %4329 = vmatpush2.msra.mxu0 0.0
        %4330 = vmatprep.subr.mxu0 0.0
        %4331 = vmatpush2.msra.mxu0 0.0
        %4332 = vmatprep.subr.mxu0 0.0
        %4333 = vmatpush2.msra.mxu0 0.0
        %4334 = vmatprep.mubr.f32.mxu0 0.0
        %v4335 = vand.u32 %v4014, 4294901760
        %v4336 = vsub.f32 %v4014, %v4335
        %v4337 = vand.u32 %v4336, 4294901760
        %4338 = vmatmul.mubr.f32.gmra.mxu0 %v4337
        %v4339 = vpop.f32.mrf.mxu0
        %v4340 = vadd.f32 %v4263, %v4339
        %v4341 = vpop.f32.mrf.mxu0
        %4342 = vdwg.mxu0
        %4343 = vmatprep.subr.mxu0 0.0
        %4344 = vmatpush1.msra.mxu0 0.0
        %4345 = vmatprep.subr.mxu0 0.0
        %4346 = vmatpush1.msra.mxu0 0.0
        %4347 = vmatprep.subr.mxu0 0.0
        %4348 = vmatpush1.msra.mxu0 0.0
        %4349 = vmatprep.subr.mxu0 0.0
        %4350 = vmatpush1.msra.mxu0 0.0
        %4351 = vmatprep.subr.mxu0 0.0
        %4352 = vmatpush1.msra.mxu0 0.0
        %4353 = vmatprep.subr.mxu0 0.0
        %4354 = vmatpush1.msra.mxu0 0.0
        %4355 = vmatprep.subr.mxu0 0.0
        %4356 = vmatpush1.msra.mxu0 0.0
        %4357 = vmatprep.subr.mxu0 0.0
        %4358 = vmatpush1.msra.mxu0 0.0
        %4359 = vmatprep.subr.mxu0 0.0
        %4360 = vmatpush1.msra.mxu0 0.0
        %4361 = vmatprep.subr.mxu0 0.0
        %4362 = vmatpush1.msra.mxu0 0.0
        %4363 = vmatprep.subr.mxu0 0.0
        %4364 = vmatpush1.msra.mxu0 0.0
        %4365 = vmatprep.subr.mxu0 0.0
        %4366 = vmatpush1.msra.mxu0 0.0
        %4367 = vmatprep.subr.mxu0 0.0
        %v4368 = vand.u32 %v4005, 4294901760
        %v4369 = vsub.f32 %v4005, %v4368
        %v4370 = vand.u32 %v4369, 4294901760
        %4371 = vmatpush1.msra.mxu0 %v4370
        %4372 = vmatprep.subr.mxu0 0.0
        %v4373 = vand.u32 %v4004, 4294901760
        %v4374 = vsub.f32 %v4004, %v4373
        %v4375 = vand.u32 %v4374, 4294901760
        %4376 = vmatpush1.msra.mxu0 %v4375
        %4377 = vmatprep.subr.mxu0 0.0
        %v4378 = vand.u32 %v4003, 4294901760
        %v4379 = vsub.f32 %v4003, %v4378
        %v4380 = vand.u32 %v4379, 4294901760
        %4381 = vmatpush1.msra.mxu0 %v4380
        %4382 = vmatprep.subr.mxu0 0.0
        %v4383 = vand.u32 %v4002, 4294901760
        %v4384 = vsub.f32 %v4002, %v4383
        %v4385 = vand.u32 %v4384, 4294901760
        %4386 = vmatpush1.msra.mxu0 %v4385
        %4387 = vmatprep.subr.mxu0 0.0
        %4388 = vmatpush2.msra.mxu0 0.0
        %4389 = vmatprep.subr.mxu0 0.0
        %4390 = vmatpush2.msra.mxu0 0.0
        %4391 = vmatprep.subr.mxu0 0.0
        %4392 = vmatpush2.msra.mxu0 0.0
        %4393 = vmatprep.subr.mxu0 0.0
        %4394 = vmatpush2.msra.mxu0 0.0
        %4395 = vmatprep.subr.mxu0 0.0
        %4396 = vmatpush2.msra.mxu0 0.0
        %4397 = vmatprep.subr.mxu0 0.0
        %4398 = vmatpush2.msra.mxu0 0.0
        %4399 = vmatprep.subr.mxu0 0.0
        %4400 = vmatpush2.msra.mxu0 0.0
        %4401 = vmatprep.subr.mxu0 0.0
        %4402 = vmatpush2.msra.mxu0 0.0
        %4403 = vmatprep.subr.mxu0 0.0
        %4404 = vmatpush2.msra.mxu0 0.0
        %4405 = vmatprep.subr.mxu0 0.0
        %4406 = vmatpush2.msra.mxu0 0.0
        %4407 = vmatprep.subr.mxu0 0.0
        %4408 = vmatpush2.msra.mxu0 0.0
        %4409 = vmatprep.subr.mxu0 0.0
        %4410 = vmatpush2.msra.mxu0 0.0
        %4411 = vmatprep.subr.mxu0 0.0
        %4412 = vmatpush2.msra.mxu0 0.0
        %4413 = vmatprep.subr.mxu0 0.0
        %4414 = vmatpush2.msra.mxu0 0.0
        %4415 = vmatprep.subr.mxu0 0.0
        %4416 = vmatpush2.msra.mxu0 0.0
        %4417 = vmatprep.subr.mxu0 0.0
        %4418 = vmatpush2.msra.mxu0 0.0
        %4419 = vmatprep.mubr.f32.mxu0 0.0
        %v4420 = vand.u32 %v4014, 4294901760
        %4421 = vmatmul.mubr.f32.gmra.mxu0 %v4420
        %v4422 = vpop.f32.mrf.mxu0
        %v4423 = vadd.f32 %v4340, %v4422
        %v4424 = vpop.f32.mrf.mxu0
        %4425 = vdwg.mxu0
        %4426 = vmatprep.subr.mxu0 0.0
        %4427 = vmatpush1.msra.mxu0 0.0
        %4428 = vmatprep.subr.mxu0 0.0
        %4429 = vmatpush1.msra.mxu0 0.0
        %4430 = vmatprep.subr.mxu0 0.0
        %4431 = vmatpush1.msra.mxu0 0.0
        %4432 = vmatprep.subr.mxu0 0.0
        %4433 = vmatpush1.msra.mxu0 0.0
        %4434 = vmatprep.subr.mxu0 0.0
        %4435 = vmatpush1.msra.mxu0 0.0
        %4436 = vmatprep.subr.mxu0 0.0
        %4437 = vmatpush1.msra.mxu0 0.0
        %4438 = vmatprep.subr.mxu0 0.0
        %4439 = vmatpush1.msra.mxu0 0.0
        %4440 = vmatprep.subr.mxu0 0.0
        %4441 = vmatpush1.msra.mxu0 0.0
        %4442 = vmatprep.subr.mxu0 0.0
        %4443 = vmatpush1.msra.mxu0 0.0
        %4444 = vmatprep.subr.mxu0 0.0
        %4445 = vmatpush1.msra.mxu0 0.0
        %4446 = vmatprep.subr.mxu0 0.0
        %4447 = vmatpush1.msra.mxu0 0.0
        %4448 = vmatprep.subr.mxu0 0.0
        %4449 = vmatpush1.msra.mxu0 0.0
        %4450 = vmatprep.subr.mxu0 0.0
        %v4451 = vand.u32 %v4005, 4294901760
        %4452 = vmatpush1.msra.mxu0 %v4451
        %4453 = vmatprep.subr.mxu0 0.0
        %v4454 = vand.u32 %v4004, 4294901760
        %4455 = vmatpush1.msra.mxu0 %v4454
        %4456 = vmatprep.subr.mxu0 0.0
        %v4457 = vand.u32 %v4003, 4294901760
        %4458 = vmatpush1.msra.mxu0 %v4457
        %4459 = vmatprep.subr.mxu0 0.0
        %v4460 = vand.u32 %v4002, 4294901760
        %4461 = vmatpush1.msra.mxu0 %v4460
        %4462 = vmatprep.subr.mxu0 0.0
        %4463 = vmatpush2.msra.mxu0 0.0
        %4464 = vmatprep.subr.mxu0 0.0
        %4465 = vmatpush2.msra.mxu0 0.0
        %4466 = vmatprep.subr.mxu0 0.0
        %4467 = vmatpush2.msra.mxu0 0.0
        %4468 = vmatprep.subr.mxu0 0.0
        %4469 = vmatpush2.msra.mxu0 0.0
        %4470 = vmatprep.subr.mxu0 0.0
        %4471 = vmatpush2.msra.mxu0 0.0
        %4472 = vmatprep.subr.mxu0 0.0
        %4473 = vmatpush2.msra.mxu0 0.0
        %4474 = vmatprep.subr.mxu0 0.0
        %4475 = vmatpush2.msra.mxu0 0.0
        %4476 = vmatprep.subr.mxu0 0.0
        %4477 = vmatpush2.msra.mxu0 0.0
        %4478 = vmatprep.subr.mxu0 0.0
        %4479 = vmatpush2.msra.mxu0 0.0
        %4480 = vmatprep.subr.mxu0 0.0
        %4481 = vmatpush2.msra.mxu0 0.0
        %4482 = vmatprep.subr.mxu0 0.0
        %4483 = vmatpush2.msra.mxu0 0.0
        %4484 = vmatprep.subr.mxu0 0.0
        %4485 = vmatpush2.msra.mxu0 0.0
        %4486 = vmatprep.subr.mxu0 0.0
        %4487 = vmatpush2.msra.mxu0 0.0
        %4488 = vmatprep.subr.mxu0 0.0
        %4489 = vmatpush2.msra.mxu0 0.0
        %4490 = vmatprep.subr.mxu0 0.0
        %4491 = vmatpush2.msra.mxu0 0.0
        %4492 = vmatprep.subr.mxu0 0.0
        %4493 = vmatpush2.msra.mxu0 0.0
        %4494 = vmatprep.mubr.f32.mxu0 0.0
        %v4495 = vand.u32 %v4014, 4294901760
        %4496 = vmatmul.mubr.f32.gmra.mxu0 %v4495
        %v4497 = vpop.f32.mrf.mxu0
        %v4498 = vadd.f32 %v4423, %v4497
        %v4499 = vpop.f32.mrf.mxu0
        %4500 = vdwg.mxu0
        %v4501 = vadd.f32 %v4498, %v3501
        %4502 = vst.msk [vmem:[%s465] sm:$0xff] %vm489, %v4501
        %s4503 = sand.u32 %s323, 1
        %s4504 = scalar_lea.sflag [#allocation3], %s4503
        %s4505 = sand.u32 %s323, 1
        %s4506 = smul.addr %s4505, 8
        %s4507 = scalar_lea.vmem [#allocation2], %s4506
        // Predicated region
        $region73: #{graph_module_forward.1} parent=71 // pred_check
          %p4508 = pneg %p333
        $region74: #{graph_module_forward.1} parent=71 // pred_check_branch
          %4510 = sbr.rel (%p4508) target = $region76
        $region75: #{graph_module_forward.1} parent=71 // pred_region
          %s4512 = ssub.s32 128, 128
          %4513 = vsyncadd %s4504, %s4512
          %s4514 = smul.addr %s27, 128
          %s4515 = scalar_lea.hbm %s13, %s4514
          %s4517 = sshll.u32 %s4507, 4
          %s4518 = int_to_ptr.vmem [resolvable:$true] %s4517
          %4520 = dma.vmem_to_hbm [thread:$0]  %s4518, 128, %s4515, %s4504
        $region76: #{graph_module_forward.1} parent=71 // pred_fallthru
          _
      $region72: #{graph_module_forward.1} parent=5 // pred_fallthru
        _
      %p4521 = scmp.le.s32.totalorder 2, %s22
      // Predicated region
      $region77: #{graph_module_forward.1} parent=5 // pred_check
        %p4522 = pneg %p4521
      $region78: #{graph_module_forward.1} parent=5 // pred_check_branch
        %4524 = sbr.rel (%p4522) target = $region80
      $region79: #{graph_module_forward.1} parent=5 // pred_region
        %s4525 = ssub.s32 %s22, 2
        // Predicated region
        $region81: #{graph_module_forward.1} parent=79 // pred_check
          %p4526 = pneg %p339
        $region82: #{graph_module_forward.1} parent=79 // pred_check_branch
          %4528 = sbr.rel (%p4526) target = $region84
        $region83: #{graph_module_forward.1} parent=79 // pred_region
          %s4529 = sand.u32 %s324, 1
          %s4530 = scalar_lea.sflag [#allocation3], %s4529
          %s4531 = sand.u32 %s324, 1
          %s4532 = smul.addr %s4531, 8
          %s4533 = scalar_lea.vmem [#allocation2], %s4532
          %4534 = dma.done %s4530, 128
        $region84: #{graph_module_forward.1} parent=79 // pred_fallthru
          _
      $region80: #{graph_module_forward.1} parent=5 // pred_fallthru
        _
    $region6: #{graph_module_forward.1} parent=1 // loop_footer
      %s26 = sadd.s32 1, %s22
    $region7: #{graph_module_forward.1} parent=1 // loop_footer_branch
      %21 = sbr.rel target = $region3
    $region8: #{graph_module_forward.1} parent=1 // loop_exit
      _
    %4535 = vsyncpa [#allocation3], 1
    %s4536 = scalar_lea.sflag [#allocation3], 1
    %4537 = vsyncpa %s4536, 1

</llo_original>
